<compile_context>
chip_gen: v6e
topology: v6e:2x2x1
jax: 0.10.0
libtpu: 0.0.40
codegen_flags: <defaults>
</compile_context>

<pallas_src>
import functools

import jax
import jax.numpy as jnp
from jax.experimental import pallas as pl
from jax.experimental.pallas import tpu as pltpu

BN_EPS = 1e-5
BN_SCALE = 1.0 / (1.0 + BN_EPS) ** 0.5     # eval BatchNorm1d with fresh running stats
NEG_SLOPE = 0.01                           # nn.LeakyReLU default
LANE = 128
NODE_ALIGN = 256                           # full-width MXU contraction on v6e/v7x


def _rup(v, m):
    return max(m, ((v + m - 1) // m) * m)


def _pad2(a, rows, cols):
    return jnp.pad(a, ((0, rows - a.shape[0]), (0, cols - a.shape[1])))


def _vmem_limit_bytes():
    """Per-generation VMEM request: ~48 MiB on v7x (64 MiB physical), up to ~96 MiB
    on v5e/v6e (128 MiB physical).  Returns None (use compiler default) off-TPU."""
    try:
        cap = int(pltpu.get_tpu_info().vmem_capacity_bytes)
        return min(cap * 3 // 4, 100 * 1024 * 1024)
    except Exception:
        return None


def _pick_tile(n_pad, options, cap=None):
    for t in options:
        if n_pad % t == 0 and (cap is None or t <= cap):
            return t
    return 128


def _plan_tiles(n_pad, f_pad, h_pad, o_pad, emit_act, budget):
    """Pick (tm, tk, n_buffers) so nbuf*(A tile + xs tile) + W1/W2 + acc scratch +
    output tiles fits the per-generation VMEM budget."""
    def fp(tm, tk, nbuf):
        return (nbuf * tm * tk * 2                            # bf16 A' tiles
                + nbuf * tk * f_pad * 2                       # bf16 xs tiles
                + 2 * (f_pad * h_pad + h_pad * o_pad) * 2     # bf16 W1/W2 (buffered)
                + 2 * (h_pad + o_pad) * 4                     # f32 biases
                + tm * f_pad * 4                              # f32 accumulator scratch
                + (2 * tm * o_pad * 2 if emit_act else 0)     # bf16 act out tiles
                + 2 * 8 * o_pad * 4)                          # f32 pool out tiles

    # cap tm at n_pad // 2 so the "parallel" row axis always has >= 2 blocks
    # (keeps both v7x TensorCores busy); tiles up to 512 for HBM-roofline efficiency.
    tm = _pick_tile(n_pad, (512, 256, 128), cap=max(128, n_pad // 2))
    tk = _pick_tile(n_pad, (512, 256, 128))
    while fp(tm, tk, 2) > budget and tk > 128:
        tk //= 2
    while fp(tm, tk, 2) > budget and tm > 128:
        tm //= 2
    nbuf = 3 if (n_pad // tk) >= 4 and fp(tm, tk, 3) <= budget else 2
    return tm, tk, nbuf


# --------------------- tiled GIN layer (embedding path) --------------------- #

def _gin_embed_kernel(a_ref, xs_ref, mask_ref, w1_ref, b1_ref, w2_ref, b2_ref,
                      *outs, nk, emit_act):
    if emit_act:
        act_ref, pool_ref, acc_ref = outs
    else:
        pool_ref, acc_ref = outs
        act_ref = None

    # grid position read once at the kernel top level (never inside pl.when bodies)
    k = pl.program_id(1)

    @pl.when(k == 0)
    def _():
        acc_ref[...] = jnp.zeros_like(acc_ref)
        pool_ref[...] = jnp.zeros_like(pool_ref)

    # message + self aggregation: A'[row, col] @ X[col]  (A' = A + I, bf16 on the MXU)
    acc_ref[...] += jnp.dot(a_ref[...], xs_ref[...],
                            preferred_element_type=jnp.float32)

    @pl.when(k == nk - 1)
    def _():
        z = acc_ref[...]
        # MLP: Linear -> LeakyReLU -> [BatchNorm folded into W2] -> Linear, bf16 MXU
        h1 = jnp.dot(z.astype(jnp.bfloat16), w1_ref[...],
                     preferred_element_type=jnp.float32) + b1_ref[...]
        h1 = jnp.where(h1 >= 0, h1, NEG_SLOPE * h1)
        raw = jnp.dot(h1.astype(jnp.bfloat16), w2_ref[...],
                      preferred_element_type=jnp.float32) + b2_ref[...]
        # zero padded node rows so they never pollute the pool or the next layer
        raw = raw * mask_ref[...]

        # partial global_add_pool of this row block -> row 0 of the (8, O) tile
        # (rows 1..7 were zeroed at k == 0)
        pool_ref[0:1, :] = jnp.sum(raw, axis=0, keepdims=True)

        if emit_act:
            # outer LeakyReLU; the outer eval-BatchNorm scale is folded into the next
            # layer's W1; activations stream to HBM in bf16
            act_ref[...] = jnp.where(raw >= 0, raw, NEG_SLOPE * raw
                                     ).astype(act_ref.dtype)


def gin_embed_layer(a, x, row_mask, w1, b1, w2, b2, *, emit_act, vmem_limit):
    """One weighted-GIN layer over a zero-padded dense graph.

    a: [N_pad, N_pad] bf16 adjacency (+I), x: [N_pad, F_pad] bf16 features.
    Returns (act [N_pad, O_pad] bf16 or None, pooled partials [row_blocks*8, O_pad])."""
    n_pad = a.shape[0]
    f_pad = x.shape[1]
    h_pad = w1.shape[1]
    o_pad = w2.shape[1]
    budget = int(0.8 * (vmem_limit if vmem_limit else 32 * 1024 * 1024))
    tm, tk, nbuf = _plan_tiles(n_pad, f_pad, h_pad, o_pad, emit_act, budget)
    grid = (n_pad // tm, n_pad // tk)

    buf_kw = {}
    if nbuf > 2:
        # deeper buffering on the streamed operands hides the heavy last-k epilogue
        # (two MLP matmuls + act/pool stores) behind the next row block's DMAs
        buf_kw = dict(pipeline_mode=pl.Buffered(nbuf))

    kernel = functools.partial(_gin_embed_kernel, nk=grid[1], emit_act=emit_act)

    out_shape = [jax.ShapeDtypeStruct((grid[0] * 8, o_pad), jnp.float32)]
    out_specs = [pl.BlockSpec((8, o_pad), lambda i, k: (i, 0))]
    if emit_act:
        out_shape = [jax.ShapeDtypeStruct((n_pad, o_pad), jnp.bfloat16)] + out_shape
        out_specs = [pl.BlockSpec((tm, o_pad), lambda i, k: (i, 0))] + out_specs

    flops = 2 * n_pad * n_pad * f_pad + 2 * n_pad * (f_pad * h_pad + h_pad * o_pad)
    bytes_accessed = (2 * n_pad * n_pad                        # bf16 adjacency
                      + 2 * grid[0] * n_pad * f_pad            # bf16 xs, per row block
                      + 2 * (f_pad * h_pad + h_pad * o_pad)    # bf16 weights
                      + 4 * (h_pad + o_pad) + 4 * n_pad        # biases + row mask
                      + (2 * n_pad * o_pad if emit_act else 0)
                      + 4 * grid[0] * 8 * o_pad)

    cp_kwargs = dict(dimension_semantics=("parallel", "arbitrary"))
    if vmem_limit:
        cp_kwargs["vmem_limit_bytes"] = int(vmem_limit)

    outs = pl.pallas_call(
        kernel,
        out_shape=tuple(out_shape),
        grid_spec=pltpu.PrefetchScalarGridSpec(
            num_scalar_prefetch=0,
            grid=grid,
            in_specs=[
                pl.BlockSpec((tm, tk), lambda i, k: (i, k), **buf_kw),     # A' tile
                pl.BlockSpec((tk, f_pad), lambda i, k: (k, 0), **buf_kw),  # X src rows
                pl.BlockSpec((tm, 1), lambda i, k: (i, 0)),                # valid-row mask
                pl.BlockSpec((f_pad, h_pad), lambda i, k: (0, 0)),         # W1 (resident)
                pl.BlockSpec((1, h_pad), lambda i, k: (0, 0)),             # b1
                pl.BlockSpec((h_pad, o_pad), lambda i, k: (0, 0)),         # W2 (resident)
                pl.BlockSpec((1, o_pad), lambda i, k: (0, 0)),             # b2
            ],
            out_specs=tuple(out_specs),
            scratch_shapes=[pltpu.VMEM((tm, f_pad), jnp.float32)],
        ),
        compiler_params=pltpu.CompilerParams(**cp_kwargs),
        cost_estimate=pl.CostEstimate(flops=flops, transcendentals=0,
                                      bytes_accessed=bytes_accessed),
    )(a, x, row_mask, w1, b1, w2, b2)

    if emit_act:
        return outs[0], outs[1]
    return None, outs[0]


# ------- fused head: embedding Linear + full mu / logvar GIN stacks --------- #

def _head_kernel(a00_ref, pc_ref, we_ref, be_ref, *refs, n_mu, n_lv):
    mu_w = refs[: 4 * n_mu]
    lv_w = refs[4 * n_mu: 4 * (n_mu + n_lv)]
    mu_out, lv_out = refs[4 * (n_mu + n_lv):]

    # embedding head: Linear(global_add_pool(concat(raw hiddens)))
    h = jnp.dot(pc_ref[...], we_ref[...], preferred_element_type=jnp.float32) + be_ref[...]

    # gnn_mu / gnn_logvar see a single-node graph: A @ x == a00 * x,  eps == 0
    scale = 1.0 + a00_ref[0, 0]

    def gin_stack(ws, x):
        for j in range(len(ws) // 4):
            w1, b1, w2, b2 = ws[4 * j: 4 * j + 4]
            z = scale * x
            h1 = jnp.dot(z, w1[...], preferred_element_type=jnp.float32) + b1[...]
            h1 = jnp.where(h1 >= 0, h1, NEG_SLOPE * h1)
            x = jnp.dot(h1, w2[...], preferred_element_type=jnp.float32) + b2[...]
        return x   # last raw GIN output; add-pool over 1 node is identity

    mu_out[...] = gin_stack(mu_w, h)
    lv_out[...] = gin_stack(lv_w, h)


def head_call(a00, pooled_concat, w_emb, b_emb, mu_params, lv_params, z_pad):
    vmem = pl.BlockSpec(memory_space=pltpu.MemorySpace.VMEM)
    smem = pl.BlockSpec(memory_space=pltpu.MemorySpace.SMEM)
    flat = []
    for (w1, b1, w2, b2) in list(mu_params) + list(lv_params):
        flat += [w1, b1, w2, b2]
    kernel = functools.partial(_head_kernel, n_mu=len(mu_params), n_lv=len(lv_params))
    return pl.pallas_call(
        kernel,
        out_shape=(jax.ShapeDtypeStruct((8, z_pad), jnp.float32),
                   jax.ShapeDtypeStruct((8, z_pad), jnp.float32)),
        in_specs=[smem] + [vmem] * (3 + len(flat)),
        out_specs=(vmem, vmem),
    )(a00, pooled_concat, w_emb, b_emb, *flat)


# ------------------------- parameter construction -------------------------- #

def init_linear(key, fan_in, fan_out):
    kw, kb = jax.random.split(key)
    bound = 1.0 / float(fan_in) ** 0.5
    w = jax.random.uniform(kw, (fan_in, fan_out), jnp.float32, -bound, bound)
    b = jax.random.uniform(kb, (1, fan_out), jnp.float32, -bound, bound)
    return w, b


def build_gnn_params(key, input_dim, hidden_dims, output_dim, hidden_concat):
    input_dims = [input_dim] + list(hidden_dims)
    output_dims = list(hidden_dims) + [output_dim]
    n_layers = len(hidden_dims) + (0 if hidden_concat else 1)
    gin = []
    for i in range(n_layers):
        fin, fout = input_dims[i], output_dims[i]
        hid = min(fin, fout)
        key, k1, k2 = jax.random.split(key, 3)
        w1, b1 = init_linear(k1, fin, hid)
        w2, b2 = init_linear(k2, hid, fout)
        gin.append((w1, b1, w2, b2))
    params = {"gin": gin}
    if hidden_concat:
        key, kl = jax.random.split(key)
        params["linear"] = init_linear(kl, sum(hidden_dims), output_dim)
    return params


def prepare_params(params, hidden_dims, z_dim):
    """Fold eval-mode BatchNorm scales into the Linear weights, cast the streamed GIN
    MLP weights to bf16 and zero-pad everything to lane-dense (x128) shapes."""
    prep = {}

    emb = []
    for i, (w1, b1, w2, b2) in enumerate(params["embedding"]["gin"]):
        fin, hid = w1.shape
        fout = w2.shape[1]
        w1f = w1 * (BN_SCALE if i > 0 else 1.0)   # outer BN of previous layer
        w2f = w2 * BN_SCALE                        # inner BN of this layer's MLP
        emb.append(dict(
            w1=_pad2(w1f, _rup(fin, LANE), _rup(hid, LANE)).astype(jnp.bfloat16),
            b1=_pad2(b1, 1, _rup(hid, LANE)),
            w2=_pad2(w2f, _rup(hid, LANE), _rup(fout, LANE)).astype(jnp.bfloat16),
            b2=_pad2(b2, 1, _rup(fout, LANE)),
            fout=fout,
        ))
    prep["embedding"] = emb

    wl, bl = params["embedding"]["linear"]
    prep["emb_linear"] = (_pad2(wl, _rup(sum(hidden_dims), LANE), _rup(z_dim, LANE)),
                          _pad2(bl, 1, _rup(z_dim, LANE)))

    def prep_stack(p):
        out = []
        for (w1, b1, w2, b2) in p["gin"]:
            fin, hid = w1.shape
            fout = w2.shape[1]
            out.append((_pad2(w1, _rup(fin, LANE), _rup(hid, LANE)),
                        _pad2(b1, 1, _rup(hid, LANE)),
                        _pad2(w2, _rup(hid, LANE), _rup(fout, LANE)),
                        _pad2(b2, 1, _rup(fout, LANE))))
        return out

    prep["mu"] = prep_stack(params["mu"])
    prep["logvar"] = prep_stack(params["logvar"])
    return prep


# ------------------------------ forward pass ------------------------------- #

def dense_adj_with_self_loops(edge_index, edge_weight, n, n_pad, self_weight=1.0):
    """A'[dst, src] = w (PyG flow src->dst) with the GIN (1+eps)*I self term folded
    onto the diagonal; built directly in bf16 (no f32 N^2 pass + cast)."""
    src, dst = edge_index[0], edge_index[1]
    valid = (src < n) & (dst < n)
    w = jnp.where(valid, edge_weight, 0.0).astype(jnp.bfloat16)
    src_c = jnp.where(valid, src, 0)
    dst_c = jnp.where(valid, dst, 0)
    a = jnp.zeros((n_pad, n_pad), jnp.bfloat16)
    a = a.at[dst_c, src_c].add(w)
    diag = jnp.arange(n)
    a = a.at[diag, diag].add(jnp.full((n,), self_weight, jnp.bfloat16))
    return a


def make_forward(prep, *, z_dim):
    emb_layers = prep["embedding"]
    w_emb, b_emb = prep["emb_linear"]
    mu_stack, lv_stack = prep["mu"], prep["logvar"]
    z_pad = _rup(z_dim, LANE)
    vmem_limit = _vmem_limit_bytes()

    def forward(x, edge_index, edge_weight):
        n = x.shape[0]
        n_pad = _rup(n, NODE_ALIGN)
        # dense weighted adjacency with folded self-loops, bf16 on HBM
        # TODO(synk): on v7x the adjacency could be quantized to fp8(e4m3) for the
        # A@X aggregation when edge-weight dynamic range permits.
        a = dense_adj_with_self_loops(edge_index, edge_weight, n, n_pad)
        xp = _pad2(x, n_pad, emb_layers[0]["w1"].shape[0]).astype(jnp.bfloat16)
        row_mask = (jnp.arange(n_pad, dtype=jnp.int32) < n
                    ).astype(jnp.float32).reshape(n_pad, 1)

        # gnn_embedding: stacked GIN layers; raw hiddens are add-pooled in-kernel
        # TODO(synk): for graphs whose [N_pad, O_pad] activation fits VMEM, consecutive
        # GIN layers could be fused into one pallas_call keeping the inter-layer
        # activation in VMEM scratch instead of round-tripping bf16 through HBM.
        pooled = []
        inp = xp
        for li, layer in enumerate(emb_layers):
            last = li == len(emb_layers) - 1
            act, pool_part = gin_embed_layer(
                a, inp, row_mask, layer["w1"], layer["b1"], layer["w2"], layer["b2"],
                emit_act=not last, vmem_limit=vmem_limit)
            pooled.append(jnp.sum(pool_part, axis=0, keepdims=True)[:, :layer["fout"]])
            if not last:
                inp = act
        pooled_concat = jnp.concatenate(pooled, axis=-1)   # [1, sum(hidden_dims)]
        pc_pad = _pad2(pooled_concat, 8, w_emb.shape[0])   # 8 rows for clean MXU tiling

        # TODO(synk): the reference feeds the pooled [1, z_dim] embedding back through
        # gnn_mu / gnn_logvar with the original edge_index (node ids >= 1 are out of
        # range for a 1-row feature matrix); we keep only node-0 self-loop weight.
        a00 = jnp.sum(jnp.where((edge_index[0] == 0) & (edge_index[1] == 0),
                                edge_weight, 0.0)).reshape(1, 1)
        # TODO(synk): reference GNN.forward calls self.linear even when
        # hidden_concat=False, but no such layer exists (AttributeError in PyTorch);
        # we return the pooled output of the last GIN layer directly.
        mu_p, lv_p = head_call(a00, pc_pad, w_emb, b_emb, mu_stack, lv_stack, z_pad)
        return mu_p[:1, :z_dim], lv_p[:1, :z_dim]

    return jax.jit(forward)


# ---------------------------------- main ----------------------------------- #

if __name__ == "__main__":
    key = jax.random.PRNGKey(0)
    n_nodes = 8
    input_dim = 4
    hidden_dims = [8, 16]
    hidden_mu = [8]
    z_dim = 8

    k_x, k_e, k_p = jax.random.split(key, 3)
    x = jax.random.normal(k_x, (n_nodes, input_dim), jnp.float32)

    # deterministic small directed graph: ring + chords
    src = jnp.array([0, 1, 2, 3, 4, 5, 6, 7, 0, 2, 4, 6], dtype=jnp.int32)
    dst = jnp.array([1, 2, 3, 4, 5, 6, 7, 0, 4, 6, 0, 2], dtype=jnp.int32)
    edge_index = jnp.stack([src, dst])
    edge_weight = jax.random.uniform(k_e, (src.shape[0],), jnp.float32, 0.5, 1.5)

    params = {
        "embedding": build_gnn_params(jax.random.fold_in(k_p, 0),
                                      input_dim, hidden_dims, z_dim, True),
        "mu": build_gnn_params(jax.random.fold_in(k_p, 1),
                               z_dim, hidden_mu, z_dim, False),
        "logvar": build_gnn_params(jax.random.fold_in(k_p, 2),
                                   z_dim, hidden_mu, z_dim, False),
    }

    prep = prepare_params(params, hidden_dims, z_dim)
    fwd = make_forward(prep, z_dim=z_dim)

    mu, logvar = fwd(x, edge_index, edge_weight)
    jax.block_until_ready(mu)
    jax.block_until_ready(logvar)
    assert mu.shape == (1, z_dim) and logvar.shape == (1, z_dim)
    print("KERNEL_OK")
</pallas_src>

<mosaic_0001>
module attributes {stable_mosaic.version = 11 : i64} {
  func.func @_gin_embed_kernel(%arg0: i32, %arg1: i32, %arg2: memref<128x256xbf16, #tpu.memory_space<vmem>>, %arg3: memref<256x128xbf16, #tpu.memory_space<vmem>>, %arg4: memref<128x1xf32, #tpu.memory_space<vmem>>, %arg5: memref<128x128xbf16, #tpu.memory_space<vmem>>, %arg6: memref<1x128xf32, #tpu.memory_space<vmem>>, %arg7: memref<128x128xbf16, #tpu.memory_space<vmem>>, %arg8: memref<1x128xf32, #tpu.memory_space<vmem>>, %arg9: memref<128x128xbf16, #tpu.memory_space<vmem>>, %arg10: memref<8x128xf32, #tpu.memory_space<vmem>>, %arg11: memref<128x128xf32, #tpu.memory_space<vmem>>) attributes {dimension_semantics = [#tpu.dimension_semantics<parallel>, #tpu.dimension_semantics<arbitrary>], iteration_bounds = array<i64: 2, 1>, scalar_prefetch = 0 : i64, scratch_operands = 1 : i64, tpu.core_type = #tpu.core_type<tc>, window_params = [{transform_indices = @transform_0, window_bounds = array<i64: 128, 256>}, {transform_indices = @transform_1, window_bounds = array<i64: 256, 128>}, {transform_indices = @transform_2, window_bounds = array<i64: 128, 1>}, {pipeline_mode = #tpu.pipeline_mode<synchronous>, transform_indices = @transform_3, window_bounds = array<i64: 128, 128>}, {pipeline_mode = #tpu.pipeline_mode<synchronous>, transform_indices = @transform_4, window_bounds = array<i64: 1, 128>}, {pipeline_mode = #tpu.pipeline_mode<synchronous>, transform_indices = @transform_5, window_bounds = array<i64: 128, 128>}, {pipeline_mode = #tpu.pipeline_mode<synchronous>, transform_indices = @transform_6, window_bounds = array<i64: 1, 128>}, {transform_indices = @transform_7, window_bounds = array<i64: 128, 128>}, {transform_indices = @transform_8, window_bounds = array<i64: 8, 128>}]} {
    %c0_i32 = arith.constant 0 : i32
    %0 = arith.cmpi eq, %arg1, %c0_i32 : i32
    %1 = arith.extui %0 : i1 to i32
    %c0_i32_0 = arith.constant 0 : i32
    %2 = arith.cmpi ne, %1, %c0_i32_0 : i32
    scf.if %2 {
      %cst_10 = arith.constant 0.000000e+00 : f32
      %12 = vector.broadcast %cst_10 : f32 to vector<128x128xf32>
      %c0_11 = arith.constant 0 : index
      %c0_12 = arith.constant 0 : index
      %13 = vector.load %arg11[%c0_11, %c0_12] : memref<128x128xf32, #tpu.memory_space<vmem>>, vector<128x128xf32>
      tpu.vector_store %arg11[%c0_11, %c0_12], %12 {strides = array<i32>} : memref<128x128xf32, #tpu.memory_space<vmem>>, vector<128x128xf32>,
      %cst_13 = arith.constant 0.000000e+00 : f32
      %14 = vector.broadcast %cst_13 : f32 to vector<8x128xf32>
      %c0_14 = arith.constant 0 : index
      %c0_15 = arith.constant 0 : index
      %15 = vector.load %arg10[%c0_14, %c0_15] : memref<8x128xf32, #tpu.memory_space<vmem>>, vector<8x128xf32>
      tpu.vector_store %arg10[%c0_14, %c0_15], %14 {strides = array<i32>} : memref<8x128xf32, #tpu.memory_space<vmem>>, vector<8x128xf32>,
    } else {
    }
    %c0 = arith.constant 0 : index
    %c0_1 = arith.constant 0 : index
    %3 = vector.load %arg11[%c0, %c0_1] : memref<128x128xf32, #tpu.memory_space<vmem>>, vector<128x128xf32>
    %c0_2 = arith.constant 0 : index
    %c0_3 = arith.constant 0 : index
    %4 = vector.load %arg2[%c0_2, %c0_3] : memref<128x256xbf16, #tpu.memory_space<vmem>>, vector<128x256xbf16>
    %c0_4 = arith.constant 0 : index
    %c0_5 = arith.constant 0 : index
    %5 = vector.load %arg3[%c0_4, %c0_5] : memref<256x128xbf16, #tpu.memory_space<vmem>>, vector<256x128xbf16>
    %cst = arith.constant dense<0.000000e+00> : vector<128x128xf32>
    %6 = tpu.matmul %4, %5, %cst {dimension_numbers = #tpu.dot_dimension_numbers<[1], [0], [0], [1], [0, 0, 1, 1], [], []>} : vector<128x256xbf16>, vector<256x128xbf16>, vector<128x128xf32> -> vector<128x128xf32>
    %7 = arith.addf %3, %6 : vector<128x128xf32>
    %c0_6 = arith.constant 0 : index
    %c0_7 = arith.constant 0 : index
    %8 = vector.load %arg11[%c0_6, %c0_7] : memref<128x128xf32, #tpu.memory_space<vmem>>, vector<128x128xf32>
    tpu.vector_store %arg11[%c0_6, %c0_7], %7 {strides = array<i32>} : memref<128x128xf32, #tpu.memory_space<vmem>>, vector<128x128xf32>,
    %c0_i32_8 = arith.constant 0 : i32
    %9 = arith.cmpi eq, %arg1, %c0_i32_8 : i32
    %10 = arith.extui %9 : i1 to i32
    %c0_i32_9 = arith.constant 0 : i32
    %11 = arith.cmpi ne, %10, %c0_i32_9 : i32
    scf.if %11 {
      %c0_10 = arith.constant 0 : index
      %c0_11 = arith.constant 0 : index
      %12 = vector.load %arg11[%c0_10, %c0_11] : memref<128x128xf32, #tpu.memory_space<vmem>>, vector<128x128xf32>
      %13 = arith.truncf %12 : vector<128x128xf32> to vector<128x128xbf16>
      %c0_12 = arith.constant 0 : index
      %c0_13 = arith.constant 0 : index
      %14 = vector.load %arg5[%c0_12, %c0_13] : memref<128x128xbf16, #tpu.memory_space<vmem>>, vector<128x128xbf16>
      %cst_14 = arith.constant dense<0.000000e+00> : vector<128x128xf32>
      %15 = tpu.matmul %13, %14, %cst_14 {dimension_numbers = #tpu.dot_dimension_numbers<[1], [0], [0], [1], [0, 0, 1, 1], [], []>} : vector<128x128xbf16>, vector<128x128xbf16>, vector<128x128xf32> -> vector<128x128xf32>
      %c0_15 = arith.constant 0 : index
      %c0_16 = arith.constant 0 : index
      %16 = vector.load %arg6[%c0_15, %c0_16] : memref<1x128xf32, #tpu.memory_space<vmem>>, vector<1x128xf32>
      %17 = vector.broadcast %16 : vector<1x128xf32> to vector<128x128xf32>
      %18 = arith.addf %15, %17 : vector<128x128xf32>
      %cst_17 = arith.constant 0.000000e+00 : f32
      %19 = vector.broadcast %cst_17 : f32 to vector<128x128xf32>
      %20 = arith.cmpf oge, %18, %19 : vector<128x128xf32>
      %cst_18 = arith.constant 0.00999999977 : f32
      %21 = vector.broadcast %cst_18 : f32 to vector<128x128xf32>
      %22 = arith.mulf %21, %18 : vector<128x128xf32>
      %23 = arith.select %20, %18, %22 : vector<128x128xi1>, vector<128x128xf32>
      %24 = arith.truncf %23 : vector<128x128xf32> to vector<128x128xbf16>
      %c0_19 = arith.constant 0 : index
      %c0_20 = arith.constant 0 : index
      %25 = vector.load %arg7[%c0_19, %c0_20] : memref<128x128xbf16, #tpu.memory_space<vmem>>, vector<128x128xbf16>
      %cst_21 = arith.constant dense<0.000000e+00> : vector<128x128xf32>
      %26 = tpu.matmul %24, %25, %cst_21 {dimension_numbers = #tpu.dot_dimension_numbers<[1], [0], [0], [1], [0, 0, 1, 1], [], []>} : vector<128x128xbf16>, vector<128x128xbf16>, vector<128x128xf32> -> vector<128x128xf32>
      %c0_22 = arith.constant 0 : index
      %c0_23 = arith.constant 0 : index
      %27 = vector.load %arg8[%c0_22, %c0_23] : memref<1x128xf32, #tpu.memory_space<vmem>>, vector<1x128xf32>
      %28 = vector.broadcast %27 : vector<1x128xf32> to vector<128x128xf32>
      %29 = arith.addf %26, %28 : vector<128x128xf32>
      %c0_24 = arith.constant 0 : index
      %c0_25 = arith.constant 0 : index
      %30 = vector.load %arg4[%c0_24, %c0_25] : memref<128x1xf32, #tpu.memory_space<vmem>>, vector<128x1xf32>
      %31 = vector.broadcast %30 : vector<128x1xf32> to vector<128x128xf32>
      %32 = arith.mulf %29, %31 : vector<128x128xf32>
      %cst_26 = arith.constant dense<0.000000e+00> : vector<128xf32>
      %33 = vector.multi_reduction <add>, %32, %cst_26 [0] : vector<128x128xf32> to vector<128xf32>
      %34 = vector.shape_cast %33 : vector<128xf32> to vector<1x128xf32>
      %c0_27 = arith.constant 0 : index
      %c0_28 = arith.constant 0 : index
      %35 = vector.load %arg10[%c0_27, %c0_28] : memref<8x128xf32, #tpu.memory_space<vmem>>, vector<1x128xf32>
      tpu.vector_store %arg10[%c0_27, %c0_28], %34 {strides = array<i32>} : memref<8x128xf32, #tpu.memory_space<vmem>>, vector<1x128xf32>,
      %cst_29 = arith.constant 0.000000e+00 : f32
      %36 = vector.broadcast %cst_29 : f32 to vector<128x128xf32>
      %37 = arith.cmpf oge, %32, %36 : vector<128x128xf32>
      %cst_30 = arith.constant 0.00999999977 : f32
      %38 = vector.broadcast %cst_30 : f32 to vector<128x128xf32>
      %39 = arith.mulf %38, %32 : vector<128x128xf32>
      %40 = arith.select %37, %32, %39 : vector<128x128xi1>, vector<128x128xf32>
      %41 = arith.truncf %40 : vector<128x128xf32> to vector<128x128xbf16>
      %c0_31 = arith.constant 0 : index
      %c0_32 = arith.constant 0 : index
      %42 = vector.load %arg9[%c0_31, %c0_32] : memref<128x128xbf16, #tpu.memory_space<vmem>>, vector<128x128xbf16>
      tpu.vector_store %arg9[%c0_31, %c0_32], %41 {strides = array<i32>} : memref<128x128xbf16, #tpu.memory_space<vmem>>, vector<128x128xbf16>,
    } else {
    }
    return
  }
  func.func @transform_0(%arg0: i32, %arg1: i32) -> (i32, i32) {
    %c0_i32 = arith.constant 0 : i32
    return %arg0, %arg1 : i32, i32
  }
  func.func @transform_1(%arg0: i32, %arg1: i32) -> (i32, i32) {
    %c0_i32 = arith.constant 0 : i32
    %c0_i32_0 = arith.constant 0 : i32
    return %arg1, %c0_i32 : i32, i32
  }
  func.func @transform_2(%arg0: i32, %arg1: i32) -> (i32, i32) {
    %c0_i32 = arith.constant 0 : i32
    %c0_i32_0 = arith.constant 0 : i32
    return %arg0, %c0_i32 : i32, i32
  }
  func.func @transform_3(%arg0: i32, %arg1: i32) -> (i32, i32) {
    %c0_i32 = arith.constant 0 : i32
    %c0_i32_0 = arith.constant 0 : i32
    %c0_i32_1 = arith.constant 0 : i32
    return %c0_i32, %c0_i32_0 : i32, i32
  }
  func.func @transform_4(%arg0: i32, %arg1: i32) -> (i32, i32) {
    %c0_i32 = arith.constant 0 : i32
    %c0_i32_0 = arith.constant 0 : i32
    %c0_i32_1 = arith.constant 0 : i32
    return %c0_i32, %c0_i32_0 : i32, i32
  }
  func.func @transform_5(%arg0: i32, %arg1: i32) -> (i32, i32) {
    %c0_i32 = arith.constant 0 : i32
    %c0_i32_0 = arith.constant 0 : i32
    %c0_i32_1 = arith.constant 0 : i32
    return %c0_i32, %c0_i32_0 : i32, i32
  }
  func.func @transform_6(%arg0: i32, %arg1: i32) -> (i32, i32) {
    %c0_i32 = arith.constant 0 : i32
    %c0_i32_0 = arith.constant 0 : i32
    %c0_i32_1 = arith.constant 0 : i32
    return %c0_i32, %c0_i32_0 : i32, i32
  }
  func.func @transform_7(%arg0: i32, %arg1: i32) -> (i32, i32) {
    %c0_i32 = arith.constant 0 : i32
    %c0_i32_0 = arith.constant 0 : i32
    return %arg0, %c0_i32 : i32, i32
  }
  func.func @transform_8(%arg0: i32, %arg1: i32) -> (i32, i32) {
    %c0_i32 = arith.constant 0 : i32
    %c0_i32_0 = arith.constant 0 : i32
    return %arg0, %c0_i32 : i32, i32
  }
}

module attributes {stable_mosaic.version = 11 : i64} {
  func.func @_gin_embed_kernel(%arg0: i32, %arg1: i32, %arg2: memref<128x256xbf16, #tpu.memory_space<vmem>>, %arg3: memref<256x128xbf16, #tpu.memory_space<vmem>>, %arg4: memref<128x1xf32, #tpu.memory_space<vmem>>, %arg5: memref<128x128xbf16, #tpu.memory_space<vmem>>, %arg6: memref<1x128xf32, #tpu.memory_space<vmem>>, %arg7: memref<128x128xbf16, #tpu.memory_space<vmem>>, %arg8: memref<1x128xf32, #tpu.memory_space<vmem>>, %arg9: memref<8x128xf32, #tpu.memory_space<vmem>>, %arg10: memref<128x128xf32, #tpu.memory_space<vmem>>) attributes {dimension_semantics = [#tpu.dimension_semantics<parallel>, #tpu.dimension_semantics<arbitrary>], iteration_bounds = array<i64: 2, 1>, scalar_prefetch = 0 : i64, scratch_operands = 1 : i64, tpu.core_type = #tpu.core_type<tc>, window_params = [{transform_indices = @transform_0, window_bounds = array<i64: 128, 256>}, {transform_indices = @transform_1, window_bounds = array<i64: 256, 128>}, {transform_indices = @transform_2, window_bounds = array<i64: 128, 1>}, {pipeline_mode = #tpu.pipeline_mode<synchronous>, transform_indices = @transform_3, window_bounds = array<i64: 128, 128>}, {pipeline_mode = #tpu.pipeline_mode<synchronous>, transform_indices = @transform_4, window_bounds = array<i64: 1, 128>}, {pipeline_mode = #tpu.pipeline_mode<synchronous>, transform_indices = @transform_5, window_bounds = array<i64: 128, 128>}, {pipeline_mode = #tpu.pipeline_mode<synchronous>, transform_indices = @transform_6, window_bounds = array<i64: 1, 128>}, {transform_indices = @transform_7, window_bounds = array<i64: 8, 128>}]} {
    %c0_i32 = arith.constant 0 : i32
    %0 = arith.cmpi eq, %arg1, %c0_i32 : i32
    %1 = arith.extui %0 : i1 to i32
    %c0_i32_0 = arith.constant 0 : i32
    %2 = arith.cmpi ne, %1, %c0_i32_0 : i32
    scf.if %2 {
      %cst_10 = arith.constant 0.000000e+00 : f32
      %12 = vector.broadcast %cst_10 : f32 to vector<128x128xf32>
      %c0_11 = arith.constant 0 : index
      %c0_12 = arith.constant 0 : index
      %13 = vector.load %arg10[%c0_11, %c0_12] : memref<128x128xf32, #tpu.memory_space<vmem>>, vector<128x128xf32>
      tpu.vector_store %arg10[%c0_11, %c0_12], %12 {strides = array<i32>} : memref<128x128xf32, #tpu.memory_space<vmem>>, vector<128x128xf32>,
      %cst_13 = arith.constant 0.000000e+00 : f32
      %14 = vector.broadcast %cst_13 : f32 to vector<8x128xf32>
      %c0_14 = arith.constant 0 : index
      %c0_15 = arith.constant 0 : index
      %15 = vector.load %arg9[%c0_14, %c0_15] : memref<8x128xf32, #tpu.memory_space<vmem>>, vector<8x128xf32>
      tpu.vector_store %arg9[%c0_14, %c0_15], %14 {strides = array<i32>} : memref<8x128xf32, #tpu.memory_space<vmem>>, vector<8x128xf32>,
    } else {
    }
    %c0 = arith.constant 0 : index
    %c0_1 = arith.constant 0 : index
    %3 = vector.load %arg10[%c0, %c0_1] : memref<128x128xf32, #tpu.memory_space<vmem>>, vector<128x128xf32>
    %c0_2 = arith.constant 0 : index
    %c0_3 = arith.constant 0 : index
    %4 = vector.load %arg2[%c0_2, %c0_3] : memref<128x256xbf16, #tpu.memory_space<vmem>>, vector<128x256xbf16>
    %c0_4 = arith.constant 0 : index
    %c0_5 = arith.constant 0 : index
    %5 = vector.load %arg3[%c0_4, %c0_5] : memref<256x128xbf16, #tpu.memory_space<vmem>>, vector<256x128xbf16>
    %cst = arith.constant dense<0.000000e+00> : vector<128x128xf32>
    %6 = tpu.matmul %4, %5, %cst {dimension_numbers = #tpu.dot_dimension_numbers<[1], [0], [0], [1], [0, 0, 1, 1], [], []>} : vector<128x256xbf16>, vector<256x128xbf16>, vector<128x128xf32> -> vector<128x128xf32>
    %7 = arith.addf %3, %6 : vector<128x128xf32>
    %c0_6 = arith.constant 0 : index
    %c0_7 = arith.constant 0 : index
    %8 = vector.load %arg10[%c0_6, %c0_7] : memref<128x128xf32, #tpu.memory_space<vmem>>, vector<128x128xf32>
    tpu.vector_store %arg10[%c0_6, %c0_7], %7 {strides = array<i32>} : memref<128x128xf32, #tpu.memory_space<vmem>>, vector<128x128xf32>,
    %c0_i32_8 = arith.constant 0 : i32
    %9 = arith.cmpi eq, %arg1, %c0_i32_8 : i32
    %10 = arith.extui %9 : i1 to i32
    %c0_i32_9 = arith.constant 0 : i32
    %11 = arith.cmpi ne, %10, %c0_i32_9 : i32
    scf.if %11 {
      %c0_10 = arith.constant 0 : index
      %c0_11 = arith.constant 0 : index
      %12 = vector.load %arg10[%c0_10, %c0_11] : memref<128x128xf32, #tpu.memory_space<vmem>>, vector<128x128xf32>
      %13 = arith.truncf %12 : vector<128x128xf32> to vector<128x128xbf16>
      %c0_12 = arith.constant 0 : index
      %c0_13 = arith.constant 0 : index
      %14 = vector.load %arg5[%c0_12, %c0_13] : memref<128x128xbf16, #tpu.memory_space<vmem>>, vector<128x128xbf16>
      %cst_14 = arith.constant dense<0.000000e+00> : vector<128x128xf32>
      %15 = tpu.matmul %13, %14, %cst_14 {dimension_numbers = #tpu.dot_dimension_numbers<[1], [0], [0], [1], [0, 0, 1, 1], [], []>} : vector<128x128xbf16>, vector<128x128xbf16>, vector<128x128xf32> -> vector<128x128xf32>
      %c0_15 = arith.constant 0 : index
      %c0_16 = arith.constant 0 : index
      %16 = vector.load %arg6[%c0_15, %c0_16] : memref<1x128xf32, #tpu.memory_space<vmem>>, vector<1x128xf32>
      %17 = vector.broadcast %16 : vector<1x128xf32> to vector<128x128xf32>
      %18 = arith.addf %15, %17 : vector<128x128xf32>
      %cst_17 = arith.constant 0.000000e+00 : f32
      %19 = vector.broadcast %cst_17 : f32 to vector<128x128xf32>
      %20 = arith.cmpf oge, %18, %19 : vector<128x128xf32>
      %cst_18 = arith.constant 0.00999999977 : f32
      %21 = vector.broadcast %cst_18 : f32 to vector<128x128xf32>
      %22 = arith.mulf %21, %18 : vector<128x128xf32>
      %23 = arith.select %20, %18, %22 : vector<128x128xi1>, vector<128x128xf32>
      %24 = arith.truncf %23 : vector<128x128xf32> to vector<128x128xbf16>
      %c0_19 = arith.constant 0 : index
      %c0_20 = arith.constant 0 : index
      %25 = vector.load %arg7[%c0_19, %c0_20] : memref<128x128xbf16, #tpu.memory_space<vmem>>, vector<128x128xbf16>
      %cst_21 = arith.constant dense<0.000000e+00> : vector<128x128xf32>
      %26 = tpu.matmul %24, %25, %cst_21 {dimension_numbers = #tpu.dot_dimension_numbers<[1], [0], [0], [1], [0, 0, 1, 1], [], []>} : vector<128x128xbf16>, vector<128x128xbf16>, vector<128x128xf32> -> vector<128x128xf32>
      %c0_22 = arith.constant 0 : index
      %c0_23 = arith.constant 0 : index
      %27 = vector.load %arg8[%c0_22, %c0_23] : memref<1x128xf32, #tpu.memory_space<vmem>>, vector<1x128xf32>
      %28 = vector.broadcast %27 : vector<1x128xf32> to vector<128x128xf32>
      %29 = arith.addf %26, %28 : vector<128x128xf32>
      %c0_24 = arith.constant 0 : index
      %c0_25 = arith.constant 0 : index
      %30 = vector.load %arg4[%c0_24, %c0_25] : memref<128x1xf32, #tpu.memory_space<vmem>>, vector<128x1xf32>
      %31 = vector.broadcast %30 : vector<128x1xf32> to vector<128x128xf32>
      %32 = arith.mulf %29, %31 : vector<128x128xf32>
      %cst_26 = arith.constant dense<0.000000e+00> : vector<128xf32>
      %33 = vector.multi_reduction <add>, %32, %cst_26 [0] : vector<128x128xf32> to vector<128xf32>
      %34 = vector.shape_cast %33 : vector<128xf32> to vector<1x128xf32>
      %c0_27 = arith.constant 0 : index
      %c0_28 = arith.constant 0 : index
      %35 = vector.load %arg9[%c0_27, %c0_28] : memref<8x128xf32, #tpu.memory_space<vmem>>, vector<1x128xf32>
      tpu.vector_store %arg9[%c0_27, %c0_28], %34 {strides = array<i32>} : memref<8x128xf32, #tpu.memory_space<vmem>>, vector<1x128xf32>,
    } else {
    }
    return
  }
  func.func @transform_0(%arg0: i32, %arg1: i32) -> (i32, i32) {
    %c0_i32 = arith.constant 0 : i32
    return %arg0, %arg1 : i32, i32
  }
  func.func @transform_1(%arg0: i32, %arg1: i32) -> (i32, i32) {
    %c0_i32 = arith.constant 0 : i32
    %c0_i32_0 = arith.constant 0 : i32
    return %arg1, %c0_i32 : i32, i32
  }
  func.func @transform_2(%arg0: i32, %arg1: i32) -> (i32, i32) {
    %c0_i32 = arith.constant 0 : i32
    %c0_i32_0 = arith.constant 0 : i32
    return %arg0, %c0_i32 : i32, i32
  }
  func.func @transform_3(%arg0: i32, %arg1: i32) -> (i32, i32) {
    %c0_i32 = arith.constant 0 : i32
    %c0_i32_0 = arith.constant 0 : i32
    %c0_i32_1 = arith.constant 0 : i32
    return %c0_i32, %c0_i32_0 : i32, i32
  }
  func.func @transform_4(%arg0: i32, %arg1: i32) -> (i32, i32) {
    %c0_i32 = arith.constant 0 : i32
    %c0_i32_0 = arith.constant 0 : i32
    %c0_i32_1 = arith.constant 0 : i32
    return %c0_i32, %c0_i32_0 : i32, i32
  }
  func.func @transform_5(%arg0: i32, %arg1: i32) -> (i32, i32) {
    %c0_i32 = arith.constant 0 : i32
    %c0_i32_0 = arith.constant 0 : i32
    %c0_i32_1 = arith.constant 0 : i32
    return %c0_i32, %c0_i32_0 : i32, i32
  }
  func.func @transform_6(%arg0: i32, %arg1: i32) -> (i32, i32) {
    %c0_i32 = arith.constant 0 : i32
    %c0_i32_0 = arith.constant 0 : i32
    %c0_i32_1 = arith.constant 0 : i32
    return %c0_i32, %c0_i32_0 : i32, i32
  }
  func.func @transform_7(%arg0: i32, %arg1: i32) -> (i32, i32) {
    %c0_i32 = arith.constant 0 : i32
    %c0_i32_0 = arith.constant 0 : i32
    return %arg0, %c0_i32 : i32, i32
  }
}

module attributes {stable_mosaic.version = 11 : i64} {
  func.func @_head_kernel(%arg0: memref<1x1xf32, #tpu.memory_space<smem>>, %arg1: memref<8x128xf32, #tpu.memory_space<vmem>>, %arg2: memref<128x128xf32, #tpu.memory_space<vmem>>, %arg3: memref<1x128xf32, #tpu.memory_space<vmem>>, %arg4: memref<128x128xf32, #tpu.memory_space<vmem>>, %arg5: memref<1x128xf32, #tpu.memory_space<vmem>>, %arg6: memref<128x128xf32, #tpu.memory_space<vmem>>, %arg7: memref<1x128xf32, #tpu.memory_space<vmem>>, %arg8: memref<128x128xf32, #tpu.memory_space<vmem>>, %arg9: memref<1x128xf32, #tpu.memory_space<vmem>>, %arg10: memref<128x128xf32, #tpu.memory_space<vmem>>, %arg11: memref<1x128xf32, #tpu.memory_space<vmem>>, %arg12: memref<128x128xf32, #tpu.memory_space<vmem>>, %arg13: memref<1x128xf32, #tpu.memory_space<vmem>>, %arg14: memref<128x128xf32, #tpu.memory_space<vmem>>, %arg15: memref<1x128xf32, #tpu.memory_space<vmem>>, %arg16: memref<128x128xf32, #tpu.memory_space<vmem>>, %arg17: memref<1x128xf32, #tpu.memory_space<vmem>>, %arg18: memref<128x128xf32, #tpu.memory_space<vmem>>, %arg19: memref<1x128xf32, #tpu.memory_space<vmem>>, %arg20: memref<8x128xf32, #tpu.memory_space<vmem>>, %arg21: memref<8x128xf32, #tpu.memory_space<vmem>>) attributes {dimension_semantics = [], scalar_prefetch = 0 : i64, scratch_operands = 0 : i64, tpu.core_type = #tpu.core_type<tc>} {
    %c0 = arith.constant 0 : index
    %c0_0 = arith.constant 0 : index
    %0 = vector.load %arg1[%c0, %c0_0] : memref<8x128xf32, #tpu.memory_space<vmem>>, vector<8x128xf32>
    %c0_1 = arith.constant 0 : index
    %c0_2 = arith.constant 0 : index
    %1 = vector.load %arg2[%c0_1, %c0_2] : memref<128x128xf32, #tpu.memory_space<vmem>>, vector<128x128xf32>
    %cst = arith.constant dense<0.000000e+00> : vector<8x128xf32>
    %2 = tpu.matmul %0, %1, %cst {dimension_numbers = #tpu.dot_dimension_numbers<[1], [0], [0], [1], [0, 0, 1, 1], [], []>} : vector<8x128xf32>, vector<128x128xf32>, vector<8x128xf32> -> vector<8x128xf32>
    %c0_3 = arith.constant 0 : index
    %c0_4 = arith.constant 0 : index
    %3 = vector.load %arg3[%c0_3, %c0_4] : memref<1x128xf32, #tpu.memory_space<vmem>>, vector<1x128xf32>
    %4 = vector.broadcast %3 : vector<1x128xf32> to vector<8x128xf32>
    %5 = arith.addf %2, %4 : vector<8x128xf32>
    %c0_5 = arith.constant 0 : index
    %c0_6 = arith.constant 0 : index
    %6 = memref.load %arg0[%c0_5, %c0_6] : memref<1x1xf32, #tpu.memory_space<smem>>
    %cst_7 = arith.constant 1.000000e+00 : f32
    %7 = arith.addf %cst_7, %6 : f32
    %8 = vector.broadcast %7 : f32 to vector<8x128xf32>
    %9 = arith.mulf %8, %5 : vector<8x128xf32>
    %c0_8 = arith.constant 0 : index
    %c0_9 = arith.constant 0 : index
    %10 = vector.load %arg4[%c0_8, %c0_9] : memref<128x128xf32, #tpu.memory_space<vmem>>, vector<128x128xf32>
    %cst_10 = arith.constant dense<0.000000e+00> : vector<8x128xf32>
    %11 = tpu.matmul %9, %10, %cst_10 {dimension_numbers = #tpu.dot_dimension_numbers<[1], [0], [0], [1], [0, 0, 1, 1], [], []>} : vector<8x128xf32>, vector<128x128xf32>, vector<8x128xf32> -> vector<8x128xf32>
    %c0_11 = arith.constant 0 : index
    %c0_12 = arith.constant 0 : index
    %12 = vector.load %arg5[%c0_11, %c0_12] : memref<1x128xf32, #tpu.memory_space<vmem>>, vector<1x128xf32>
    %13 = vector.broadcast %12 : vector<1x128xf32> to vector<8x128xf32>
    %14 = arith.addf %11, %13 : vector<8x128xf32>
    %cst_13 = arith.constant 0.000000e+00 : f32
    %15 = vector.broadcast %cst_13 : f32 to vector<8x128xf32>
    %16 = arith.cmpf oge, %14, %15 : vector<8x128xf32>
    %cst_14 = arith.constant 0.00999999977 : f32
    %17 = vector.broadcast %cst_14 : f32 to vector<8x128xf32>
    %18 = arith.mulf %17, %14 : vector<8x128xf32>
    %19 = arith.select %16, %14, %18 : vector<8x128xi1>, vector<8x128xf32>
    %c0_15 = arith.constant 0 : index
    %c0_16 = arith.constant 0 : index
    %20 = vector.load %arg6[%c0_15, %c0_16] : memref<128x128xf32, #tpu.memory_space<vmem>>, vector<128x128xf32>
    %cst_17 = arith.constant dense<0.000000e+00> : vector<8x128xf32>
    %21 = tpu.matmul %19, %20, %cst_17 {dimension_numbers = #tpu.dot_dimension_numbers<[1], [0], [0], [1], [0, 0, 1, 1], [], []>} : vector<8x128xf32>, vector<128x128xf32>, vector<8x128xf32> -> vector<8x128xf32>
    %c0_18 = arith.constant 0 : index
    %c0_19 = arith.constant 0 : index
    %22 = vector.load %arg7[%c0_18, %c0_19] : memref<1x128xf32, #tpu.memory_space<vmem>>, vector<1x128xf32>
    %23 = vector.broadcast %22 : vector<1x128xf32> to vector<8x128xf32>
    %24 = arith.addf %21, %23 : vector<8x128xf32>
    %25 = vector.broadcast %7 : f32 to vector<8x128xf32>
    %26 = arith.mulf %25, %24 : vector<8x128xf32>
    %c0_20 = arith.constant 0 : index
    %c0_21 = arith.constant 0 : index
    %27 = vector.load %arg8[%c0_20, %c0_21] : memref<128x128xf32, #tpu.memory_space<vmem>>, vector<128x128xf32>
    %cst_22 = arith.constant dense<0.000000e+00> : vector<8x128xf32>
    %28 = tpu.matmul %26, %27, %cst_22 {dimension_numbers = #tpu.dot_dimension_numbers<[1], [0], [0], [1], [0, 0, 1, 1], [], []>} : vector<8x128xf32>, vector<128x128xf32>, vector<8x128xf32> -> vector<8x128xf32>
    %c0_23 = arith.constant 0 : index
    %c0_24 = arith.constant 0 : index
    %29 = vector.load %arg9[%c0_23, %c0_24] : memref<1x128xf32, #tpu.memory_space<vmem>>, vector<1x128xf32>
    %30 = vector.broadcast %29 : vector<1x128xf32> to vector<8x128xf32>
    %31 = arith.addf %28, %30 : vector<8x128xf32>
    %cst_25 = arith.constant 0.000000e+00 : f32
    %32 = vector.broadcast %cst_25 : f32 to vector<8x128xf32>
    %33 = arith.cmpf oge, %31, %32 : vector<8x128xf32>
    %cst_26 = arith.constant 0.00999999977 : f32
    %34 = vector.broadcast %cst_26 : f32 to vector<8x128xf32>
    %35 = arith.mulf %34, %31 : vector<8x128xf32>
    %36 = arith.select %33, %31, %35 : vector<8x128xi1>, vector<8x128xf32>
    %c0_27 = arith.constant 0 : index
    %c0_28 = arith.constant 0 : index
    %37 = vector.load %arg10[%c0_27, %c0_28] : memref<128x128xf32, #tpu.memory_space<vmem>>, vector<128x128xf32>
    %cst_29 = arith.constant dense<0.000000e+00> : vector<8x128xf32>
    %38 = tpu.matmul %36, %37, %cst_29 {dimension_numbers = #tpu.dot_dimension_numbers<[1], [0], [0], [1], [0, 0, 1, 1], [], []>} : vector<8x128xf32>, vector<128x128xf32>, vector<8x128xf32> -> vector<8x128xf32>
    %c0_30 = arith.constant 0 : index
    %c0_31 = arith.constant 0 : index
    %39 = vector.load %arg11[%c0_30, %c0_31] : memref<1x128xf32, #tpu.memory_space<vmem>>, vector<1x128xf32>
    %40 = vector.broadcast %39 : vector<1x128xf32> to vector<8x128xf32>
    %41 = arith.addf %38, %40 : vector<8x128xf32>
    %c0_32 = arith.constant 0 : index
    %c0_33 = arith.constant 0 : index
    %42 = vector.load %arg20[%c0_32, %c0_33] : memref<8x128xf32, #tpu.memory_space<vmem>>, vector<8x128xf32>
    tpu.vector_store %arg20[%c0_32, %c0_33], %41 {strides = array<i32>} : memref<8x128xf32, #tpu.memory_space<vmem>>, vector<8x128xf32>,
    %43 = vector.broadcast %7 : f32 to vector<8x128xf32>
    %44 = arith.mulf %43, %5 : vector<8x128xf32>
    %c0_34 = arith.constant 0 : index
    %c0_35 = arith.constant 0 : index
    %45 = vector.load %arg12[%c0_34, %c0_35] : memref<128x128xf32, #tpu.memory_space<vmem>>, vector<128x128xf32>
    %cst_36 = arith.constant dense<0.000000e+00> : vector<8x128xf32>
    %46 = tpu.matmul %44, %45, %cst_36 {dimension_numbers = #tpu.dot_dimension_numbers<[1], [0], [0], [1], [0, 0, 1, 1], [], []>} : vector<8x128xf32>, vector<128x128xf32>, vector<8x128xf32> -> vector<8x128xf32>
    %c0_37 = arith.constant 0 : index
    %c0_38 = arith.constant 0 : index
    %47 = vector.load %arg13[%c0_37, %c0_38] : memref<1x128xf32, #tpu.memory_space<vmem>>, vector<1x128xf32>
    %48 = vector.broadcast %47 : vector<1x128xf32> to vector<8x128xf32>
    %49 = arith.addf %46, %48 : vector<8x128xf32>
    %cst_39 = arith.constant 0.000000e+00 : f32
    %50 = vector.broadcast %cst_39 : f32 to vector<8x128xf32>
    %51 = arith.cmpf oge, %49, %50 : vector<8x128xf32>
    %cst_40 = arith.constant 0.00999999977 : f32
    %52 = vector.broadcast %cst_40 : f32 to vector<8x128xf32>
    %53 = arith.mulf %52, %49 : vector<8x128xf32>
    %54 = arith.select %51, %49, %53 : vector<8x128xi1>, vector<8x128xf32>
    %c0_41 = arith.constant 0 : index
    %c0_42 = arith.constant 0 : index
    %55 = vector.load %arg14[%c0_41, %c0_42] : memref<128x128xf32, #tpu.memory_space<vmem>>, vector<128x128xf32>
    %cst_43 = arith.constant dense<0.000000e+00> : vector<8x128xf32>
    %56 = tpu.matmul %54, %55, %cst_43 {dimension_numbers = #tpu.dot_dimension_numbers<[1], [0], [0], [1], [0, 0, 1, 1], [], []>} : vector<8x128xf32>, vector<128x128xf32>, vector<8x128xf32> -> vector<8x128xf32>
    %c0_44 = arith.constant 0 : index
    %c0_45 = arith.constant 0 : index
    %57 = vector.load %arg15[%c0_44, %c0_45] : memref<1x128xf32, #tpu.memory_space<vmem>>, vector<1x128xf32>
    %58 = vector.broadcast %57 : vector<1x128xf32> to vector<8x128xf32>
    %59 = arith.addf %56, %58 : vector<8x128xf32>
    %60 = vector.broadcast %7 : f32 to vector<8x128xf32>
    %61 = arith.mulf %60, %59 : vector<8x128xf32>
    %c0_46 = arith.constant 0 : index
    %c0_47 = arith.constant 0 : index
    %62 = vector.load %arg16[%c0_46, %c0_47] : memref<128x128xf32, #tpu.memory_space<vmem>>, vector<128x128xf32>
    %cst_48 = arith.constant dense<0.000000e+00> : vector<8x128xf32>
    %63 = tpu.matmul %61, %62, %cst_48 {dimension_numbers = #tpu.dot_dimension_numbers<[1], [0], [0], [1], [0, 0, 1, 1], [], []>} : vector<8x128xf32>, vector<128x128xf32>, vector<8x128xf32> -> vector<8x128xf32>
    %c0_49 = arith.constant 0 : index
    %c0_50 = arith.constant 0 : index
    %64 = vector.load %arg17[%c0_49, %c0_50] : memref<1x128xf32, #tpu.memory_space<vmem>>, vector<1x128xf32>
    %65 = vector.broadcast %64 : vector<1x128xf32> to vector<8x128xf32>
    %66 = arith.addf %63, %65 : vector<8x128xf32>
    %cst_51 = arith.constant 0.000000e+00 : f32
    %67 = vector.broadcast %cst_51 : f32 to vector<8x128xf32>
    %68 = arith.cmpf oge, %66, %67 : vector<8x128xf32>
    %cst_52 = arith.constant 0.00999999977 : f32
    %69 = vector.broadcast %cst_52 : f32 to vector<8x128xf32>
    %70 = arith.mulf %69, %66 : vector<8x128xf32>
    %71 = arith.select %68, %66, %70 : vector<8x128xi1>, vector<8x128xf32>
    %c0_53 = arith.constant 0 : index
    %c0_54 = arith.constant 0 : index
    %72 = vector.load %arg18[%c0_53, %c0_54] : memref<128x128xf32, #tpu.memory_space<vmem>>, vector<128x128xf32>
    %cst_55 = arith.constant dense<0.000000e+00> : vector<8x128xf32>
    %73 = tpu.matmul %71, %72, %cst_55 {dimension_numbers = #tpu.dot_dimension_numbers<[1], [0], [0], [1], [0, 0, 1, 1], [], []>} : vector<8x128xf32>, vector<128x128xf32>, vector<8x128xf32> -> vector<8x128xf32>
    %c0_56 = arith.constant 0 : index
    %c0_57 = arith.constant 0 : index
    %74 = vector.load %arg19[%c0_56, %c0_57] : memref<1x128xf32, #tpu.memory_space<vmem>>, vector<1x128xf32>
    %75 = vector.broadcast %74 : vector<1x128xf32> to vector<8x128xf32>
    %76 = arith.addf %73, %75 : vector<8x128xf32>
    %c0_58 = arith.constant 0 : index
    %c0_59 = arith.constant 0 : index
    %77 = vector.load %arg21[%c0_58, %c0_59] : memref<8x128xf32, #tpu.memory_space<vmem>>, vector<8x128xf32>
    tpu.vector_store %arg21[%c0_58, %c0_59], %76 {strides = array<i32>} : memref<8x128xf32, #tpu.memory_space<vmem>>, vector<8x128xf32>,
    return
  }
}

</mosaic_0001>

<llo_original>
// kernel: forward.5
$region0: #{forward.5}
  #allocation0 [shape = 'u32[]', space=smem, size = 0x4, offset = 0x4, fixed_abs, tag = 'smem constant byte address 0x4 - core index']
  #allocation1 [shape = 'u32[144,128]{1,0:T(1,128)}', space=vmem, size = 0x12000, scoped, tag = 'internal scratch']
  #allocation2 [shape = 'f32[1,1]{1,0:T(1,128)S(6)}', space=smem, size = 0x200, scoped, tag = 'scoped memory for forward.5']
  %s0 = inlined_call_operand.<no memory space> [shape: f32[1,1], index: 0, kind: input, shape index: {}]
  %s1 = inlined_call_operand.vmem [shape: f32[8,128], index: 1, kind: input, shape index: {}]
  %s2 = inlined_call_operand.vmem [shape: f32[128,128], index: 2, kind: input, shape index: {}]
  %s3 = inlined_call_operand.vmem [shape: f32[1,128], index: 3, kind: input, shape index: {}]
  %s4 = inlined_call_operand.vmem [shape: f32[128,128], index: 4, kind: input, shape index: {}]
  %s5 = inlined_call_operand.vmem [shape: f32[1,128], index: 5, kind: input, shape index: {}]
  %s6 = inlined_call_operand.vmem [shape: f32[128,128], index: 6, kind: input, shape index: {}]
  %s7 = inlined_call_operand.vmem [shape: f32[1,128], index: 7, kind: input, shape index: {}]
  %s8 = inlined_call_operand.vmem [shape: f32[128,128], index: 8, kind: input, shape index: {}]
  %s9 = inlined_call_operand.vmem [shape: f32[1,128], index: 9, kind: input, shape index: {}]
  %s10 = inlined_call_operand.vmem [shape: f32[128,128], index: 10, kind: input, shape index: {}]
  %s11 = inlined_call_operand.vmem [shape: f32[1,128], index: 11, kind: input, shape index: {}]
  %s12 = inlined_call_operand.vmem [shape: f32[128,128], index: 12, kind: input, shape index: {}]
  %s13 = inlined_call_operand.vmem [shape: f32[1,128], index: 13, kind: input, shape index: {}]
  %s14 = inlined_call_operand.vmem [shape: f32[128,128], index: 14, kind: input, shape index: {}]
  %s15 = inlined_call_operand.vmem [shape: f32[1,128], index: 15, kind: input, shape index: {}]
  %s16 = inlined_call_operand.vmem [shape: f32[128,128], index: 16, kind: input, shape index: {}]
  %s17 = inlined_call_operand.vmem [shape: f32[1,128], index: 17, kind: input, shape index: {}]
  %s18 = inlined_call_operand.vmem [shape: f32[128,128], index: 18, kind: input, shape index: {}]
  %s19 = inlined_call_operand.vmem [shape: f32[1,128], index: 19, kind: input, shape index: {}]
  %s20 = inlined_call_operand.vmem [shape: f32[8,128], index: 20, kind: output, shape index: {0}]
  %s21 = inlined_call_operand.vmem [shape: f32[8,128], index: 21, kind: output, shape index: {1}]
  %22 = xla_tuple %s20, %s21
  %s23 = sld [smem:[#allocation0]]
  $region98: #{forward.5} parent=0
    _
  %s25 = ssub.s32 1, %s23
  %s26 = scalar_select 0, %s25, %s23
  %27 = sst [smem:[#allocation2]] %s0
  // Predicated region
  $region2: #{forward.5} parent=0 // pred_check
    _
  $region3: #{forward.5} parent=0 // pred_check_branch
    %29 = sbr.rel (0) target = $region5
  $region4: #{forward.5} parent=0 // pred_region
    _
  $region5: #{forward.5} parent=0 // pred_fallthru
    _
  // Predicated region
  $region6: #{forward.5} parent=0 // pred_check
    _
  $region7: #{forward.5} parent=0 // pred_check_branch
    %31 = sbr.rel (0) target = $region9
  $region8: #{forward.5} parent=0 // pred_region
    _
  $region9: #{forward.5} parent=0 // pred_fallthru
    _
  // Predicated region
  $region10: #{forward.5} parent=0 // pred_check
    _
  $region11: #{forward.5} parent=0 // pred_check_branch
    %33 = sbr.rel (0) target = $region13
  $region12: #{forward.5} parent=0 // pred_region
    _
  $region13: #{forward.5} parent=0 // pred_fallthru
    _
  // Predicated region
  $region14: #{forward.5} parent=0 // pred_check
    _
  $region15: #{forward.5} parent=0 // pred_check_branch
    %35 = sbr.rel (0) target = $region17
  $region16: #{forward.5} parent=0 // pred_region
    _
  $region17: #{forward.5} parent=0 // pred_fallthru
    _
  // Predicated region
  $region18: #{forward.5} parent=0 // pred_check
    _
  $region19: #{forward.5} parent=0 // pred_check_branch
    %37 = sbr.rel (0) target = $region21
  $region20: #{forward.5} parent=0 // pred_region
    _
  $region21: #{forward.5} parent=0 // pred_fallthru
    _
  // Predicated region
  $region22: #{forward.5} parent=0 // pred_check
    _
  $region23: #{forward.5} parent=0 // pred_check_branch
    %39 = sbr.rel (0) target = $region25
  $region24: #{forward.5} parent=0 // pred_region
    _
  $region25: #{forward.5} parent=0 // pred_fallthru
    _
  // Predicated region
  $region26: #{forward.5} parent=0 // pred_check
    _
  $region27: #{forward.5} parent=0 // pred_check_branch
    %41 = sbr.rel (0) target = $region29
  $region28: #{forward.5} parent=0 // pred_region
    _
  $region29: #{forward.5} parent=0 // pred_fallthru
    _
  // Predicated region
  $region30: #{forward.5} parent=0 // pred_check
    _
  $region31: #{forward.5} parent=0 // pred_check_branch
    %43 = sbr.rel (0) target = $region33
  $region32: #{forward.5} parent=0 // pred_region
    _
  $region33: #{forward.5} parent=0 // pred_fallthru
    _
  // Predicated region
  $region34: #{forward.5} parent=0 // pred_check
    _
  $region35: #{forward.5} parent=0 // pred_check_branch
    %45 = sbr.rel (0) target = $region37
  $region36: #{forward.5} parent=0 // pred_region
    _
  $region37: #{forward.5} parent=0 // pred_fallthru
    _
  // Predicated region
  $region38: #{forward.5} parent=0 // pred_check
    _
  $region39: #{forward.5} parent=0 // pred_check_branch
    %47 = sbr.rel (0) target = $region41
  $region40: #{forward.5} parent=0 // pred_region
    _
  $region41: #{forward.5} parent=0 // pred_fallthru
    _
  // Predicated region
  $region42: #{forward.5} parent=0 // pred_check
    _
  $region43: #{forward.5} parent=0 // pred_check_branch
    %49 = sbr.rel (0) target = $region45
  $region44: #{forward.5} parent=0 // pred_region
    _
  $region45: #{forward.5} parent=0 // pred_fallthru
    _
  // Predicated region
  $region46: #{forward.5} parent=0 // pred_check
    _
  $region47: #{forward.5} parent=0 // pred_check_branch
    %51 = sbr.rel (0) target = $region49
  $region48: #{forward.5} parent=0 // pred_region
    _
  $region49: #{forward.5} parent=0 // pred_fallthru
    _
  // Predicated region
  $region50: #{forward.5} parent=0 // pred_check
    _
  $region51: #{forward.5} parent=0 // pred_check_branch
    %53 = sbr.rel (0) target = $region53
  $region52: #{forward.5} parent=0 // pred_region
    _
  $region53: #{forward.5} parent=0 // pred_fallthru
    _
  // Predicated region
  $region54: #{forward.5} parent=0 // pred_check
    _
  $region55: #{forward.5} parent=0 // pred_check_branch
    %55 = sbr.rel (0) target = $region57
  $region56: #{forward.5} parent=0 // pred_region
    _
  $region57: #{forward.5} parent=0 // pred_fallthru
    _
  // Predicated region
  $region58: #{forward.5} parent=0 // pred_check
    _
  $region59: #{forward.5} parent=0 // pred_check_branch
    %57 = sbr.rel (0) target = $region61
  $region60: #{forward.5} parent=0 // pred_region
    _
  $region61: #{forward.5} parent=0 // pred_fallthru
    _
  // Predicated region
  $region62: #{forward.5} parent=0 // pred_check
    _
  $region63: #{forward.5} parent=0 // pred_check_branch
    %59 = sbr.rel (0) target = $region65
  $region64: #{forward.5} parent=0 // pred_region
    _
  $region65: #{forward.5} parent=0 // pred_fallthru
    _
  // Predicated region
  $region66: #{forward.5} parent=0 // pred_check
    _
  $region67: #{forward.5} parent=0 // pred_check_branch
    %61 = sbr.rel (0) target = $region69
  $region68: #{forward.5} parent=0 // pred_region
    _
  $region69: #{forward.5} parent=0 // pred_fallthru
    _
  // Predicated region
  $region70: #{forward.5} parent=0 // pred_check
    _
  $region71: #{forward.5} parent=0 // pred_check_branch
    %63 = sbr.rel (0) target = $region73
  $region72: #{forward.5} parent=0 // pred_region
    _
  $region73: #{forward.5} parent=0 // pred_fallthru
    _
  // Predicated region
  $region74: #{forward.5} parent=0 // pred_check
    _
  $region75: #{forward.5} parent=0 // pred_check_branch
    %65 = sbr.rel (0) target = $region77
  $region76: #{forward.5} parent=0 // pred_region
    _
  $region77: #{forward.5} parent=0 // pred_fallthru
    _
  // Predicated region
  $region78: #{forward.5} parent=0 // pred_check
    _
  $region79: #{forward.5} parent=0 // pred_check_branch
    %67 = sbr.rel (0) target = $region81
  $region80: #{forward.5} parent=0 // pred_region
    _
  $region81: #{forward.5} parent=0 // pred_fallthru
    _
  %v68 = vld [vmem:[%s1] sm:$0xff]
  %v69 = vld [vmem:[%s2] sm:$0xff]
  %v70 = vld [vmem:[%s2 + $0x8] sm:$0xff]
  %v71 = vld [vmem:[%s2 + $0x10] sm:$0xff]
  %v72 = vld [vmem:[%s2 + $0x18] sm:$0xff]
  %v73 = vld [vmem:[%s2 + $0x20] sm:$0xff]
  %v74 = vld [vmem:[%s2 + $0x28] sm:$0xff]
  %v75 = vld [vmem:[%s2 + $0x30] sm:$0xff]
  %v76 = vld [vmem:[%s2 + $0x38] sm:$0xff]
  %v77 = vld [vmem:[%s2 + $0x40] sm:$0xff]
  %v78 = vld [vmem:[%s2 + $0x48] sm:$0xff]
  %v79 = vld [vmem:[%s2 + $0x50] sm:$0xff]
  %v80 = vld [vmem:[%s2 + $0x58] sm:$0xff]
  %v81 = vld [vmem:[%s2 + $0x60] sm:$0xff]
  %v82 = vld [vmem:[%s2 + $0x68] sm:$0xff]
  %v83 = vld [vmem:[%s2 + $0x70] sm:$0xff]
  %v84 = vld [vmem:[%s2 + $0x78] sm:$0xff]
  %v85 = vld [vmem:[%s3] sm:$0x1]
  %v87 = vlaneseq
  %v88 = vshrl.u32 %v87, 7
  %v89 = vsub.s32 0, %v88
  %v90 = vrot.slane %v85, %v89
  %92 = vmatprep.subr.mxu0 0.0
  %93 = vmatpush1.msra.mxu0 %v84
  %94 = vmatprep.subr.mxu0 0.0
  %95 = vmatpush1.msra.mxu0 %v83
  %96 = vmatprep.subr.mxu0 0.0
  %97 = vmatpush1.msra.mxu0 %v82
  %98 = vmatprep.subr.mxu0 0.0
  %99 = vmatpush1.msra.mxu0 %v81
  %100 = vmatprep.subr.mxu0 0.0
  %101 = vmatpush1.msra.mxu0 %v80
  %102 = vmatprep.subr.mxu0 0.0
  %103 = vmatpush1.msra.mxu0 %v79
  %104 = vmatprep.subr.mxu0 0.0
  %105 = vmatpush1.msra.mxu0 %v78
  %106 = vmatprep.subr.mxu0 0.0
  %107 = vmatpush1.msra.mxu0 %v77
  %108 = vmatprep.subr.mxu0 0.0
  %109 = vmatpush1.msra.mxu0 %v76
  %110 = vmatprep.subr.mxu0 0.0
  %111 = vmatpush1.msra.mxu0 %v75
  %112 = vmatprep.subr.mxu0 0.0
  %113 = vmatpush1.msra.mxu0 %v74
  %114 = vmatprep.subr.mxu0 0.0
  %115 = vmatpush1.msra.mxu0 %v73
  %116 = vmatprep.subr.mxu0 0.0
  %117 = vmatpush1.msra.mxu0 %v72
  %118 = vmatprep.subr.mxu0 0.0
  %119 = vmatpush1.msra.mxu0 %v71
  %120 = vmatprep.subr.mxu0 0.0
  %121 = vmatpush1.msra.mxu0 %v70
  %122 = vmatprep.subr.mxu0 0.0
  %123 = vmatpush1.msra.mxu0 %v69
  %124 = vmatprep.subr.mxu0 0.0
  %125 = vmatpush2.msra.mxu0 0.0
  %126 = vmatprep.subr.mxu0 0.0
  %127 = vmatpush2.msra.mxu0 0.0
  %128 = vmatprep.subr.mxu0 0.0
  %129 = vmatpush2.msra.mxu0 0.0
  %130 = vmatprep.subr.mxu0 0.0
  %131 = vmatpush2.msra.mxu0 0.0
  %132 = vmatprep.subr.mxu0 0.0
  %133 = vmatpush2.msra.mxu0 0.0
  %134 = vmatprep.subr.mxu0 0.0
  %135 = vmatpush2.msra.mxu0 0.0
  %136 = vmatprep.subr.mxu0 0.0
  %137 = vmatpush2.msra.mxu0 0.0
  %138 = vmatprep.subr.mxu0 0.0
  %139 = vmatpush2.msra.mxu0 0.0
  %140 = vmatprep.subr.mxu0 0.0
  %141 = vmatpush2.msra.mxu0 0.0
  %142 = vmatprep.subr.mxu0 0.0
  %143 = vmatpush2.msra.mxu0 0.0
  %144 = vmatprep.subr.mxu0 0.0
  %145 = vmatpush2.msra.mxu0 0.0
  %146 = vmatprep.subr.mxu0 0.0
  %147 = vmatpush2.msra.mxu0 0.0
  %148 = vmatprep.subr.mxu0 0.0
  %149 = vmatpush2.msra.mxu0 0.0
  %150 = vmatprep.subr.mxu0 0.0
  %151 = vmatpush2.msra.mxu0 0.0
  %152 = vmatprep.subr.mxu0 0.0
  %153 = vmatpush2.msra.mxu0 0.0
  %154 = vmatprep.subr.mxu0 0.0
  %155 = vmatpush2.msra.mxu0 0.0
  %156 = vmatprep.mubr.f32.mxu0 0.0
  %157 = vmatmul.mubr.f32.gmra.mxu0 %v68
  %v158 = vpop.f32.mrf.mxu0
  %v159 = vadd.f32 %v90, %v158
  %v160 = vpop.f32.mrf.mxu0
  %161 = vdwg.mxu0
  %s162 = sld [smem:[#allocation2]]
  %s163 = sadd.f32 %s162, 1.0
  %v164 = vstv %s163
  %v165 = vmul.f32 %v164, %v159
  %v166 = vld [vmem:[%s4] sm:$0xff]
  %v167 = vld [vmem:[%s4 + $0x8] sm:$0xff]
  %v168 = vld [vmem:[%s4 + $0x10] sm:$0xff]
  %v169 = vld [vmem:[%s4 + $0x18] sm:$0xff]
  %v170 = vld [vmem:[%s4 + $0x20] sm:$0xff]
  %v171 = vld [vmem:[%s4 + $0x28] sm:$0xff]
  %v172 = vld [vmem:[%s4 + $0x30] sm:$0xff]
  %v173 = vld [vmem:[%s4 + $0x38] sm:$0xff]
  %v174 = vld [vmem:[%s4 + $0x40] sm:$0xff]
  %v175 = vld [vmem:[%s4 + $0x48] sm:$0xff]
  %v176 = vld [vmem:[%s4 + $0x50] sm:$0xff]
  %v177 = vld [vmem:[%s4 + $0x58] sm:$0xff]
  %v178 = vld [vmem:[%s4 + $0x60] sm:$0xff]
  %v179 = vld [vmem:[%s4 + $0x68] sm:$0xff]
  %v180 = vld [vmem:[%s4 + $0x70] sm:$0xff]
  %v181 = vld [vmem:[%s4 + $0x78] sm:$0xff]
  %v182 = vld [vmem:[%s5] sm:$0x1]
  %v184 = vlaneseq
  %v185 = vshrl.u32 %v184, 7
  %v186 = vsub.s32 0, %v185
  %v187 = vrot.slane %v182, %v186
  %189 = vmatprep.subr.mxu0 0.0
  %190 = vmatpush1.msra.mxu0 %v181
  %191 = vmatprep.subr.mxu0 0.0
  %192 = vmatpush1.msra.mxu0 %v180
  %193 = vmatprep.subr.mxu0 0.0
  %194 = vmatpush1.msra.mxu0 %v179
  %195 = vmatprep.subr.mxu0 0.0
  %196 = vmatpush1.msra.mxu0 %v178
  %197 = vmatprep.subr.mxu0 0.0
  %198 = vmatpush1.msra.mxu0 %v177
  %199 = vmatprep.subr.mxu0 0.0
  %200 = vmatpush1.msra.mxu0 %v176
  %201 = vmatprep.subr.mxu0 0.0
  %202 = vmatpush1.msra.mxu0 %v175
  %203 = vmatprep.subr.mxu0 0.0
  %204 = vmatpush1.msra.mxu0 %v174
  %205 = vmatprep.subr.mxu0 0.0
  %206 = vmatpush1.msra.mxu0 %v173
  %207 = vmatprep.subr.mxu0 0.0
  %208 = vmatpush1.msra.mxu0 %v172
  %209 = vmatprep.subr.mxu0 0.0
  %210 = vmatpush1.msra.mxu0 %v171
  %211 = vmatprep.subr.mxu0 0.0
  %212 = vmatpush1.msra.mxu0 %v170
  %213 = vmatprep.subr.mxu0 0.0
  %214 = vmatpush1.msra.mxu0 %v169
  %215 = vmatprep.subr.mxu0 0.0
  %216 = vmatpush1.msra.mxu0 %v168
  %217 = vmatprep.subr.mxu0 0.0
  %218 = vmatpush1.msra.mxu0 %v167
  %219 = vmatprep.subr.mxu0 0.0
  %220 = vmatpush1.msra.mxu0 %v166
  %221 = vmatprep.subr.mxu0 0.0
  %222 = vmatpush2.msra.mxu0 0.0
  %223 = vmatprep.subr.mxu0 0.0
  %224 = vmatpush2.msra.mxu0 0.0
  %225 = vmatprep.subr.mxu0 0.0
  %226 = vmatpush2.msra.mxu0 0.0
  %227 = vmatprep.subr.mxu0 0.0
  %228 = vmatpush2.msra.mxu0 0.0
  %229 = vmatprep.subr.mxu0 0.0
  %230 = vmatpush2.msra.mxu0 0.0
  %231 = vmatprep.subr.mxu0 0.0
  %232 = vmatpush2.msra.mxu0 0.0
  %233 = vmatprep.subr.mxu0 0.0
  %234 = vmatpush2.msra.mxu0 0.0
  %235 = vmatprep.subr.mxu0 0.0
  %236 = vmatpush2.msra.mxu0 0.0
  %237 = vmatprep.subr.mxu0 0.0
  %238 = vmatpush2.msra.mxu0 0.0
  %239 = vmatprep.subr.mxu0 0.0
  %240 = vmatpush2.msra.mxu0 0.0
  %241 = vmatprep.subr.mxu0 0.0
  %242 = vmatpush2.msra.mxu0 0.0
  %243 = vmatprep.subr.mxu0 0.0
  %244 = vmatpush2.msra.mxu0 0.0
  %245 = vmatprep.subr.mxu0 0.0
  %246 = vmatpush2.msra.mxu0 0.0
  %247 = vmatprep.subr.mxu0 0.0
  %248 = vmatpush2.msra.mxu0 0.0
  %249 = vmatprep.subr.mxu0 0.0
  %250 = vmatpush2.msra.mxu0 0.0
  %251 = vmatprep.subr.mxu0 0.0
  %252 = vmatpush2.msra.mxu0 0.0
  %253 = vmatprep.mubr.f32.mxu0 0.0
  %254 = vmatmul.mubr.f32.gmra.mxu0 %v165
  %v255 = vpop.f32.mrf.mxu0
  %v256 = vadd.f32 %v187, %v255
  %v257 = vpop.f32.mrf.mxu0
  %258 = vdwg.mxu0
  %vm259 = vcmp.ge.f32.partialorder %v256, 0.0
  %v260 = vmul.f32 %v256, 0.01
  %v261 = vsel %vm259, %v256, %v260
  %v262 = vld [vmem:[%s6] sm:$0xff]
  %v263 = vld [vmem:[%s6 + $0x8] sm:$0xff]
  %v264 = vld [vmem:[%s6 + $0x10] sm:$0xff]
  %v265 = vld [vmem:[%s6 + $0x18] sm:$0xff]
  %v266 = vld [vmem:[%s6 + $0x20] sm:$0xff]
  %v267 = vld [vmem:[%s6 + $0x28] sm:$0xff]
  %v268 = vld [vmem:[%s6 + $0x30] sm:$0xff]
  %v269 = vld [vmem:[%s6 + $0x38] sm:$0xff]
  %v270 = vld [vmem:[%s6 + $0x40] sm:$0xff]
  %v271 = vld [vmem:[%s6 + $0x48] sm:$0xff]
  %v272 = vld [vmem:[%s6 + $0x50] sm:$0xff]
  %v273 = vld [vmem:[%s6 + $0x58] sm:$0xff]
  %v274 = vld [vmem:[%s6 + $0x60] sm:$0xff]
  %v275 = vld [vmem:[%s6 + $0x68] sm:$0xff]
  %v276 = vld [vmem:[%s6 + $0x70] sm:$0xff]
  %v277 = vld [vmem:[%s6 + $0x78] sm:$0xff]
  %v278 = vld [vmem:[%s7] sm:$0x1]
  %v280 = vlaneseq
  %v281 = vshrl.u32 %v280, 7
  %v282 = vsub.s32 0, %v281
  %v283 = vrot.slane %v278, %v282
  %285 = vmatprep.subr.mxu0 0.0
  %286 = vmatpush1.msra.mxu0 %v277
  %287 = vmatprep.subr.mxu0 0.0
  %288 = vmatpush1.msra.mxu0 %v276
  %289 = vmatprep.subr.mxu0 0.0
  %290 = vmatpush1.msra.mxu0 %v275
  %291 = vmatprep.subr.mxu0 0.0
  %292 = vmatpush1.msra.mxu0 %v274
  %293 = vmatprep.subr.mxu0 0.0
  %294 = vmatpush1.msra.mxu0 %v273
  %295 = vmatprep.subr.mxu0 0.0
  %296 = vmatpush1.msra.mxu0 %v272
  %297 = vmatprep.subr.mxu0 0.0
  %298 = vmatpush1.msra.mxu0 %v271
  %299 = vmatprep.subr.mxu0 0.0
  %300 = vmatpush1.msra.mxu0 %v270
  %301 = vmatprep.subr.mxu0 0.0
  %302 = vmatpush1.msra.mxu0 %v269
  %303 = vmatprep.subr.mxu0 0.0
  %304 = vmatpush1.msra.mxu0 %v268
  %305 = vmatprep.subr.mxu0 0.0
  %306 = vmatpush1.msra.mxu0 %v267
  %307 = vmatprep.subr.mxu0 0.0
  %308 = vmatpush1.msra.mxu0 %v266
  %309 = vmatprep.subr.mxu0 0.0
  %310 = vmatpush1.msra.mxu0 %v265
  %311 = vmatprep.subr.mxu0 0.0
  %312 = vmatpush1.msra.mxu0 %v264
  %313 = vmatprep.subr.mxu0 0.0
  %314 = vmatpush1.msra.mxu0 %v263
  %315 = vmatprep.subr.mxu0 0.0
  %316 = vmatpush1.msra.mxu0 %v262
  %317 = vmatprep.subr.mxu0 0.0
  %318 = vmatpush2.msra.mxu0 0.0
  %319 = vmatprep.subr.mxu0 0.0
  %320 = vmatpush2.msra.mxu0 0.0
  %321 = vmatprep.subr.mxu0 0.0
  %322 = vmatpush2.msra.mxu0 0.0
  %323 = vmatprep.subr.mxu0 0.0
  %324 = vmatpush2.msra.mxu0 0.0
  %325 = vmatprep.subr.mxu0 0.0
  %326 = vmatpush2.msra.mxu0 0.0
  %327 = vmatprep.subr.mxu0 0.0
  %328 = vmatpush2.msra.mxu0 0.0
  %329 = vmatprep.subr.mxu0 0.0
  %330 = vmatpush2.msra.mxu0 0.0
  %331 = vmatprep.subr.mxu0 0.0
  %332 = vmatpush2.msra.mxu0 0.0
  %333 = vmatprep.subr.mxu0 0.0
  %334 = vmatpush2.msra.mxu0 0.0
  %335 = vmatprep.subr.mxu0 0.0
  %336 = vmatpush2.msra.mxu0 0.0
  %337 = vmatprep.subr.mxu0 0.0
  %338 = vmatpush2.msra.mxu0 0.0
  %339 = vmatprep.subr.mxu0 0.0
  %340 = vmatpush2.msra.mxu0 0.0
  %341 = vmatprep.subr.mxu0 0.0
  %342 = vmatpush2.msra.mxu0 0.0
  %343 = vmatprep.subr.mxu0 0.0
  %344 = vmatpush2.msra.mxu0 0.0
  %345 = vmatprep.subr.mxu0 0.0
  %346 = vmatpush2.msra.mxu0 0.0
  %347 = vmatprep.subr.mxu0 0.0
  %348 = vmatpush2.msra.mxu0 0.0
  %349 = vmatprep.mubr.f32.mxu0 0.0
  %350 = vmatmul.mubr.f32.gmra.mxu0 %v261
  %v351 = vpop.f32.mrf.mxu0
  %v352 = vadd.f32 %v283, %v351
  %v353 = vpop.f32.mrf.mxu0
  %354 = vdwg.mxu0
  %v355 = vmul.f32 %v164, %v352
  %v356 = vld [vmem:[%s8] sm:$0xff]
  %v357 = vld [vmem:[%s8 + $0x8] sm:$0xff]
  %v358 = vld [vmem:[%s8 + $0x10] sm:$0xff]
  %v359 = vld [vmem:[%s8 + $0x18] sm:$0xff]
  %v360 = vld [vmem:[%s8 + $0x20] sm:$0xff]
  %v361 = vld [vmem:[%s8 + $0x28] sm:$0xff]
  %v362 = vld [vmem:[%s8 + $0x30] sm:$0xff]
  %v363 = vld [vmem:[%s8 + $0x38] sm:$0xff]
  %v364 = vld [vmem:[%s8 + $0x40] sm:$0xff]
  %v365 = vld [vmem:[%s8 + $0x48] sm:$0xff]
  %v366 = vld [vmem:[%s8 + $0x50] sm:$0xff]
  %v367 = vld [vmem:[%s8 + $0x58] sm:$0xff]
  %v368 = vld [vmem:[%s8 + $0x60] sm:$0xff]
  %v369 = vld [vmem:[%s8 + $0x68] sm:$0xff]
  %v370 = vld [vmem:[%s8 + $0x70] sm:$0xff]
  %v371 = vld [vmem:[%s8 + $0x78] sm:$0xff]
  %v372 = vld [vmem:[%s9] sm:$0x1]
  %v374 = vlaneseq
  %v375 = vshrl.u32 %v374, 7
  %v376 = vsub.s32 0, %v375
  %v377 = vrot.slane %v372, %v376
  %379 = vmatprep.subr.mxu0 0.0
  %380 = vmatpush1.msra.mxu0 %v371
  %381 = vmatprep.subr.mxu0 0.0
  %382 = vmatpush1.msra.mxu0 %v370
  %383 = vmatprep.subr.mxu0 0.0
  %384 = vmatpush1.msra.mxu0 %v369
  %385 = vmatprep.subr.mxu0 0.0
  %386 = vmatpush1.msra.mxu0 %v368
  %387 = vmatprep.subr.mxu0 0.0
  %388 = vmatpush1.msra.mxu0 %v367
  %389 = vmatprep.subr.mxu0 0.0
  %390 = vmatpush1.msra.mxu0 %v366
  %391 = vmatprep.subr.mxu0 0.0
  %392 = vmatpush1.msra.mxu0 %v365
  %393 = vmatprep.subr.mxu0 0.0
  %394 = vmatpush1.msra.mxu0 %v364
  %395 = vmatprep.subr.mxu0 0.0
  %396 = vmatpush1.msra.mxu0 %v363
  %397 = vmatprep.subr.mxu0 0.0
  %398 = vmatpush1.msra.mxu0 %v362
  %399 = vmatprep.subr.mxu0 0.0
  %400 = vmatpush1.msra.mxu0 %v361
  %401 = vmatprep.subr.mxu0 0.0
  %402 = vmatpush1.msra.mxu0 %v360
  %403 = vmatprep.subr.mxu0 0.0
  %404 = vmatpush1.msra.mxu0 %v359
  %405 = vmatprep.subr.mxu0 0.0
  %406 = vmatpush1.msra.mxu0 %v358
  %407 = vmatprep.subr.mxu0 0.0
  %408 = vmatpush1.msra.mxu0 %v357
  %409 = vmatprep.subr.mxu0 0.0
  %410 = vmatpush1.msra.mxu0 %v356
  %411 = vmatprep.subr.mxu0 0.0
  %412 = vmatpush2.msra.mxu0 0.0
  %413 = vmatprep.subr.mxu0 0.0
  %414 = vmatpush2.msra.mxu0 0.0
  %415 = vmatprep.subr.mxu0 0.0
  %416 = vmatpush2.msra.mxu0 0.0
  %417 = vmatprep.subr.mxu0 0.0
  %418 = vmatpush2.msra.mxu0 0.0
  %419 = vmatprep.subr.mxu0 0.0
  %420 = vmatpush2.msra.mxu0 0.0
  %421 = vmatprep.subr.mxu0 0.0
  %422 = vmatpush2.msra.mxu0 0.0
  %423 = vmatprep.subr.mxu0 0.0
  %424 = vmatpush2.msra.mxu0 0.0
  %425 = vmatprep.subr.mxu0 0.0
  %426 = vmatpush2.msra.mxu0 0.0
  %427 = vmatprep.subr.mxu0 0.0
  %428 = vmatpush2.msra.mxu0 0.0
  %429 = vmatprep.subr.mxu0 0.0
  %430 = vmatpush2.msra.mxu0 0.0
  %431 = vmatprep.subr.mxu0 0.0
  %432 = vmatpush2.msra.mxu0 0.0
  %433 = vmatprep.subr.mxu0 0.0
  %434 = vmatpush2.msra.mxu0 0.0
  %435 = vmatprep.subr.mxu0 0.0
  %436 = vmatpush2.msra.mxu0 0.0
  %437 = vmatprep.subr.mxu0 0.0
  %438 = vmatpush2.msra.mxu0 0.0
  %439 = vmatprep.subr.mxu0 0.0
  %440 = vmatpush2.msra.mxu0 0.0
  %441 = vmatprep.subr.mxu0 0.0
  %442 = vmatpush2.msra.mxu0 0.0
  %443 = vmatprep.mubr.f32.mxu0 0.0
  %444 = vmatmul.mubr.f32.gmra.mxu0 %v355
  %v445 = vpop.f32.mrf.mxu0
  %v446 = vadd.f32 %v377, %v445
  %v447 = vpop.f32.mrf.mxu0
  %448 = vdwg.mxu0
  %vm449 = vcmp.ge.f32.partialorder %v446, 0.0
  %v450 = vmul.f32 %v446, 0.01
  %v451 = vsel %vm449, %v446, %v450
  %v452 = vld [vmem:[%s10] sm:$0xff]
  %v453 = vld [vmem:[%s10 + $0x8] sm:$0xff]
  %v454 = vld [vmem:[%s10 + $0x10] sm:$0xff]
  %v455 = vld [vmem:[%s10 + $0x18] sm:$0xff]
  %v456 = vld [vmem:[%s10 + $0x20] sm:$0xff]
  %v457 = vld [vmem:[%s10 + $0x28] sm:$0xff]
  %v458 = vld [vmem:[%s10 + $0x30] sm:$0xff]
  %v459 = vld [vmem:[%s10 + $0x38] sm:$0xff]
  %v460 = vld [vmem:[%s10 + $0x40] sm:$0xff]
  %v461 = vld [vmem:[%s10 + $0x48] sm:$0xff]
  %v462 = vld [vmem:[%s10 + $0x50] sm:$0xff]
  %v463 = vld [vmem:[%s10 + $0x58] sm:$0xff]
  %v464 = vld [vmem:[%s10 + $0x60] sm:$0xff]
  %v465 = vld [vmem:[%s10 + $0x68] sm:$0xff]
  %v466 = vld [vmem:[%s10 + $0x70] sm:$0xff]
  %v467 = vld [vmem:[%s10 + $0x78] sm:$0xff]
  %v468 = vld [vmem:[%s11] sm:$0x1]
  %v470 = vlaneseq
  %v471 = vshrl.u32 %v470, 7
  %v472 = vsub.s32 0, %v471
  %v473 = vrot.slane %v468, %v472
  %475 = vmatprep.subr.mxu0 0.0
  %476 = vmatpush1.msra.mxu0 %v467
  %477 = vmatprep.subr.mxu0 0.0
  %478 = vmatpush1.msra.mxu0 %v466
  %479 = vmatprep.subr.mxu0 0.0
  %480 = vmatpush1.msra.mxu0 %v465
  %481 = vmatprep.subr.mxu0 0.0
  %482 = vmatpush1.msra.mxu0 %v464
  %483 = vmatprep.subr.mxu0 0.0
  %484 = vmatpush1.msra.mxu0 %v463
  %485 = vmatprep.subr.mxu0 0.0
  %486 = vmatpush1.msra.mxu0 %v462
  %487 = vmatprep.subr.mxu0 0.0
  %488 = vmatpush1.msra.mxu0 %v461
  %489 = vmatprep.subr.mxu0 0.0
  %490 = vmatpush1.msra.mxu0 %v460
  %491 = vmatprep.subr.mxu0 0.0
  %492 = vmatpush1.msra.mxu0 %v459
  %493 = vmatprep.subr.mxu0 0.0
  %494 = vmatpush1.msra.mxu0 %v458
  %495 = vmatprep.subr.mxu0 0.0
  %496 = vmatpush1.msra.mxu0 %v457
  %497 = vmatprep.subr.mxu0 0.0
  %498 = vmatpush1.msra.mxu0 %v456
  %499 = vmatprep.subr.mxu0 0.0
  %500 = vmatpush1.msra.mxu0 %v455
  %501 = vmatprep.subr.mxu0 0.0
  %502 = vmatpush1.msra.mxu0 %v454
  %503 = vmatprep.subr.mxu0 0.0
  %504 = vmatpush1.msra.mxu0 %v453
  %505 = vmatprep.subr.mxu0 0.0
  %506 = vmatpush1.msra.mxu0 %v452
  %507 = vmatprep.subr.mxu0 0.0
  %508 = vmatpush2.msra.mxu0 0.0
  %509 = vmatprep.subr.mxu0 0.0
  %510 = vmatpush2.msra.mxu0 0.0
  %511 = vmatprep.subr.mxu0 0.0
  %512 = vmatpush2.msra.mxu0 0.0
  %513 = vmatprep.subr.mxu0 0.0
  %514 = vmatpush2.msra.mxu0 0.0
  %515 = vmatprep.subr.mxu0 0.0
  %516 = vmatpush2.msra.mxu0 0.0
  %517 = vmatprep.subr.mxu0 0.0
  %518 = vmatpush2.msra.mxu0 0.0
  %519 = vmatprep.subr.mxu0 0.0
  %520 = vmatpush2.msra.mxu0 0.0
  %521 = vmatprep.subr.mxu0 0.0
  %522 = vmatpush2.msra.mxu0 0.0
  %523 = vmatprep.subr.mxu0 0.0
  %524 = vmatpush2.msra.mxu0 0.0
  %525 = vmatprep.subr.mxu0 0.0
  %526 = vmatpush2.msra.mxu0 0.0
  %527 = vmatprep.subr.mxu0 0.0
  %528 = vmatpush2.msra.mxu0 0.0
  %529 = vmatprep.subr.mxu0 0.0
  %530 = vmatpush2.msra.mxu0 0.0
  %531 = vmatprep.subr.mxu0 0.0
  %532 = vmatpush2.msra.mxu0 0.0
  %533 = vmatprep.subr.mxu0 0.0
  %534 = vmatpush2.msra.mxu0 0.0
  %535 = vmatprep.subr.mxu0 0.0
  %536 = vmatpush2.msra.mxu0 0.0
  %537 = vmatprep.subr.mxu0 0.0
  %538 = vmatpush2.msra.mxu0 0.0
  %539 = vmatprep.mubr.f32.mxu0 0.0
  %540 = vmatmul.mubr.f32.gmra.mxu0 %v451
  %v541 = vpop.f32.mrf.mxu0
  %v542 = vadd.f32 %v473, %v541
  %v543 = vpop.f32.mrf.mxu0
  %544 = vdwg.mxu0
  %545 = vst [vmem:[%s20] sm:$0xff] %v542
  %v546 = vld [vmem:[%s12] sm:$0xff]
  %v547 = vld [vmem:[%s12 + $0x8] sm:$0xff]
  %v548 = vld [vmem:[%s12 + $0x10] sm:$0xff]
  %v549 = vld [vmem:[%s12 + $0x18] sm:$0xff]
  %v550 = vld [vmem:[%s12 + $0x20] sm:$0xff]
  %v551 = vld [vmem:[%s12 + $0x28] sm:$0xff]
  %v552 = vld [vmem:[%s12 + $0x30] sm:$0xff]
  %v553 = vld [vmem:[%s12 + $0x38] sm:$0xff]
  %v554 = vld [vmem:[%s12 + $0x40] sm:$0xff]
  %v555 = vld [vmem:[%s12 + $0x48] sm:$0xff]
  %v556 = vld [vmem:[%s12 + $0x50] sm:$0xff]
  %v557 = vld [vmem:[%s12 + $0x58] sm:$0xff]
  %v558 = vld [vmem:[%s12 + $0x60] sm:$0xff]
  %v559 = vld [vmem:[%s12 + $0x68] sm:$0xff]
  %v560 = vld [vmem:[%s12 + $0x70] sm:$0xff]
  %v561 = vld [vmem:[%s12 + $0x78] sm:$0xff]
  %v562 = vld [vmem:[%s13] sm:$0x1]
  %v564 = vlaneseq
  %v565 = vshrl.u32 %v564, 7
  %v566 = vsub.s32 0, %v565
  %v567 = vrot.slane %v562, %v566
  %569 = vmatprep.subr.mxu0 0.0
  %570 = vmatpush1.msra.mxu0 %v561
  %571 = vmatprep.subr.mxu0 0.0
  %572 = vmatpush1.msra.mxu0 %v560
  %573 = vmatprep.subr.mxu0 0.0
  %574 = vmatpush1.msra.mxu0 %v559
  %575 = vmatprep.subr.mxu0 0.0
  %576 = vmatpush1.msra.mxu0 %v558
  %577 = vmatprep.subr.mxu0 0.0
  %578 = vmatpush1.msra.mxu0 %v557
  %579 = vmatprep.subr.mxu0 0.0
  %580 = vmatpush1.msra.mxu0 %v556
  %581 = vmatprep.subr.mxu0 0.0
  %582 = vmatpush1.msra.mxu0 %v555
  %583 = vmatprep.subr.mxu0 0.0
  %584 = vmatpush1.msra.mxu0 %v554
  %585 = vmatprep.subr.mxu0 0.0
  %586 = vmatpush1.msra.mxu0 %v553
  %587 = vmatprep.subr.mxu0 0.0
  %588 = vmatpush1.msra.mxu0 %v552
  %589 = vmatprep.subr.mxu0 0.0
  %590 = vmatpush1.msra.mxu0 %v551
  %591 = vmatprep.subr.mxu0 0.0
  %592 = vmatpush1.msra.mxu0 %v550
  %593 = vmatprep.subr.mxu0 0.0
  %594 = vmatpush1.msra.mxu0 %v549
  %595 = vmatprep.subr.mxu0 0.0
  %596 = vmatpush1.msra.mxu0 %v548
  %597 = vmatprep.subr.mxu0 0.0
  %598 = vmatpush1.msra.mxu0 %v547
  %599 = vmatprep.subr.mxu0 0.0
  %600 = vmatpush1.msra.mxu0 %v546
  %601 = vmatprep.subr.mxu0 0.0
  %602 = vmatpush2.msra.mxu0 0.0
  %603 = vmatprep.subr.mxu0 0.0
  %604 = vmatpush2.msra.mxu0 0.0
  %605 = vmatprep.subr.mxu0 0.0
  %606 = vmatpush2.msra.mxu0 0.0
  %607 = vmatprep.subr.mxu0 0.0
  %608 = vmatpush2.msra.mxu0 0.0
  %609 = vmatprep.subr.mxu0 0.0
  %610 = vmatpush2.msra.mxu0 0.0
  %611 = vmatprep.subr.mxu0 0.0
  %612 = vmatpush2.msra.mxu0 0.0
  %613 = vmatprep.subr.mxu0 0.0
  %614 = vmatpush2.msra.mxu0 0.0
  %615 = vmatprep.subr.mxu0 0.0
  %616 = vmatpush2.msra.mxu0 0.0
  %617 = vmatprep.subr.mxu0 0.0
  %618 = vmatpush2.msra.mxu0 0.0
  %619 = vmatprep.subr.mxu0 0.0
  %620 = vmatpush2.msra.mxu0 0.0
  %621 = vmatprep.subr.mxu0 0.0
  %622 = vmatpush2.msra.mxu0 0.0
  %623 = vmatprep.subr.mxu0 0.0
  %624 = vmatpush2.msra.mxu0 0.0
  %625 = vmatprep.subr.mxu0 0.0
  %626 = vmatpush2.msra.mxu0 0.0
  %627 = vmatprep.subr.mxu0 0.0
  %628 = vmatpush2.msra.mxu0 0.0
  %629 = vmatprep.subr.mxu0 0.0
  %630 = vmatpush2.msra.mxu0 0.0
  %631 = vmatprep.subr.mxu0 0.0
  %632 = vmatpush2.msra.mxu0 0.0
  %633 = vmatprep.mubr.f32.mxu0 0.0
  %634 = vmatmul.mubr.f32.gmra.mxu0 %v165
  %v635 = vpop.f32.mrf.mxu0
  %v636 = vadd.f32 %v567, %v635
  %v637 = vpop.f32.mrf.mxu0
  %638 = vdwg.mxu0
  %vm639 = vcmp.ge.f32.partialorder %v636, 0.0
  %v640 = vmul.f32 %v636, 0.01
  %v641 = vsel %vm639, %v636, %v640
  %v642 = vld [vmem:[%s14] sm:$0xff]
  %v643 = vld [vmem:[%s14 + $0x8] sm:$0xff]
  %v644 = vld [vmem:[%s14 + $0x10] sm:$0xff]
  %v645 = vld [vmem:[%s14 + $0x18] sm:$0xff]
  %v646 = vld [vmem:[%s14 + $0x20] sm:$0xff]
  %v647 = vld [vmem:[%s14 + $0x28] sm:$0xff]
  %v648 = vld [vmem:[%s14 + $0x30] sm:$0xff]
  %v649 = vld [vmem:[%s14 + $0x38] sm:$0xff]
  %v650 = vld [vmem:[%s14 + $0x40] sm:$0xff]
  %v651 = vld [vmem:[%s14 + $0x48] sm:$0xff]
  %v652 = vld [vmem:[%s14 + $0x50] sm:$0xff]
  %v653 = vld [vmem:[%s14 + $0x58] sm:$0xff]
  %v654 = vld [vmem:[%s14 + $0x60] sm:$0xff]
  %v655 = vld [vmem:[%s14 + $0x68] sm:$0xff]
  %v656 = vld [vmem:[%s14 + $0x70] sm:$0xff]
  %v657 = vld [vmem:[%s14 + $0x78] sm:$0xff]
  %v658 = vld [vmem:[%s15] sm:$0x1]
  %v660 = vlaneseq
  %v661 = vshrl.u32 %v660, 7
  %v662 = vsub.s32 0, %v661
  %v663 = vrot.slane %v658, %v662
  %665 = vmatprep.subr.mxu0 0.0
  %666 = vmatpush1.msra.mxu0 %v657
  %667 = vmatprep.subr.mxu0 0.0
  %668 = vmatpush1.msra.mxu0 %v656
  %669 = vmatprep.subr.mxu0 0.0
  %670 = vmatpush1.msra.mxu0 %v655
  %671 = vmatprep.subr.mxu0 0.0
  %672 = vmatpush1.msra.mxu0 %v654
  %673 = vmatprep.subr.mxu0 0.0
  %674 = vmatpush1.msra.mxu0 %v653
  %675 = vmatprep.subr.mxu0 0.0
  %676 = vmatpush1.msra.mxu0 %v652
  %677 = vmatprep.subr.mxu0 0.0
  %678 = vmatpush1.msra.mxu0 %v651
  %679 = vmatprep.subr.mxu0 0.0
  %680 = vmatpush1.msra.mxu0 %v650
  %681 = vmatprep.subr.mxu0 0.0
  %682 = vmatpush1.msra.mxu0 %v649
  %683 = vmatprep.subr.mxu0 0.0
  %684 = vmatpush1.msra.mxu0 %v648
  %685 = vmatprep.subr.mxu0 0.0
  %686 = vmatpush1.msra.mxu0 %v647
  %687 = vmatprep.subr.mxu0 0.0
  %688 = vmatpush1.msra.mxu0 %v646
  %689 = vmatprep.subr.mxu0 0.0
  %690 = vmatpush1.msra.mxu0 %v645
  %691 = vmatprep.subr.mxu0 0.0
  %692 = vmatpush1.msra.mxu0 %v644
  %693 = vmatprep.subr.mxu0 0.0
  %694 = vmatpush1.msra.mxu0 %v643
  %695 = vmatprep.subr.mxu0 0.0
  %696 = vmatpush1.msra.mxu0 %v642
  %697 = vmatprep.subr.mxu0 0.0
  %698 = vmatpush2.msra.mxu0 0.0
  %699 = vmatprep.subr.mxu0 0.0
  %700 = vmatpush2.msra.mxu0 0.0
  %701 = vmatprep.subr.mxu0 0.0
  %702 = vmatpush2.msra.mxu0 0.0
  %703 = vmatprep.subr.mxu0 0.0
  %704 = vmatpush2.msra.mxu0 0.0
  %705 = vmatprep.subr.mxu0 0.0
  %706 = vmatpush2.msra.mxu0 0.0
  %707 = vmatprep.subr.mxu0 0.0
  %708 = vmatpush2.msra.mxu0 0.0
  %709 = vmatprep.subr.mxu0 0.0
  %710 = vmatpush2.msra.mxu0 0.0
  %711 = vmatprep.subr.mxu0 0.0
  %712 = vmatpush2.msra.mxu0 0.0
  %713 = vmatprep.subr.mxu0 0.0
  %714 = vmatpush2.msra.mxu0 0.0
  %715 = vmatprep.subr.mxu0 0.0
  %716 = vmatpush2.msra.mxu0 0.0
  %717 = vmatprep.subr.mxu0 0.0
  %718 = vmatpush2.msra.mxu0 0.0
  %719 = vmatprep.subr.mxu0 0.0
  %720 = vmatpush2.msra.mxu0 0.0
  %721 = vmatprep.subr.mxu0 0.0
  %722 = vmatpush2.msra.mxu0 0.0
  %723 = vmatprep.subr.mxu0 0.0
  %724 = vmatpush2.msra.mxu0 0.0
  %725 = vmatprep.subr.mxu0 0.0
  %726 = vmatpush2.msra.mxu0 0.0
  %727 = vmatprep.subr.mxu0 0.0
  %728 = vmatpush2.msra.mxu0 0.0
  %729 = vmatprep.mubr.f32.mxu0 0.0
  %730 = vmatmul.mubr.f32.gmra.mxu0 %v641
  %v731 = vpop.f32.mrf.mxu0
  %v732 = vadd.f32 %v663, %v731
  %v733 = vpop.f32.mrf.mxu0
  %734 = vdwg.mxu0
  %v735 = vmul.f32 %v164, %v732
  %v736 = vld [vmem:[%s16] sm:$0xff]
  %v737 = vld [vmem:[%s16 + $0x8] sm:$0xff]
  %v738 = vld [vmem:[%s16 + $0x10] sm:$0xff]
  %v739 = vld [vmem:[%s16 + $0x18] sm:$0xff]
  %v740 = vld [vmem:[%s16 + $0x20] sm:$0xff]
  %v741 = vld [vmem:[%s16 + $0x28] sm:$0xff]
  %v742 = vld [vmem:[%s16 + $0x30] sm:$0xff]
  %v743 = vld [vmem:[%s16 + $0x38] sm:$0xff]
  %v744 = vld [vmem:[%s16 + $0x40] sm:$0xff]
  %v745 = vld [vmem:[%s16 + $0x48] sm:$0xff]
  %v746 = vld [vmem:[%s16 + $0x50] sm:$0xff]
  %v747 = vld [vmem:[%s16 + $0x58] sm:$0xff]
  %v748 = vld [vmem:[%s16 + $0x60] sm:$0xff]
  %v749 = vld [vmem:[%s16 + $0x68] sm:$0xff]
  %v750 = vld [vmem:[%s16 + $0x70] sm:$0xff]
  %v751 = vld [vmem:[%s16 + $0x78] sm:$0xff]
  %v752 = vld [vmem:[%s17] sm:$0x1]
  %v754 = vlaneseq
  %v755 = vshrl.u32 %v754, 7
  %v756 = vsub.s32 0, %v755
  %v757 = vrot.slane %v752, %v756
  %759 = vmatprep.subr.mxu0 0.0
  %760 = vmatpush1.msra.mxu0 %v751
  %761 = vmatprep.subr.mxu0 0.0
  %762 = vmatpush1.msra.mxu0 %v750
  %763 = vmatprep.subr.mxu0 0.0
  %764 = vmatpush1.msra.mxu0 %v749
  %765 = vmatprep.subr.mxu0 0.0
  %766 = vmatpush1.msra.mxu0 %v748
  %767 = vmatprep.subr.mxu0 0.0
  %768 = vmatpush1.msra.mxu0 %v747
  %769 = vmatprep.subr.mxu0 0.0
  %770 = vmatpush1.msra.mxu0 %v746
  %771 = vmatprep.subr.mxu0 0.0
  %772 = vmatpush1.msra.mxu0 %v745
  %773 = vmatprep.subr.mxu0 0.0
  %774 = vmatpush1.msra.mxu0 %v744
  %775 = vmatprep.subr.mxu0 0.0
  %776 = vmatpush1.msra.mxu0 %v743
  %777 = vmatprep.subr.mxu0 0.0
  %778 = vmatpush1.msra.mxu0 %v742
  %779 = vmatprep.subr.mxu0 0.0
  %780 = vmatpush1.msra.mxu0 %v741
  %781 = vmatprep.subr.mxu0 0.0
  %782 = vmatpush1.msra.mxu0 %v740
  %783 = vmatprep.subr.mxu0 0.0
  %784 = vmatpush1.msra.mxu0 %v739
  %785 = vmatprep.subr.mxu0 0.0
  %786 = vmatpush1.msra.mxu0 %v738
  %787 = vmatprep.subr.mxu0 0.0
  %788 = vmatpush1.msra.mxu0 %v737
  %789 = vmatprep.subr.mxu0 0.0
  %790 = vmatpush1.msra.mxu0 %v736
  %791 = vmatprep.subr.mxu0 0.0
  %792 = vmatpush2.msra.mxu0 0.0
  %793 = vmatprep.subr.mxu0 0.0
  %794 = vmatpush2.msra.mxu0 0.0
  %795 = vmatprep.subr.mxu0 0.0
  %796 = vmatpush2.msra.mxu0 0.0
  %797 = vmatprep.subr.mxu0 0.0
  %798 = vmatpush2.msra.mxu0 0.0
  %799 = vmatprep.subr.mxu0 0.0
  %800 = vmatpush2.msra.mxu0 0.0
  %801 = vmatprep.subr.mxu0 0.0
  %802 = vmatpush2.msra.mxu0 0.0
  %803 = vmatprep.subr.mxu0 0.0
  %804 = vmatpush2.msra.mxu0 0.0
  %805 = vmatprep.subr.mxu0 0.0
  %806 = vmatpush2.msra.mxu0 0.0
  %807 = vmatprep.subr.mxu0 0.0
  %808 = vmatpush2.msra.mxu0 0.0
  %809 = vmatprep.subr.mxu0 0.0
  %810 = vmatpush2.msra.mxu0 0.0
  %811 = vmatprep.subr.mxu0 0.0
  %812 = vmatpush2.msra.mxu0 0.0
  %813 = vmatprep.subr.mxu0 0.0
  %814 = vmatpush2.msra.mxu0 0.0
  %815 = vmatprep.subr.mxu0 0.0
  %816 = vmatpush2.msra.mxu0 0.0
  %817 = vmatprep.subr.mxu0 0.0
  %818 = vmatpush2.msra.mxu0 0.0
  %819 = vmatprep.subr.mxu0 0.0
  %820 = vmatpush2.msra.mxu0 0.0
  %821 = vmatprep.subr.mxu0 0.0
  %822 = vmatpush2.msra.mxu0 0.0
  %823 = vmatprep.mubr.f32.mxu0 0.0
  %824 = vmatmul.mubr.f32.gmra.mxu0 %v735
  %v825 = vpop.f32.mrf.mxu0
  %v826 = vadd.f32 %v757, %v825
  %v827 = vpop.f32.mrf.mxu0
  %828 = vdwg.mxu0
  %vm829 = vcmp.ge.f32.partialorder %v826, 0.0
  %v830 = vmul.f32 %v826, 0.01
  %v831 = vsel %vm829, %v826, %v830
  %v832 = vld [vmem:[%s18] sm:$0xff]
  %v833 = vld [vmem:[%s18 + $0x8] sm:$0xff]
  %v834 = vld [vmem:[%s18 + $0x10] sm:$0xff]
  %v835 = vld [vmem:[%s18 + $0x18] sm:$0xff]
  %v836 = vld [vmem:[%s18 + $0x20] sm:$0xff]
  %v837 = vld [vmem:[%s18 + $0x28] sm:$0xff]
  %v838 = vld [vmem:[%s18 + $0x30] sm:$0xff]
  %v839 = vld [vmem:[%s18 + $0x38] sm:$0xff]
  %v840 = vld [vmem:[%s18 + $0x40] sm:$0xff]
  %v841 = vld [vmem:[%s18 + $0x48] sm:$0xff]
  %v842 = vld [vmem:[%s18 + $0x50] sm:$0xff]
  %v843 = vld [vmem:[%s18 + $0x58] sm:$0xff]
  %v844 = vld [vmem:[%s18 + $0x60] sm:$0xff]
  %v845 = vld [vmem:[%s18 + $0x68] sm:$0xff]
  %v846 = vld [vmem:[%s18 + $0x70] sm:$0xff]
  %v847 = vld [vmem:[%s18 + $0x78] sm:$0xff]
  %v848 = vld [vmem:[%s19] sm:$0x1]
  %v850 = vlaneseq
  %v851 = vshrl.u32 %v850, 7
  %v852 = vsub.s32 0, %v851
  %v853 = vrot.slane %v848, %v852
  %855 = vmatprep.subr.mxu0 0.0
  %856 = vmatpush1.msra.mxu0 %v847
  %857 = vmatprep.subr.mxu0 0.0
  %858 = vmatpush1.msra.mxu0 %v846
  %859 = vmatprep.subr.mxu0 0.0
  %860 = vmatpush1.msra.mxu0 %v845
  %861 = vmatprep.subr.mxu0 0.0
  %862 = vmatpush1.msra.mxu0 %v844
  %863 = vmatprep.subr.mxu0 0.0
  %864 = vmatpush1.msra.mxu0 %v843
  %865 = vmatprep.subr.mxu0 0.0
  %866 = vmatpush1.msra.mxu0 %v842
  %867 = vmatprep.subr.mxu0 0.0
  %868 = vmatpush1.msra.mxu0 %v841
  %869 = vmatprep.subr.mxu0 0.0
  %870 = vmatpush1.msra.mxu0 %v840
  %871 = vmatprep.subr.mxu0 0.0
  %872 = vmatpush1.msra.mxu0 %v839
  %873 = vmatprep.subr.mxu0 0.0
  %874 = vmatpush1.msra.mxu0 %v838
  %875 = vmatprep.subr.mxu0 0.0
  %876 = vmatpush1.msra.mxu0 %v837
  %877 = vmatprep.subr.mxu0 0.0
  %878 = vmatpush1.msra.mxu0 %v836
  %879 = vmatprep.subr.mxu0 0.0
  %880 = vmatpush1.msra.mxu0 %v835
  %881 = vmatprep.subr.mxu0 0.0
  %882 = vmatpush1.msra.mxu0 %v834
  %883 = vmatprep.subr.mxu0 0.0
  %884 = vmatpush1.msra.mxu0 %v833
  %885 = vmatprep.subr.mxu0 0.0
  %886 = vmatpush1.msra.mxu0 %v832
  %887 = vmatprep.subr.mxu0 0.0
  %888 = vmatpush2.msra.mxu0 0.0
  %889 = vmatprep.subr.mxu0 0.0
  %890 = vmatpush2.msra.mxu0 0.0
  %891 = vmatprep.subr.mxu0 0.0
  %892 = vmatpush2.msra.mxu0 0.0
  %893 = vmatprep.subr.mxu0 0.0
  %894 = vmatpush2.msra.mxu0 0.0
  %895 = vmatprep.subr.mxu0 0.0
  %896 = vmatpush2.msra.mxu0 0.0
  %897 = vmatprep.subr.mxu0 0.0
  %898 = vmatpush2.msra.mxu0 0.0
  %899 = vmatprep.subr.mxu0 0.0
  %900 = vmatpush2.msra.mxu0 0.0
  %901 = vmatprep.subr.mxu0 0.0
  %902 = vmatpush2.msra.mxu0 0.0
  %903 = vmatprep.subr.mxu0 0.0
  %904 = vmatpush2.msra.mxu0 0.0
  %905 = vmatprep.subr.mxu0 0.0
  %906 = vmatpush2.msra.mxu0 0.0
  %907 = vmatprep.subr.mxu0 0.0
  %908 = vmatpush2.msra.mxu0 0.0
  %909 = vmatprep.subr.mxu0 0.0
  %910 = vmatpush2.msra.mxu0 0.0
  %911 = vmatprep.subr.mxu0 0.0
  %912 = vmatpush2.msra.mxu0 0.0
  %913 = vmatprep.subr.mxu0 0.0
  %914 = vmatpush2.msra.mxu0 0.0
  %915 = vmatprep.subr.mxu0 0.0
  %916 = vmatpush2.msra.mxu0 0.0
  %917 = vmatprep.subr.mxu0 0.0
  %918 = vmatpush2.msra.mxu0 0.0
  %919 = vmatprep.mubr.f32.mxu0 0.0
  %920 = vmatmul.mubr.f32.gmra.mxu0 %v831
  %v921 = vpop.f32.mrf.mxu0
  %v922 = vadd.f32 %v853, %v921
  %v923 = vpop.f32.mrf.mxu0
  %924 = vdwg.mxu0
  %925 = vst [vmem:[%s21] sm:$0xff] %v922
  // Predicated region
  $region82: #{forward.5} parent=0 // pred_check
    _
  $region83: #{forward.5} parent=0 // pred_check_branch
    %927 = sbr.rel (0) target = $region85
  $region84: #{forward.5} parent=0 // pred_region
    _
  $region85: #{forward.5} parent=0 // pred_fallthru
    _
  // Predicated region
  $region86: #{forward.5} parent=0 // pred_check
    _
  $region87: #{forward.5} parent=0 // pred_check_branch
    %929 = sbr.rel (0) target = $region89
  $region88: #{forward.5} parent=0 // pred_region
    _
  $region89: #{forward.5} parent=0 // pred_fallthru
    _
  // Predicated region
  $region90: #{forward.5} parent=0 // pred_check
    _
  $region91: #{forward.5} parent=0 // pred_check_branch
    %931 = sbr.rel (0) target = $region93
  $region92: #{forward.5} parent=0 // pred_region
    _
  $region93: #{forward.5} parent=0 // pred_fallthru
    _
  // Predicated region
  $region94: #{forward.5} parent=0 // pred_check
    _
  $region95: #{forward.5} parent=0 // pred_check_branch
    %933 = sbr.rel (0) target = $region97
  $region96: #{forward.5} parent=0 // pred_region
    _
  $region97: #{forward.5} parent=0 // pred_fallthru
    _

// kernel: forward.3
$region0: #{forward.3}
  #allocation0 [shape = 'u32[]', space=smem, size = 0x4, offset = 0x4, fixed_abs, tag = 'smem constant byte address 0x4 - core index']
  #allocation1 [shape = 'u32[144,128]{1,0:T(1,128)}', space=vmem, size = 0x12000, scoped, tag = 'internal scratch']
  #allocation2 [shape = 'f32[128,128]{1,0:T(8,128)}', space=vmem, size = 0x10000, scoped, tag = 'scratch operand']
  %s0 = inlined_call_operand.vmem [shape: bf16[256,256], index: 0, kind: input, shape index: {}]
  %s1 = inlined_call_operand.vmem [shape: bf16[256,128], index: 1, kind: input, shape index: {}]
  %s2 = inlined_call_operand.vmem [shape: f32[256,1], index: 2, kind: input, shape index: {}]
  %s3 = inlined_call_operand.vmem [shape: bf16[128,128], index: 3, kind: input, shape index: {}]
  %s4 = inlined_call_operand.vmem [shape: f32[1,128], index: 4, kind: input, shape index: {}]
  %s5 = inlined_call_operand.vmem [shape: bf16[128,128], index: 5, kind: input, shape index: {}]
  %s6 = inlined_call_operand.vmem [shape: f32[1,128], index: 6, kind: input, shape index: {}]
  %s7 = inlined_call_operand.vmem [shape: bf16[256,128], index: 7, kind: output, shape index: {0}]
  %s8 = inlined_call_operand.vmem [shape: f32[16,128], index: 8, kind: output, shape index: {1}]
  %9 = xla_tuple %s7, %s8
  %s10 = sld [smem:[#allocation0]]
  $region77: #{forward.3} parent=0
    _
  %s12 = ssub.s32 1, %s10
  %s13 = scalar_select 0, %s12, %s10
  loop: start=0, step=1, limit=4
  $region2: #{forward.3} parent=0 // loop_pre_header
    _
  $region3: #{forward.3} parent=0 // loop_header
    %s15 = sphi 0, %s19
    %p16 = scmp.ge.s32.totalorder %s15, 4
    %s22 = sphi 0, %s34
    %s23 = sphi 0, %s30
    %s24 = sphi 0, %s22
    %s25 = sphi 0, %s23
    %s26 = sphi 0, %s24
    %s27 = sphi 0, %s25
    %s39 = sphi 0, %s41
    %s42 = sphi 0, %s39
    %s43 = sphi 0, %s42
    %s59 = sphi 0, %s43
    %s65 = sphi 0, %s67
    %s68 = sphi 0, %s65
    %s69 = sphi 0, %s68
    %s85 = sphi 0, %s69
    %s91 = sphi 0, %s93
    %s94 = sphi 0, %s91
    %s95 = sphi 0, %s94
    %s111 = sphi 0, %s95
    %s115 = sphi 0, %s115
    %s117 = sphi 0, %s115
    %s118 = sphi 0, %s117
    %s132 = sphi 0, %s118
    %s136 = sphi 0, %s136
    %s138 = sphi 0, %s136
    %s139 = sphi 0, %s138
    %s153 = sphi 0, %s139
    %s157 = sphi 0, %s157
    %s159 = sphi 0, %s157
    %s160 = sphi 0, %s159
    %s174 = sphi 0, %s160
    %s178 = sphi 0, %s178
    %s180 = sphi 0, %s178
    %s181 = sphi 0, %s180
    %s195 = sphi 0, %s181
    %s201 = sphi 0, %s203
    %s204 = sphi 0, %s201
    %s205 = sphi 0, %s204
    %s221 = sphi 0, %s205
    %s227 = sphi 0, %s229
    %s230 = sphi 0, %s227
    %s231 = sphi 0, %s230
    %s247 = sphi 0, %s231
  $region4: #{forward.3} parent=0 // loop_header_branch
    %18 = sbr.rel (%p16) target = $region8
  $region5: #{forward.3} parent=0 // loop_body
    %s20 = ssub.s32 %s15, 1
    %s21 = ssub.s32 %s15, 2
    %s28 = sadd.s32 1, %s23
    %p29 = scmp.ge.s32.totalorder %s28, 1
    %s30 = scalar_select %p29, 0, %s28
    %s31 = sadd.s32 1, %s22
    %s32 = scalar_select %p29, %s31, %s22
    %p33 = scmp.ge.s32.totalorder %s32, 2
    %s34 = scalar_select %p33, 0, %s32
    %s35 = ssub.s32 %s22, %s34
    %s36 = ssub.s32 %s23, %s30
    %s37 = sor.u32 %s35, %s36
    %p38 = scmp.eq.s32.totalorder %s37, 0
    %s40 = sadd.s32 %s39, 1
    %s41 = scalar_select %p38, %s39, %s40
    %p44 = pneg %p38
    %p45 = scmp.eq.s32.totalorder %s15, 1
    %p46 = por %p44, %p45
    %p47 = scmp.ne.s32.totalorder %s39, %s42
    %p48 = scmp.eq.s32.totalorder %s15, 0
    %p49 = por %p47, %p48
    %p50 = scmp.ne.s32.totalorder %s39, %s42
    %p51 = scmp.eq.s32.totalorder %s20, 1
    %p52 = por %p50, %p51
    %p53 = scmp.ne.s32.totalorder %s42, %s43
    %p54 = scmp.eq.s32.totalorder %s20, 0
    %p55 = por %p53, %p54
    %p56 = scmp.ne.s32.totalorder %s42, %s43
    %p57 = scmp.eq.s32.totalorder %s21, 1
    %p58 = por %p56, %p57
    %p60 = scmp.ne.s32.totalorder %s43, %s59
    %p61 = scmp.eq.s32.totalorder %s21, 0
    %p62 = por %p60, %p61
    %s63 = ssub.s32 %s23, %s30
    %p64 = scmp.eq.s32.totalorder %s63, 0
    %s66 = sadd.s32 %s65, 1
    %s67 = scalar_select %p64, %s65, %s66
    %p70 = pneg %p64
    %p71 = scmp.eq.s32.totalorder %s15, 1
    %p72 = por %p70, %p71
    %p73 = scmp.ne.s32.totalorder %s65, %s68
    %p74 = scmp.eq.s32.totalorder %s15, 0
    %p75 = por %p73, %p74
    %p76 = scmp.ne.s32.totalorder %s65, %s68
    %p77 = scmp.eq.s32.totalorder %s20, 1
    %p78 = por %p76, %p77
    %p79 = scmp.ne.s32.totalorder %s68, %s69
    %p80 = scmp.eq.s32.totalorder %s20, 0
    %p81 = por %p79, %p80
    %p82 = scmp.ne.s32.totalorder %s68, %s69
    %p83 = scmp.eq.s32.totalorder %s21, 1
    %p84 = por %p82, %p83
    %p86 = scmp.ne.s32.totalorder %s69, %s85
    %p87 = scmp.eq.s32.totalorder %s21, 0
    %p88 = por %p86, %p87
    %s89 = ssub.s32 %s22, %s34
    %p90 = scmp.eq.s32.totalorder %s89, 0
    %s92 = sadd.s32 %s91, 1
    %s93 = scalar_select %p90, %s91, %s92
    %p96 = pneg %p90
    %p97 = scmp.eq.s32.totalorder %s15, 1
    %p98 = por %p96, %p97
    %p99 = scmp.ne.s32.totalorder %s91, %s94
    %p100 = scmp.eq.s32.totalorder %s15, 0
    %p101 = por %p99, %p100
    %p102 = scmp.ne.s32.totalorder %s91, %s94
    %p103 = scmp.eq.s32.totalorder %s20, 1
    %p104 = por %p102, %p103
    %p105 = scmp.ne.s32.totalorder %s94, %s95
    %p106 = scmp.eq.s32.totalorder %s20, 0
    %p107 = por %p105, %p106
    %p108 = scmp.ne.s32.totalorder %s94, %s95
    %p109 = scmp.eq.s32.totalorder %s21, 1
    %p110 = por %p108, %p109
    %p112 = scmp.ne.s32.totalorder %s95, %s111
    %p113 = scmp.eq.s32.totalorder %s21, 0
    %p114 = por %p112, %p113
    %s116 = sadd.s32 %s115, 1
    %p119 = scmp.eq.s32.totalorder %s15, 1
    %p120 = scmp.ne.s32.totalorder %s115, %s117
    %p121 = scmp.eq.s32.totalorder %s15, 0
    %p122 = por %p120, %p121
    %p123 = scmp.ne.s32.totalorder %s115, %s117
    %p124 = scmp.eq.s32.totalorder %s20, 1
    %p125 = por %p123, %p124
    %p126 = scmp.ne.s32.totalorder %s117, %s118
    %p127 = scmp.eq.s32.totalorder %s20, 0
    %p128 = por %p126, %p127
    %p129 = scmp.ne.s32.totalorder %s117, %s118
    %p130 = scmp.eq.s32.totalorder %s21, 1
    %p131 = por %p129, %p130
    %p133 = scmp.ne.s32.totalorder %s118, %s132
    %p134 = scmp.eq.s32.totalorder %s21, 0
    %p135 = por %p133, %p134
    %s137 = sadd.s32 %s136, 1
    %p140 = scmp.eq.s32.totalorder %s15, 1
    %p141 = scmp.ne.s32.totalorder %s136, %s138
    %p142 = scmp.eq.s32.totalorder %s15, 0
    %p143 = por %p141, %p142
    %p144 = scmp.ne.s32.totalorder %s136, %s138
    %p145 = scmp.eq.s32.totalorder %s20, 1
    %p146 = por %p144, %p145
    %p147 = scmp.ne.s32.totalorder %s138, %s139
    %p148 = scmp.eq.s32.totalorder %s20, 0
    %p149 = por %p147, %p148
    %p150 = scmp.ne.s32.totalorder %s138, %s139
    %p151 = scmp.eq.s32.totalorder %s21, 1
    %p152 = por %p150, %p151
    %p154 = scmp.ne.s32.totalorder %s139, %s153
    %p155 = scmp.eq.s32.totalorder %s21, 0
    %p156 = por %p154, %p155
    %s158 = sadd.s32 %s157, 1
    %p161 = scmp.eq.s32.totalorder %s15, 1
    %p162 = scmp.ne.s32.totalorder %s157, %s159
    %p163 = scmp.eq.s32.totalorder %s15, 0
    %p164 = por %p162, %p163
    %p165 = scmp.ne.s32.totalorder %s157, %s159
    %p166 = scmp.eq.s32.totalorder %s20, 1
    %p167 = por %p165, %p166
    %p168 = scmp.ne.s32.totalorder %s159, %s160
    %p169 = scmp.eq.s32.totalorder %s20, 0
    %p170 = por %p168, %p169
    %p171 = scmp.ne.s32.totalorder %s159, %s160
    %p172 = scmp.eq.s32.totalorder %s21, 1
    %p173 = por %p171, %p172
    %p175 = scmp.ne.s32.totalorder %s160, %s174
    %p176 = scmp.eq.s32.totalorder %s21, 0
    %p177 = por %p175, %p176
    %s179 = sadd.s32 %s178, 1
    %p182 = scmp.eq.s32.totalorder %s15, 1
    %p183 = scmp.ne.s32.totalorder %s178, %s180
    %p184 = scmp.eq.s32.totalorder %s15, 0
    %p185 = por %p183, %p184
    %p186 = scmp.ne.s32.totalorder %s178, %s180
    %p187 = scmp.eq.s32.totalorder %s20, 1
    %p188 = por %p186, %p187
    %p189 = scmp.ne.s32.totalorder %s180, %s181
    %p190 = scmp.eq.s32.totalorder %s20, 0
    %p191 = por %p189, %p190
    %p192 = scmp.ne.s32.totalorder %s180, %s181
    %p193 = scmp.eq.s32.totalorder %s21, 1
    %p194 = por %p192, %p193
    %p196 = scmp.ne.s32.totalorder %s181, %s195
    %p197 = scmp.eq.s32.totalorder %s21, 0
    %p198 = por %p196, %p197
    %s199 = ssub.s32 %s22, %s34
    %p200 = scmp.eq.s32.totalorder %s199, 0
    %s202 = sadd.s32 %s201, 1
    %s203 = scalar_select %p200, %s201, %s202
    %p206 = pneg %p200
    %p207 = scmp.eq.s32.totalorder %s15, 1
    %p208 = por %p206, %p207
    %p209 = scmp.ne.s32.totalorder %s201, %s204
    %p210 = scmp.eq.s32.totalorder %s15, 0
    %p211 = por %p209, %p210
    %p212 = scmp.ne.s32.totalorder %s201, %s204
    %p213 = scmp.eq.s32.totalorder %s20, 1
    %p214 = por %p212, %p213
    %p215 = scmp.ne.s32.totalorder %s204, %s205
    %p216 = scmp.eq.s32.totalorder %s20, 0
    %p217 = por %p215, %p216
    %p218 = scmp.ne.s32.totalorder %s204, %s205
    %p219 = scmp.eq.s32.totalorder %s21, 1
    %p220 = por %p218, %p219
    %p222 = scmp.ne.s32.totalorder %s205, %s221
    %p223 = scmp.eq.s32.totalorder %s21, 0
    %p224 = por %p222, %p223
    %s225 = ssub.s32 %s22, %s34
    %p226 = scmp.eq.s32.totalorder %s225, 0
    %s228 = sadd.s32 %s227, 1
    %s229 = scalar_select %p226, %s227, %s228
    %p232 = pneg %p226
    %p233 = scmp.eq.s32.totalorder %s15, 1
    %p234 = por %p232, %p233
    %p235 = scmp.ne.s32.totalorder %s227, %s230
    %p236 = scmp.eq.s32.totalorder %s15, 0
    %p237 = por %p235, %p236
    %p238 = scmp.ne.s32.totalorder %s227, %s230
    %p239 = scmp.eq.s32.totalorder %s20, 1
    %p240 = por %p238, %p239
    %p241 = scmp.ne.s32.totalorder %s230, %s231
    %p242 = scmp.eq.s32.totalorder %s20, 0
    %p243 = por %p241, %p242
    %p244 = scmp.ne.s32.totalorder %s230, %s231
    %p245 = scmp.eq.s32.totalorder %s21, 1
    %p246 = por %p244, %p245
    %p248 = scmp.ne.s32.totalorder %s231, %s247
    %p249 = scmp.eq.s32.totalorder %s21, 0
    %p250 = por %p248, %p249
    %p251 = scmp.le.s32.totalorder 1, %s15
    %p252 = scmp.lt.s32.totalorder %s15, 3
    %p253 = pnand %p251, %p252
    %p254 = pneg %p253
    // Predicated region
    $region9: #{forward.3} parent=5 // pred_check
      _
    $region10: #{forward.3} parent=5 // pred_check_branch
      %256 = sbr.rel (%p253) target = $region12
    $region11: #{forward.3} parent=5 // pred_region
      %s257 = ssub.s32 %s15, 1
      // Predicated region
      $region13: #{forward.3} parent=11 // pred_check
        %p258 = pneg %p81
      $region14: #{forward.3} parent=11 // pred_check_branch
        %260 = sbr.rel (%p258) target = $region16
      $region15: #{forward.3} parent=11 // pred_region
        %s261 = smul.u32 32, %s25
        %p262 = scmp.lt.s32.totalorder %s261, 31
        %s263 = scalar_select %p262, %s261, 31
        %s264 = smul.addr %s263, 4
        %s265 = scalar_lea.vmem %s1, %s264
        %s266 = smul.u32 32, %s25
      $region16: #{forward.3} parent=11 // pred_fallthru
        _
      // Predicated region
      $region17: #{forward.3} parent=11 // pred_check
        %p267 = pneg %p128
      $region18: #{forward.3} parent=11 // pred_check_branch
        %269 = sbr.rel (%p267) target = $region20
      $region19: #{forward.3} parent=11 // pred_region
        _
      $region20: #{forward.3} parent=11 // pred_fallthru
        _
      // Predicated region
      $region21: #{forward.3} parent=11 // pred_check
        %p270 = pneg %p149
      $region22: #{forward.3} parent=11 // pred_check_branch
        %272 = sbr.rel (%p270) target = $region24
      $region23: #{forward.3} parent=11 // pred_region
        _
      $region24: #{forward.3} parent=11 // pred_fallthru
        _
      // Predicated region
      $region25: #{forward.3} parent=11 // pred_check
        %p273 = pneg %p170
      $region26: #{forward.3} parent=11 // pred_check_branch
        %275 = sbr.rel (%p273) target = $region28
      $region27: #{forward.3} parent=11 // pred_region
        _
      $region28: #{forward.3} parent=11 // pred_fallthru
        _
      // Predicated region
      $region29: #{forward.3} parent=11 // pred_check
        %p276 = pneg %p191
      $region30: #{forward.3} parent=11 // pred_check_branch
        %278 = sbr.rel (%p276) target = $region32
      $region31: #{forward.3} parent=11 // pred_region
        _
      $region32: #{forward.3} parent=11 // pred_fallthru
        _
    $region12: #{forward.3} parent=5 // pred_fallthru
      _
    %p279 = scmp.lt.s32.totalorder %s15, 2
    // Predicated region
    $region33: #{forward.3} parent=5 // pred_check
      %p280 = pneg %p279
    $region34: #{forward.3} parent=5 // pred_check_branch
      %282 = sbr.rel (%p280) target = $region36
    $region35: #{forward.3} parent=5 // pred_region
      // Predicated region
      $region37: #{forward.3} parent=35 // pred_check
        %p283 = pneg %p49
      $region38: #{forward.3} parent=35 // pred_check_branch
        %285 = sbr.rel (%p283) target = $region40
      $region39: #{forward.3} parent=35 // pred_region
        %s286 = smul.u32 16, %s22
        %s287 = smul.u32 2, %s23
        %p288 = scmp.lt.s32.totalorder %s286, 31
        %s289 = scalar_select %p288, %s286, 31
        %p290 = scmp.lt.s32.totalorder %s287, 1
        %s291 = scalar_select %p290, %s287, 1
        %s292 = smul.addr %s289, 2
        %s293 = sadd.s32 %s291, %s292
        %s294 = smul.addr %s293, 4
        %s295 = scalar_lea.vmem %s0, %s294
        %s296 = smul.u32 16, %s22
        %s297 = smul.u32 2, %s23
      $region40: #{forward.3} parent=35 // pred_fallthru
        _
      // Predicated region
      $region41: #{forward.3} parent=35 // pred_check
        %p298 = pneg %p101
      $region42: #{forward.3} parent=35 // pred_check_branch
        %300 = sbr.rel (%p298) target = $region44
      $region43: #{forward.3} parent=35 // pred_region
        %s301 = smul.u32 16, %s22
        %p302 = scmp.lt.s32.totalorder %s301, 31
        %s303 = scalar_select %p302, %s301, 31
        %s304 = smul.addr %s303, 8
        %s305 = scalar_lea.vmem %s2, %s304
        %s306 = smul.u32 16, %s22
      $region44: #{forward.3} parent=35 // pred_fallthru
        _
    $region36: #{forward.3} parent=5 // pred_fallthru
      _
    %p307 = scmp.le.s32.totalorder 1, %s15
    %p308 = scmp.lt.s32.totalorder %s15, 3
    %p309 = pnand %p307, %p308
    %p310 = pneg %p309
    // Predicated region
    $region45: #{forward.3} parent=5 // pred_check
      _
    $region46: #{forward.3} parent=5 // pred_check_branch
      %312 = sbr.rel (%p309) target = $region48
    $region47: #{forward.3} parent=5 // pred_region
      %s313 = ssub.s32 %s15, 1
      %s314 = smul.u32 16, %s24
      %s315 = smul.u32 2, %s25
      %p316 = scmp.lt.s32.totalorder %s314, 31
      %s317 = scalar_select %p316, %s314, 31
      %p318 = scmp.lt.s32.totalorder %s315, 1
      %s319 = scalar_select %p318, %s315, 1
      %s320 = smul.addr %s317, 2
      %s321 = sadd.s32 %s319, %s320
      %s322 = smul.addr %s321, 4
      %s323 = scalar_lea.vmem %s0, %s322
      %p324 = pneg %p55
      %p325 = pneg %p52
      %s326 = smul.u32 32, %s25
      %p327 = scmp.lt.s32.totalorder %s326, 31
      %s328 = scalar_select %p327, %s326, 31
      %s329 = smul.addr %s328, 4
      %s330 = scalar_lea.vmem %s1, %s329
      %p331 = pneg %p81
      %p332 = pneg %p78
      %s333 = smul.u32 16, %s24
      %p334 = scmp.lt.s32.totalorder %s333, 31
      %s335 = scalar_select %p334, %s333, 31
      %s336 = smul.addr %s335, 8
      %s337 = scalar_lea.vmem %s2, %s336
      %p338 = pneg %p107
      %p339 = pneg %p104
      %p340 = pneg %p128
      %p341 = pneg %p125
      %p342 = pneg %p149
      %p343 = pneg %p146
      %p344 = pneg %p170
      %p345 = pneg %p167
      %p346 = pneg %p191
      %p347 = pneg %p188
      %p348 = pneg %p217
      %p349 = pneg %p214
      %s350 = smul.u32 16, %s24
      %p351 = scmp.lt.s32.totalorder %s350, 31
      %s352 = scalar_select %p351, %s350, 31
      %s353 = smul.addr %s352, 4
      %s354 = scalar_lea.vmem %s7, %s353
      %p355 = pneg %p243
      %p356 = pneg %p240
      %p357 = scmp.lt.s32.totalorder %s24, 1
      %s358 = scalar_select %p357, %s24, 1
      %s359 = smul.addr %s358, 8
      %s360 = scalar_lea.vmem %s8, %s359
      %s361 = smul.u32 16, %s24
      %s362 = smul.u32 2, %s25
      %p363 = scmp.lt.s32.totalorder %s361, 31
      %s364 = scalar_select %p363, %s361, 31
      %p365 = scmp.lt.s32.totalorder %s362, 1
      %s366 = scalar_select %p365, %s362, 1
      %s367 = smul.addr %s364, 2
      %s368 = sadd.s32 %s366, %s367
      %s369 = smul.addr %s368, 4
      %s370 = scalar_lea.vmem %s0, %s369
      %s371 = smul.u32 16, %s24
      %s372 = smul.u32 2, %s25
      %s373 = smul.u32 32, %s25
      %p374 = scmp.lt.s32.totalorder %s373, 31
      %s375 = scalar_select %p374, %s373, 31
      %s376 = smul.addr %s375, 4
      %s377 = scalar_lea.vmem %s1, %s376
      %s378 = smul.u32 32, %s25
      %s379 = smul.u32 16, %s24
      %p380 = scmp.lt.s32.totalorder %s379, 31
      %s381 = scalar_select %p380, %s379, 31
      %s382 = smul.addr %s381, 8
      %s383 = scalar_lea.vmem %s2, %s382
      %s384 = smul.u32 16, %s24
      %s385 = smul.u32 16, %s24
      %p386 = scmp.lt.s32.totalorder %s385, 31
      %s387 = scalar_select %p386, %s385, 31
      %s388 = smul.addr %s387, 4
      %s389 = scalar_lea.vmem %s7, %s388
      %s390 = smul.u32 16, %s24
      %p391 = scmp.lt.s32.totalorder %s24, 1
      %s392 = scalar_select %p391, %s24, 1
      %s393 = smul.addr %s392, 8
      %s394 = scalar_lea.vmem %s8, %s393
      %p396 = scmp.eq.s32.totalorder %s25, 0
      // Predicated region
      $region49: #{forward.3} parent=47 // pred_check
        %p397 = pneg %p396
      $region50: #{forward.3} parent=47 // pred_check_branch
        %399 = sbr.rel (%p397) target = $region52
      $region51: #{forward.3} parent=47 // pred_region
        %400 = vst [vmem:[#allocation2] sm:$0xff] 0.0
        %401 = vst [vmem:[#allocation2 + $0x8] sm:$0xff] 0.0
        %402 = vst [vmem:[#allocation2 + $0x10] sm:$0xff] 0.0
        %403 = vst [vmem:[#allocation2 + $0x18] sm:$0xff] 0.0
        %404 = vst [vmem:[#allocation2 + $0x20] sm:$0xff] 0.0
        %405 = vst [vmem:[#allocation2 + $0x28] sm:$0xff] 0.0
        %406 = vst [vmem:[#allocation2 + $0x30] sm:$0xff] 0.0
        %407 = vst [vmem:[#allocation2 + $0x38] sm:$0xff] 0.0
        %408 = vst [vmem:[#allocation2 + $0x40] sm:$0xff] 0.0
        %409 = vst [vmem:[#allocation2 + $0x48] sm:$0xff] 0.0
        %410 = vst [vmem:[#allocation2 + $0x50] sm:$0xff] 0.0
        %411 = vst [vmem:[#allocation2 + $0x58] sm:$0xff] 0.0
        %412 = vst [vmem:[#allocation2 + $0x60] sm:$0xff] 0.0
        %413 = vst [vmem:[#allocation2 + $0x68] sm:$0xff] 0.0
        %414 = vst [vmem:[#allocation2 + $0x70] sm:$0xff] 0.0
        %415 = vst [vmem:[#allocation2 + $0x78] sm:$0xff] 0.0
        %416 = vst [vmem:[%s394] sm:$0xff] 0.0
      $region52: #{forward.3} parent=47 // pred_fallthru
        _
      %v417 = vld [vmem:[#allocation2] sm:$0xff]
      %v418 = vld [vmem:[#allocation2 + $0x8] sm:$0xff]
      %v419 = vld [vmem:[#allocation2 + $0x10] sm:$0xff]
      %v420 = vld [vmem:[#allocation2 + $0x18] sm:$0xff]
      %v421 = vld [vmem:[#allocation2 + $0x20] sm:$0xff]
      %v422 = vld [vmem:[#allocation2 + $0x28] sm:$0xff]
      %v423 = vld [vmem:[#allocation2 + $0x30] sm:$0xff]
      %v424 = vld [vmem:[#allocation2 + $0x38] sm:$0xff]
      %v425 = vld [vmem:[#allocation2 + $0x40] sm:$0xff]
      %v426 = vld [vmem:[#allocation2 + $0x48] sm:$0xff]
      %v427 = vld [vmem:[#allocation2 + $0x50] sm:$0xff]
      %v428 = vld [vmem:[#allocation2 + $0x58] sm:$0xff]
      %v429 = vld [vmem:[#allocation2 + $0x60] sm:$0xff]
      %v430 = vld [vmem:[#allocation2 + $0x68] sm:$0xff]
      %v431 = vld [vmem:[#allocation2 + $0x70] sm:$0xff]
      %v432 = vld [vmem:[#allocation2 + $0x78] sm:$0xff]
      %v433 = vld [vmem:[%s370] sm:$0xff]
      %v434 = vld [vmem:[%s370 + $0x8] sm:$0xff]
      %v435 = vld [vmem:[%s370 + $0x10] sm:$0xff]
      %v436 = vld [vmem:[%s370 + $0x18] sm:$0xff]
      %v437 = vld [vmem:[%s370 + $0x20] sm:$0xff]
      %v438 = vld [vmem:[%s370 + $0x28] sm:$0xff]
      %v439 = vld [vmem:[%s370 + $0x30] sm:$0xff]
      %v440 = vld [vmem:[%s370 + $0x38] sm:$0xff]
      %v441 = vld [vmem:[%s370 + $0x40] sm:$0xff]
      %v442 = vld [vmem:[%s370 + $0x48] sm:$0xff]
      %v443 = vld [vmem:[%s370 + $0x50] sm:$0xff]
      %v444 = vld [vmem:[%s370 + $0x58] sm:$0xff]
      %v445 = vld [vmem:[%s370 + $0x60] sm:$0xff]
      %v446 = vld [vmem:[%s370 + $0x68] sm:$0xff]
      %v447 = vld [vmem:[%s370 + $0x70] sm:$0xff]
      %v448 = vld [vmem:[%s370 + $0x78] sm:$0xff]
      %v449 = vld [vmem:[%s377] sm:$0xf]
      %v450 = vld [vmem:[%s377 + $0x4] sm:$0xf]
      %v451 = vld [vmem:[%s377 + $0x8] sm:$0xf]
      %v452 = vld [vmem:[%s377 + $0xc] sm:$0xf]
      %v453 = vld [vmem:[%s377 + $0x10] sm:$0xf]
      %v454 = vld [vmem:[%s377 + $0x14] sm:$0xf]
      %v455 = vld [vmem:[%s377 + $0x18] sm:$0xf]
      %v456 = vld [vmem:[%s377 + $0x1c] sm:$0xf]
      %v457 = vld [vmem:[%s377 + $0x20] sm:$0xf]
      %v458 = vld [vmem:[%s377 + $0x24] sm:$0xf]
      %v459 = vld [vmem:[%s377 + $0x28] sm:$0xf]
      %v460 = vld [vmem:[%s377 + $0x2c] sm:$0xf]
      %v461 = vld [vmem:[%s377 + $0x30] sm:$0xf]
      %v462 = vld [vmem:[%s377 + $0x34] sm:$0xf]
      %v463 = vld [vmem:[%s377 + $0x38] sm:$0xf]
      %v464 = vld [vmem:[%s377 + $0x3c] sm:$0xf]
      %v465 = vld [vmem:[%s377 + $0x40] sm:$0xf]
      %v466 = vld [vmem:[%s377 + $0x44] sm:$0xf]
      %v467 = vld [vmem:[%s377 + $0x48] sm:$0xf]
      %v468 = vld [vmem:[%s377 + $0x4c] sm:$0xf]
      %v469 = vld [vmem:[%s377 + $0x50] sm:$0xf]
      %v470 = vld [vmem:[%s377 + $0x54] sm:$0xf]
      %v471 = vld [vmem:[%s377 + $0x58] sm:$0xf]
      %v472 = vld [vmem:[%s377 + $0x5c] sm:$0xf]
      %v473 = vld [vmem:[%s377 + $0x60] sm:$0xf]
      %v474 = vld [vmem:[%s377 + $0x64] sm:$0xf]
      %v475 = vld [vmem:[%s377 + $0x68] sm:$0xf]
      %v476 = vld [vmem:[%s377 + $0x6c] sm:$0xf]
      %v477 = vld [vmem:[%s377 + $0x70] sm:$0xf]
      %v478 = vld [vmem:[%s377 + $0x74] sm:$0xf]
      %v479 = vld [vmem:[%s377 + $0x78] sm:$0xf]
      %v480 = vld [vmem:[%s377 + $0x7c] sm:$0xf]
      %v497 = vunpack.c.l.b16 %v433
      %v498 = vunpack.c.h.b16 %v433
      %v499 = vunpack.c.l.b16 %v434
      %v500 = vunpack.c.h.b16 %v434
      %v501 = vunpack.c.l.b16 %v435
      %v502 = vunpack.c.h.b16 %v435
      %v503 = vunpack.c.l.b16 %v436
      %v504 = vunpack.c.h.b16 %v436
      %v505 = vunpack.c.l.b16 %v437
      %v506 = vunpack.c.h.b16 %v437
      %v507 = vunpack.c.l.b16 %v438
      %v508 = vunpack.c.h.b16 %v438
      %v509 = vunpack.c.l.b16 %v439
      %v510 = vunpack.c.h.b16 %v439
      %v511 = vunpack.c.l.b16 %v440
      %v512 = vunpack.c.h.b16 %v440
      %v513 = vunpack.c.l.b16 %v441
      %v514 = vunpack.c.h.b16 %v441
      %v515 = vunpack.c.l.b16 %v442
      %v516 = vunpack.c.h.b16 %v442
      %v517 = vunpack.c.l.b16 %v443
      %v518 = vunpack.c.h.b16 %v443
      %v519 = vunpack.c.l.b16 %v444
      %v520 = vunpack.c.h.b16 %v444
      %v521 = vunpack.c.l.b16 %v445
      %v522 = vunpack.c.h.b16 %v445
      %v523 = vunpack.c.l.b16 %v446
      %v524 = vunpack.c.h.b16 %v446
      %v525 = vunpack.c.l.b16 %v447
      %v526 = vunpack.c.h.b16 %v447
      %v527 = vunpack.c.l.b16 %v448
      %v528 = vunpack.c.h.b16 %v448
      %v529 = vpack.c.b16 %v499, %v497
      %v530 = vpack.c.b16 %v500, %v498
      %v531 = vpack.c.b16 %v503, %v501
      %v532 = vpack.c.b16 %v504, %v502
      %v533 = vpack.c.b16 %v507, %v505
      %v534 = vpack.c.b16 %v508, %v506
      %v535 = vpack.c.b16 %v511, %v509
      %v536 = vpack.c.b16 %v512, %v510
      %v537 = vpack.c.b16 %v515, %v513
      %v538 = vpack.c.b16 %v516, %v514
      %v539 = vpack.c.b16 %v519, %v517
      %v540 = vpack.c.b16 %v520, %v518
      %v541 = vpack.c.b16 %v523, %v521
      %v542 = vpack.c.b16 %v524, %v522
      %v543 = vpack.c.b16 %v527, %v525
      %v544 = vpack.c.b16 %v528, %v526
      %v593 = vunpack.c.l.b16 %v449
      %v594 = vunpack.c.l.b16 %v450
      %v595 = vunpack.c.l.b16 %v451
      %v596 = vunpack.c.l.b16 %v452
      %v597 = vunpack.c.l.b16 %v453
      %v598 = vunpack.c.l.b16 %v454
      %v599 = vunpack.c.l.b16 %v455
      %v600 = vunpack.c.l.b16 %v456
      %v601 = vunpack.c.l.b16 %v457
      %v602 = vunpack.c.l.b16 %v458
      %v603 = vunpack.c.l.b16 %v459
      %v604 = vunpack.c.l.b16 %v460
      %v605 = vunpack.c.l.b16 %v461
      %v606 = vunpack.c.l.b16 %v462
      %v607 = vunpack.c.l.b16 %v463
      %v608 = vunpack.c.l.b16 %v464
      %v609 = vunpack.c.l.b16 %v465
      %v610 = vunpack.c.l.b16 %v466
      %v611 = vunpack.c.l.b16 %v467
      %v612 = vunpack.c.l.b16 %v468
      %v613 = vunpack.c.l.b16 %v469
      %v614 = vunpack.c.l.b16 %v470
      %v615 = vunpack.c.l.b16 %v471
      %v616 = vunpack.c.l.b16 %v472
      %v617 = vunpack.c.l.b16 %v473
      %v618 = vunpack.c.l.b16 %v474
      %v619 = vunpack.c.l.b16 %v475
      %v620 = vunpack.c.l.b16 %v476
      %v621 = vunpack.c.l.b16 %v477
      %v622 = vunpack.c.l.b16 %v478
      %v623 = vunpack.c.l.b16 %v479
      %v624 = vunpack.c.l.b16 %v480
      %v625 = vpack.c.b16 %v594, %v593
      %v626 = vpack.c.b16 %v596, %v595
      %v627 = vpack.c.b16 %v598, %v597
      %v628 = vpack.c.b16 %v600, %v599
      %v629 = vpack.c.b16 %v602, %v601
      %v630 = vpack.c.b16 %v604, %v603
      %v631 = vpack.c.b16 %v606, %v605
      %v632 = vpack.c.b16 %v608, %v607
      %v633 = vpack.c.b16 %v610, %v609
      %v634 = vpack.c.b16 %v612, %v611
      %v635 = vpack.c.b16 %v614, %v613
      %v636 = vpack.c.b16 %v616, %v615
      %v637 = vpack.c.b16 %v618, %v617
      %v638 = vpack.c.b16 %v620, %v619
      %v639 = vpack.c.b16 %v622, %v621
      %v640 = vpack.c.b16 %v624, %v623
      %657 = vmatprep.subr.bf16.mxu0 0
      %658 = vmatpush1.bf16.msra.mxu0 %v632
      %659 = vmatprep.subr.bf16.mxu0 0
      %660 = vmatpush1.bf16.msra.mxu0 %v631
      %661 = vmatprep.subr.bf16.mxu0 0
      %662 = vmatpush1.bf16.msra.mxu0 %v630
      %663 = vmatprep.subr.bf16.mxu0 0
      %664 = vmatpush1.bf16.msra.mxu0 %v629
      %665 = vmatprep.subr.bf16.mxu0 0
      %666 = vmatpush1.bf16.msra.mxu0 %v628
      %667 = vmatprep.subr.bf16.mxu0 0
      %668 = vmatpush1.bf16.msra.mxu0 %v627
      %669 = vmatprep.subr.bf16.mxu0 0
      %670 = vmatpush1.bf16.msra.mxu0 %v626
      %671 = vmatprep.subr.bf16.mxu0 0
      %672 = vmatpush1.bf16.msra.mxu0 %v625
      %673 = vmatprep.subr.bf16.mxu0 0
      %674 = vmatpush2.bf16.msra.mxu0 %v640
      %675 = vmatprep.subr.bf16.mxu0 0
      %676 = vmatpush2.bf16.msra.mxu0 %v639
      %677 = vmatprep.subr.bf16.mxu0 0
      %678 = vmatpush2.bf16.msra.mxu0 %v638
      %679 = vmatprep.subr.bf16.mxu0 0
      %680 = vmatpush2.bf16.msra.mxu0 %v637
      %681 = vmatprep.subr.bf16.mxu0 0
      %682 = vmatpush2.bf16.msra.mxu0 %v636
      %683 = vmatprep.subr.bf16.mxu0 0
      %684 = vmatpush2.bf16.msra.mxu0 %v635
      %685 = vmatprep.subr.bf16.mxu0 0
      %686 = vmatpush2.bf16.msra.mxu0 %v634
      %687 = vmatprep.subr.bf16.mxu0 0
      %688 = vmatpush2.bf16.msra.mxu0 %v633
      %689 = vmatprep.mubr.bf16.mxu0 %v530
      %690 = vmatmul.mubr.bf16.gmra.mxu0 %v529
      %v691 = vpop.f32.mrf.mxu0
      %v692 = vadd.f32 0.0, %v691
      %v693 = vpop.f32.mrf.mxu0
      %v694 = vpop.f32.mrf.mxu0
      %v695 = vadd.f32 0.0, %v694
      %v696 = vpop.f32.mrf.mxu0
      %697 = vmatprep.mubr.bf16.mxu0 %v532
      %698 = vmatmul.mubr.bf16.gmra.mxu0 %v531
      %v699 = vpop.f32.mrf.mxu0
      %v700 = vadd.f32 0.0, %v699
      %v701 = vpop.f32.mrf.mxu0
      %v702 = vpop.f32.mrf.mxu0
      %v703 = vadd.f32 0.0, %v702
      %v704 = vpop.f32.mrf.mxu0
      %705 = vmatprep.mubr.bf16.mxu0 %v534
      %706 = vmatmul.mubr.bf16.gmra.mxu0 %v533
      %v707 = vpop.f32.mrf.mxu0
      %v708 = vadd.f32 0.0, %v707
      %v709 = vpop.f32.mrf.mxu0
      %v710 = vpop.f32.mrf.mxu0
      %v711 = vadd.f32 0.0, %v710
      %v712 = vpop.f32.mrf.mxu0
      %713 = vmatprep.mubr.bf16.mxu0 %v536
      %714 = vmatmul.mubr.bf16.gmra.mxu0 %v535
      %v715 = vpop.f32.mrf.mxu0
      %v716 = vadd.f32 0.0, %v715
      %v717 = vpop.f32.mrf.mxu0
      %v718 = vpop.f32.mrf.mxu0
      %v719 = vadd.f32 0.0, %v718
      %v720 = vpop.f32.mrf.mxu0
      %721 = vmatprep.mubr.bf16.mxu0 %v538
      %722 = vmatmul.mubr.bf16.gmra.mxu0 %v537
      %v723 = vpop.f32.mrf.mxu0
      %v724 = vadd.f32 0.0, %v723
      %v725 = vpop.f32.mrf.mxu0
      %v726 = vpop.f32.mrf.mxu0
      %v727 = vadd.f32 0.0, %v726
      %v728 = vpop.f32.mrf.mxu0
      %729 = vmatprep.mubr.bf16.mxu0 %v540
      %730 = vmatmul.mubr.bf16.gmra.mxu0 %v539
      %v731 = vpop.f32.mrf.mxu0
      %v732 = vadd.f32 0.0, %v731
      %v733 = vpop.f32.mrf.mxu0
      %v734 = vpop.f32.mrf.mxu0
      %v735 = vadd.f32 0.0, %v734
      %v736 = vpop.f32.mrf.mxu0
      %737 = vmatprep.mubr.bf16.mxu0 %v542
      %738 = vmatmul.mubr.bf16.gmra.mxu0 %v541
      %v739 = vpop.f32.mrf.mxu0
      %v740 = vadd.f32 0.0, %v739
      %v741 = vpop.f32.mrf.mxu0
      %v742 = vpop.f32.mrf.mxu0
      %v743 = vadd.f32 0.0, %v742
      %v744 = vpop.f32.mrf.mxu0
      %745 = vmatprep.mubr.bf16.mxu0 %v544
      %746 = vmatmul.mubr.bf16.gmra.mxu0 %v543
      %v747 = vpop.f32.mrf.mxu0
      %v748 = vadd.f32 0.0, %v747
      %v749 = vpop.f32.mrf.mxu0
      %v750 = vpop.f32.mrf.mxu0
      %v751 = vadd.f32 0.0, %v750
      %v752 = vpop.f32.mrf.mxu0
      %753 = vdwg.mxu0
      %v754 = vadd.f32 %v417, %v692
      %v755 = vadd.f32 %v418, %v695
      %v756 = vadd.f32 %v419, %v700
      %v757 = vadd.f32 %v420, %v703
      %v758 = vadd.f32 %v421, %v708
      %v759 = vadd.f32 %v422, %v711
      %v760 = vadd.f32 %v423, %v716
      %v761 = vadd.f32 %v424, %v719
      %v762 = vadd.f32 %v425, %v724
      %v763 = vadd.f32 %v426, %v727
      %v764 = vadd.f32 %v427, %v732
      %v765 = vadd.f32 %v428, %v735
      %v766 = vadd.f32 %v429, %v740
      %v767 = vadd.f32 %v430, %v743
      %v768 = vadd.f32 %v431, %v748
      %v769 = vadd.f32 %v432, %v751
      %770 = vst [vmem:[#allocation2] sm:$0xff] %v754
      %771 = vst [vmem:[#allocation2 + $0x8] sm:$0xff] %v755
      %772 = vst [vmem:[#allocation2 + $0x10] sm:$0xff] %v756
      %773 = vst [vmem:[#allocation2 + $0x18] sm:$0xff] %v757
      %774 = vst [vmem:[#allocation2 + $0x20] sm:$0xff] %v758
      %775 = vst [vmem:[#allocation2 + $0x28] sm:$0xff] %v759
      %776 = vst [vmem:[#allocation2 + $0x30] sm:$0xff] %v760
      %777 = vst [vmem:[#allocation2 + $0x38] sm:$0xff] %v761
      %778 = vst [vmem:[#allocation2 + $0x40] sm:$0xff] %v762
      %779 = vst [vmem:[#allocation2 + $0x48] sm:$0xff] %v763
      %780 = vst [vmem:[#allocation2 + $0x50] sm:$0xff] %v764
      %781 = vst [vmem:[#allocation2 + $0x58] sm:$0xff] %v765
      %782 = vst [vmem:[#allocation2 + $0x60] sm:$0xff] %v766
      %783 = vst [vmem:[#allocation2 + $0x68] sm:$0xff] %v767
      %784 = vst [vmem:[#allocation2 + $0x70] sm:$0xff] %v768
      %785 = vst [vmem:[#allocation2 + $0x78] sm:$0xff] %v769
      // Predicated region
      $region53: #{forward.3} parent=47 // pred_check
        %p786 = pneg %p396
      $region54: #{forward.3} parent=47 // pred_check_branch
        %788 = sbr.rel (%p786) target = $region56
      $region55: #{forward.3} parent=47 // pred_region
        %v789 = vld [vmem:[#allocation2] sm:$0xff]
        %v790 = vld [vmem:[#allocation2 + $0x8] sm:$0xff]
        %v791 = vld [vmem:[#allocation2 + $0x10] sm:$0xff]
        %v792 = vld [vmem:[#allocation2 + $0x18] sm:$0xff]
        %v793 = vld [vmem:[#allocation2 + $0x20] sm:$0xff]
        %v794 = vld [vmem:[#allocation2 + $0x28] sm:$0xff]
        %v795 = vld [vmem:[#allocation2 + $0x30] sm:$0xff]
        %v796 = vld [vmem:[#allocation2 + $0x38] sm:$0xff]
        %v797 = vld [vmem:[#allocation2 + $0x40] sm:$0xff]
        %v798 = vld [vmem:[#allocation2 + $0x48] sm:$0xff]
        %v799 = vld [vmem:[#allocation2 + $0x50] sm:$0xff]
        %v800 = vld [vmem:[#allocation2 + $0x58] sm:$0xff]
        %v801 = vld [vmem:[#allocation2 + $0x60] sm:$0xff]
        %v802 = vld [vmem:[#allocation2 + $0x68] sm:$0xff]
        %v803 = vld [vmem:[#allocation2 + $0x70] sm:$0xff]
        %v804 = vld [vmem:[#allocation2 + $0x78] sm:$0xff]
        %v805 = vpack.c.bf16 %v790, %v789
        %v806 = vpack.c.bf16 %v792, %v791
        %v807 = vpack.c.bf16 %v794, %v793
        %v808 = vpack.c.bf16 %v796, %v795
        %v809 = vpack.c.bf16 %v798, %v797
        %v810 = vpack.c.bf16 %v800, %v799
        %v811 = vpack.c.bf16 %v802, %v801
        %v812 = vpack.c.bf16 %v804, %v803
        %v813 = vld [vmem:[%s3] sm:$0xf]
        %v814 = vld [vmem:[%s3 + $0x4] sm:$0xf]
        %v815 = vld [vmem:[%s3 + $0x8] sm:$0xf]
        %v816 = vld [vmem:[%s3 + $0xc] sm:$0xf]
        %v817 = vld [vmem:[%s3 + $0x10] sm:$0xf]
        %v818 = vld [vmem:[%s3 + $0x14] sm:$0xf]
        %v819 = vld [vmem:[%s3 + $0x18] sm:$0xf]
        %v820 = vld [vmem:[%s3 + $0x1c] sm:$0xf]
        %v821 = vld [vmem:[%s3 + $0x20] sm:$0xf]
        %v822 = vld [vmem:[%s3 + $0x24] sm:$0xf]
        %v823 = vld [vmem:[%s3 + $0x28] sm:$0xf]
        %v824 = vld [vmem:[%s3 + $0x2c] sm:$0xf]
        %v825 = vld [vmem:[%s3 + $0x30] sm:$0xf]
        %v826 = vld [vmem:[%s3 + $0x34] sm:$0xf]
        %v827 = vld [vmem:[%s3 + $0x38] sm:$0xf]
        %v828 = vld [vmem:[%s3 + $0x3c] sm:$0xf]
        %v829 = vld [vmem:[%s4] sm:$0x1]
        %v831 = vlaneseq
        %v832 = vshrl.u32 %v831, 7
        %v833 = vsub.s32 0, %v832
        %v834 = vrot.slane %v829, %v833
        %v852 = vunpack.c.l.b16 %v813
        %v853 = vunpack.c.l.b16 %v814
        %v854 = vunpack.c.l.b16 %v815
        %v855 = vunpack.c.l.b16 %v816
        %v856 = vunpack.c.l.b16 %v817
        %v857 = vunpack.c.l.b16 %v818
        %v858 = vunpack.c.l.b16 %v819
        %v859 = vunpack.c.l.b16 %v820
        %v860 = vunpack.c.l.b16 %v821
        %v861 = vunpack.c.l.b16 %v822
        %v862 = vunpack.c.l.b16 %v823
        %v863 = vunpack.c.l.b16 %v824
        %v864 = vunpack.c.l.b16 %v825
        %v865 = vunpack.c.l.b16 %v826
        %v866 = vunpack.c.l.b16 %v827
        %v867 = vunpack.c.l.b16 %v828
        %v868 = vpack.c.b16 %v853, %v852
        %v869 = vpack.c.b16 %v855, %v854
        %v870 = vpack.c.b16 %v857, %v856
        %v871 = vpack.c.b16 %v859, %v858
        %v872 = vpack.c.b16 %v861, %v860
        %v873 = vpack.c.b16 %v863, %v862
        %v874 = vpack.c.b16 %v865, %v864
        %v875 = vpack.c.b16 %v867, %v866
        %884 = vmatprep.subr.bf16.mxu0 0
        %885 = vmatpush1.bf16.msra.mxu0 %v875
        %886 = vmatprep.subr.bf16.mxu0 0
        %887 = vmatpush1.bf16.msra.mxu0 %v874
        %888 = vmatprep.subr.bf16.mxu0 0
        %889 = vmatpush1.bf16.msra.mxu0 %v873
        %890 = vmatprep.subr.bf16.mxu0 0
        %891 = vmatpush1.bf16.msra.mxu0 %v872
        %892 = vmatprep.subr.bf16.mxu0 0
        %893 = vmatpush1.bf16.msra.mxu0 %v871
        %894 = vmatprep.subr.bf16.mxu0 0
        %895 = vmatpush1.bf16.msra.mxu0 %v870
        %896 = vmatprep.subr.bf16.mxu0 0
        %897 = vmatpush1.bf16.msra.mxu0 %v869
        %898 = vmatprep.subr.bf16.mxu0 0
        %899 = vmatpush1.bf16.msra.mxu0 %v868
        %900 = vmatprep.subr.bf16.mxu0 0
        %901 = vmatpush2.bf16.msra.mxu0 0
        %902 = vmatprep.subr.bf16.mxu0 0
        %903 = vmatpush2.bf16.msra.mxu0 0
        %904 = vmatprep.subr.bf16.mxu0 0
        %905 = vmatpush2.bf16.msra.mxu0 0
        %906 = vmatprep.subr.bf16.mxu0 0
        %907 = vmatpush2.bf16.msra.mxu0 0
        %908 = vmatprep.subr.bf16.mxu0 0
        %909 = vmatpush2.bf16.msra.mxu0 0
        %910 = vmatprep.subr.bf16.mxu0 0
        %911 = vmatpush2.bf16.msra.mxu0 0
        %912 = vmatprep.subr.bf16.mxu0 0
        %913 = vmatpush2.bf16.msra.mxu0 0
        %914 = vmatprep.subr.bf16.mxu0 0
        %915 = vmatpush2.bf16.msra.mxu0 0
        %916 = vmatprep.mubr.bf16.mxu0 0
        %917 = vmatmul.mubr.bf16.gmra.mxu0 %v805
        %v918 = vpop.f32.mrf.mxu0
        %v919 = vadd.f32 %v834, %v918
        %v920 = vpop.f32.mrf.mxu0
        %v921 = vpop.f32.mrf.mxu0
        %v922 = vadd.f32 %v834, %v921
        %v923 = vpop.f32.mrf.mxu0
        %924 = vmatprep.mubr.bf16.mxu0 0
        %925 = vmatmul.mubr.bf16.gmra.mxu0 %v806
        %v926 = vpop.f32.mrf.mxu0
        %v927 = vadd.f32 %v834, %v926
        %v928 = vpop.f32.mrf.mxu0
        %v929 = vpop.f32.mrf.mxu0
        %v930 = vadd.f32 %v834, %v929
        %v931 = vpop.f32.mrf.mxu0
        %932 = vmatprep.mubr.bf16.mxu0 0
        %933 = vmatmul.mubr.bf16.gmra.mxu0 %v807
        %v934 = vpop.f32.mrf.mxu0
        %v935 = vadd.f32 %v834, %v934
        %v936 = vpop.f32.mrf.mxu0
        %v937 = vpop.f32.mrf.mxu0
        %v938 = vadd.f32 %v834, %v937
        %v939 = vpop.f32.mrf.mxu0
        %940 = vmatprep.mubr.bf16.mxu0 0
        %941 = vmatmul.mubr.bf16.gmra.mxu0 %v808
        %v942 = vpop.f32.mrf.mxu0
        %v943 = vadd.f32 %v834, %v942
        %v944 = vpop.f32.mrf.mxu0
        %v945 = vpop.f32.mrf.mxu0
        %v946 = vadd.f32 %v834, %v945
        %v947 = vpop.f32.mrf.mxu0
        %948 = vmatprep.mubr.bf16.mxu0 0
        %949 = vmatmul.mubr.bf16.gmra.mxu0 %v809
        %v950 = vpop.f32.mrf.mxu0
        %v951 = vadd.f32 %v834, %v950
        %v952 = vpop.f32.mrf.mxu0
        %v953 = vpop.f32.mrf.mxu0
        %v954 = vadd.f32 %v834, %v953
        %v955 = vpop.f32.mrf.mxu0
        %956 = vmatprep.mubr.bf16.mxu0 0
        %957 = vmatmul.mubr.bf16.gmra.mxu0 %v810
        %v958 = vpop.f32.mrf.mxu0
        %v959 = vadd.f32 %v834, %v958
        %v960 = vpop.f32.mrf.mxu0
        %v961 = vpop.f32.mrf.mxu0
        %v962 = vadd.f32 %v834, %v961
        %v963 = vpop.f32.mrf.mxu0
        %964 = vmatprep.mubr.bf16.mxu0 0
        %965 = vmatmul.mubr.bf16.gmra.mxu0 %v811
        %v966 = vpop.f32.mrf.mxu0
        %v967 = vadd.f32 %v834, %v966
        %v968 = vpop.f32.mrf.mxu0
        %v969 = vpop.f32.mrf.mxu0
        %v970 = vadd.f32 %v834, %v969
        %v971 = vpop.f32.mrf.mxu0
        %972 = vmatprep.mubr.bf16.mxu0 0
        %973 = vmatmul.mubr.bf16.gmra.mxu0 %v812
        %v974 = vpop.f32.mrf.mxu0
        %v975 = vadd.f32 %v834, %v974
        %v976 = vpop.f32.mrf.mxu0
        %v977 = vpop.f32.mrf.mxu0
        %v978 = vadd.f32 %v834, %v977
        %v979 = vpop.f32.mrf.mxu0
        %980 = vdwg.mxu0
        %vm981 = vcmp.ge.f32.partialorder %v919, 0.0
        %vm982 = vcmp.ge.f32.partialorder %v922, 0.0
        %vm983 = vcmp.ge.f32.partialorder %v927, 0.0
        %vm984 = vcmp.ge.f32.partialorder %v930, 0.0
        %vm985 = vcmp.ge.f32.partialorder %v935, 0.0
        %vm986 = vcmp.ge.f32.partialorder %v938, 0.0
        %vm987 = vcmp.ge.f32.partialorder %v943, 0.0
        %vm988 = vcmp.ge.f32.partialorder %v946, 0.0
        %vm989 = vcmp.ge.f32.partialorder %v951, 0.0
        %vm990 = vcmp.ge.f32.partialorder %v954, 0.0
        %vm991 = vcmp.ge.f32.partialorder %v959, 0.0
        %vm992 = vcmp.ge.f32.partialorder %v962, 0.0
        %vm993 = vcmp.ge.f32.partialorder %v967, 0.0
        %vm994 = vcmp.ge.f32.partialorder %v970, 0.0
        %vm995 = vcmp.ge.f32.partialorder %v975, 0.0
        %vm996 = vcmp.ge.f32.partialorder %v978, 0.0
        %v997 = vmul.f32 %v919, 0.01
        %v998 = vmul.f32 %v922, 0.01
        %v999 = vmul.f32 %v927, 0.01
        %v1000 = vmul.f32 %v930, 0.01
        %v1001 = vmul.f32 %v935, 0.01
        %v1002 = vmul.f32 %v938, 0.01
        %v1003 = vmul.f32 %v943, 0.01
        %v1004 = vmul.f32 %v946, 0.01
        %v1005 = vmul.f32 %v951, 0.01
        %v1006 = vmul.f32 %v954, 0.01
        %v1007 = vmul.f32 %v959, 0.01
        %v1008 = vmul.f32 %v962, 0.01
        %v1009 = vmul.f32 %v967, 0.01
        %v1010 = vmul.f32 %v970, 0.01
        %v1011 = vmul.f32 %v975, 0.01
        %v1012 = vmul.f32 %v978, 0.01
        %v1013 = vsel %vm981, %v919, %v997
        %v1014 = vsel %vm982, %v922, %v998
        %v1015 = vsel %vm983, %v927, %v999
        %v1016 = vsel %vm984, %v930, %v1000
        %v1017 = vsel %vm985, %v935, %v1001
        %v1018 = vsel %vm986, %v938, %v1002
        %v1019 = vsel %vm987, %v943, %v1003
        %v1020 = vsel %vm988, %v946, %v1004
        %v1021 = vsel %vm989, %v951, %v1005
        %v1022 = vsel %vm990, %v954, %v1006
        %v1023 = vsel %vm991, %v959, %v1007
        %v1024 = vsel %vm992, %v962, %v1008
        %v1025 = vsel %vm993, %v967, %v1009
        %v1026 = vsel %vm994, %v970, %v1010
        %v1027 = vsel %vm995, %v975, %v1011
        %v1028 = vsel %vm996, %v978, %v1012
        %v1029 = vpack.c.bf16 %v1014, %v1013
        %v1030 = vpack.c.bf16 %v1016, %v1015
        %v1031 = vpack.c.bf16 %v1018, %v1017
        %v1032 = vpack.c.bf16 %v1020, %v1019
        %v1033 = vpack.c.bf16 %v1022, %v1021
        %v1034 = vpack.c.bf16 %v1024, %v1023
        %v1035 = vpack.c.bf16 %v1026, %v1025
        %v1036 = vpack.c.bf16 %v1028, %v1027
        %v1037 = vld [vmem:[%s5] sm:$0xf]
        %v1038 = vld [vmem:[%s5 + $0x4] sm:$0xf]
        %v1039 = vld [vmem:[%s5 + $0x8] sm:$0xf]
        %v1040 = vld [vmem:[%s5 + $0xc] sm:$0xf]
        %v1041 = vld [vmem:[%s5 + $0x10] sm:$0xf]
        %v1042 = vld [vmem:[%s5 + $0x14] sm:$0xf]
        %v1043 = vld [vmem:[%s5 + $0x18] sm:$0xf]
        %v1044 = vld [vmem:[%s5 + $0x1c] sm:$0xf]
        %v1045 = vld [vmem:[%s5 + $0x20] sm:$0xf]
        %v1046 = vld [vmem:[%s5 + $0x24] sm:$0xf]
        %v1047 = vld [vmem:[%s5 + $0x28] sm:$0xf]
        %v1048 = vld [vmem:[%s5 + $0x2c] sm:$0xf]
        %v1049 = vld [vmem:[%s5 + $0x30] sm:$0xf]
        %v1050 = vld [vmem:[%s5 + $0x34] sm:$0xf]
        %v1051 = vld [vmem:[%s5 + $0x38] sm:$0xf]
        %v1052 = vld [vmem:[%s5 + $0x3c] sm:$0xf]
        %v1053 = vld [vmem:[%s6] sm:$0x1]
        %v1055 = vlaneseq
        %v1056 = vshrl.u32 %v1055, 7
        %v1057 = vsub.s32 0, %v1056
        %v1058 = vrot.slane %v1053, %v1057
        %v1076 = vunpack.c.l.b16 %v1037
        %v1077 = vunpack.c.l.b16 %v1038
        %v1078 = vunpack.c.l.b16 %v1039
        %v1079 = vunpack.c.l.b16 %v1040
        %v1080 = vunpack.c.l.b16 %v1041
        %v1081 = vunpack.c.l.b16 %v1042
        %v1082 = vunpack.c.l.b16 %v1043
        %v1083 = vunpack.c.l.b16 %v1044
        %v1084 = vunpack.c.l.b16 %v1045
        %v1085 = vunpack.c.l.b16 %v1046
        %v1086 = vunpack.c.l.b16 %v1047
        %v1087 = vunpack.c.l.b16 %v1048
        %v1088 = vunpack.c.l.b16 %v1049
        %v1089 = vunpack.c.l.b16 %v1050
        %v1090 = vunpack.c.l.b16 %v1051
        %v1091 = vunpack.c.l.b16 %v1052
        %v1092 = vpack.c.b16 %v1077, %v1076
        %v1093 = vpack.c.b16 %v1079, %v1078
        %v1094 = vpack.c.b16 %v1081, %v1080
        %v1095 = vpack.c.b16 %v1083, %v1082
        %v1096 = vpack.c.b16 %v1085, %v1084
        %v1097 = vpack.c.b16 %v1087, %v1086
        %v1098 = vpack.c.b16 %v1089, %v1088
        %v1099 = vpack.c.b16 %v1091, %v1090
        %1108 = vmatprep.subr.bf16.mxu0 0
        %1109 = vmatpush1.bf16.msra.mxu0 %v1099
        %1110 = vmatprep.subr.bf16.mxu0 0
        %1111 = vmatpush1.bf16.msra.mxu0 %v1098
        %1112 = vmatprep.subr.bf16.mxu0 0
        %1113 = vmatpush1.bf16.msra.mxu0 %v1097
        %1114 = vmatprep.subr.bf16.mxu0 0
        %1115 = vmatpush1.bf16.msra.mxu0 %v1096
        %1116 = vmatprep.subr.bf16.mxu0 0
        %1117 = vmatpush1.bf16.msra.mxu0 %v1095
        %1118 = vmatprep.subr.bf16.mxu0 0
        %1119 = vmatpush1.bf16.msra.mxu0 %v1094
        %1120 = vmatprep.subr.bf16.mxu0 0
        %1121 = vmatpush1.bf16.msra.mxu0 %v1093
        %1122 = vmatprep.subr.bf16.mxu0 0
        %1123 = vmatpush1.bf16.msra.mxu0 %v1092
        %1124 = vmatprep.subr.bf16.mxu0 0
        %1125 = vmatpush2.bf16.msra.mxu0 0
        %1126 = vmatprep.subr.bf16.mxu0 0
        %1127 = vmatpush2.bf16.msra.mxu0 0
        %1128 = vmatprep.subr.bf16.mxu0 0
        %1129 = vmatpush2.bf16.msra.mxu0 0
        %1130 = vmatprep.subr.bf16.mxu0 0
        %1131 = vmatpush2.bf16.msra.mxu0 0
        %1132 = vmatprep.subr.bf16.mxu0 0
        %1133 = vmatpush2.bf16.msra.mxu0 0
        %1134 = vmatprep.subr.bf16.mxu0 0
        %1135 = vmatpush2.bf16.msra.mxu0 0
        %1136 = vmatprep.subr.bf16.mxu0 0
        %1137 = vmatpush2.bf16.msra.mxu0 0
        %1138 = vmatprep.subr.bf16.mxu0 0
        %1139 = vmatpush2.bf16.msra.mxu0 0
        %1140 = vmatprep.mubr.bf16.mxu0 0
        %1141 = vmatmul.mubr.bf16.gmra.mxu0 %v1029
        %v1142 = vpop.f32.mrf.mxu0
        %v1143 = vadd.f32 %v1058, %v1142
        %v1144 = vpop.f32.mrf.mxu0
        %v1145 = vpop.f32.mrf.mxu0
        %v1146 = vadd.f32 %v1058, %v1145
        %v1147 = vpop.f32.mrf.mxu0
        %1148 = vmatprep.mubr.bf16.mxu0 0
        %1149 = vmatmul.mubr.bf16.gmra.mxu0 %v1030
        %v1150 = vpop.f32.mrf.mxu0
        %v1151 = vadd.f32 %v1058, %v1150
        %v1152 = vpop.f32.mrf.mxu0
        %v1153 = vpop.f32.mrf.mxu0
        %v1154 = vadd.f32 %v1058, %v1153
        %v1155 = vpop.f32.mrf.mxu0
        %1156 = vmatprep.mubr.bf16.mxu0 0
        %1157 = vmatmul.mubr.bf16.gmra.mxu0 %v1031
        %v1158 = vpop.f32.mrf.mxu0
        %v1159 = vadd.f32 %v1058, %v1158
        %v1160 = vpop.f32.mrf.mxu0
        %v1161 = vpop.f32.mrf.mxu0
        %v1162 = vadd.f32 %v1058, %v1161
        %v1163 = vpop.f32.mrf.mxu0
        %1164 = vmatprep.mubr.bf16.mxu0 0
        %1165 = vmatmul.mubr.bf16.gmra.mxu0 %v1032
        %v1166 = vpop.f32.mrf.mxu0
        %v1167 = vadd.f32 %v1058, %v1166
        %v1168 = vpop.f32.mrf.mxu0
        %v1169 = vpop.f32.mrf.mxu0
        %v1170 = vadd.f32 %v1058, %v1169
        %v1171 = vpop.f32.mrf.mxu0
        %1172 = vmatprep.mubr.bf16.mxu0 0
        %1173 = vmatmul.mubr.bf16.gmra.mxu0 %v1033
        %v1174 = vpop.f32.mrf.mxu0
        %v1175 = vadd.f32 %v1058, %v1174
        %v1176 = vpop.f32.mrf.mxu0
        %v1177 = vpop.f32.mrf.mxu0
        %v1178 = vadd.f32 %v1058, %v1177
        %v1179 = vpop.f32.mrf.mxu0
        %1180 = vmatprep.mubr.bf16.mxu0 0
        %1181 = vmatmul.mubr.bf16.gmra.mxu0 %v1034
        %v1182 = vpop.f32.mrf.mxu0
        %v1183 = vadd.f32 %v1058, %v1182
        %v1184 = vpop.f32.mrf.mxu0
        %v1185 = vpop.f32.mrf.mxu0
        %v1186 = vadd.f32 %v1058, %v1185
        %v1187 = vpop.f32.mrf.mxu0
        %1188 = vmatprep.mubr.bf16.mxu0 0
        %1189 = vmatmul.mubr.bf16.gmra.mxu0 %v1035
        %v1190 = vpop.f32.mrf.mxu0
        %v1191 = vadd.f32 %v1058, %v1190
        %v1192 = vpop.f32.mrf.mxu0
        %v1193 = vpop.f32.mrf.mxu0
        %v1194 = vadd.f32 %v1058, %v1193
        %v1195 = vpop.f32.mrf.mxu0
        %1196 = vmatprep.mubr.bf16.mxu0 0
        %1197 = vmatmul.mubr.bf16.gmra.mxu0 %v1036
        %v1198 = vpop.f32.mrf.mxu0
        %v1199 = vadd.f32 %v1058, %v1198
        %v1200 = vpop.f32.mrf.mxu0
        %v1201 = vpop.f32.mrf.mxu0
        %v1202 = vadd.f32 %v1058, %v1201
        %v1203 = vpop.f32.mrf.mxu0
        %1204 = vdwg.mxu0
        %v1205 = vld [vmem:[%s383] sm:$0xff]
        %v1206 = vld [vmem:[%s383 + $0x8] sm:$0xff]
        %v1207 = vld [vmem:[%s383 + $0x10] sm:$0xff]
        %v1208 = vld [vmem:[%s383 + $0x18] sm:$0xff]
        %v1209 = vld [vmem:[%s383 + $0x20] sm:$0xff]
        %v1210 = vld [vmem:[%s383 + $0x28] sm:$0xff]
        %v1211 = vld [vmem:[%s383 + $0x30] sm:$0xff]
        %v1212 = vld [vmem:[%s383 + $0x38] sm:$0xff]
        %v1213 = vld [vmem:[%s383 + $0x40] sm:$0xff]
        %v1214 = vld [vmem:[%s383 + $0x48] sm:$0xff]
        %v1215 = vld [vmem:[%s383 + $0x50] sm:$0xff]
        %v1216 = vld [vmem:[%s383 + $0x58] sm:$0xff]
        %v1217 = vld [vmem:[%s383 + $0x60] sm:$0xff]
        %v1218 = vld [vmem:[%s383 + $0x68] sm:$0xff]
        %v1219 = vld [vmem:[%s383 + $0x70] sm:$0xff]
        %v1220 = vld [vmem:[%s383 + $0x78] sm:$0xff]
        %1222 = vset.pattern.permute.xlu0 0
        %1223 = vperm.xlu0 %1222, %v1205
        %v1224 = vpop.permute.xlu0 %1223
        %1227 = vset.pattern.permute.xlu0 0
        %1228 = vperm.xlu0 %1227, %v1206
        %v1229 = vpop.permute.xlu0 %1228
        %1232 = vset.pattern.permute.xlu0 0
        %1233 = vperm.xlu0 %1232, %v1207
        %v1234 = vpop.permute.xlu0 %1233
        %1237 = vset.pattern.permute.xlu0 0
        %1238 = vperm.xlu0 %1237, %v1208
        %v1239 = vpop.permute.xlu0 %1238
        %1242 = vset.pattern.permute.xlu0 0
        %1243 = vperm.xlu0 %1242, %v1209
        %v1244 = vpop.permute.xlu0 %1243
        %1247 = vset.pattern.permute.xlu0 0
        %1248 = vperm.xlu0 %1247, %v1210
        %v1249 = vpop.permute.xlu0 %1248
        %1252 = vset.pattern.permute.xlu0 0
        %1253 = vperm.xlu0 %1252, %v1211
        %v1254 = vpop.permute.xlu0 %1253
        %1257 = vset.pattern.permute.xlu0 0
        %1258 = vperm.xlu0 %1257, %v1212
        %v1259 = vpop.permute.xlu0 %1258
        %1262 = vset.pattern.permute.xlu0 0
        %1263 = vperm.xlu0 %1262, %v1213
        %v1264 = vpop.permute.xlu0 %1263
        %1267 = vset.pattern.permute.xlu0 0
        %1268 = vperm.xlu0 %1267, %v1214
        %v1269 = vpop.permute.xlu0 %1268
        %1272 = vset.pattern.permute.xlu0 0
        %1273 = vperm.xlu0 %1272, %v1215
        %v1274 = vpop.permute.xlu0 %1273
        %1277 = vset.pattern.permute.xlu0 0
        %1278 = vperm.xlu0 %1277, %v1216
        %v1279 = vpop.permute.xlu0 %1278
        %1282 = vset.pattern.permute.xlu0 0
        %1283 = vperm.xlu0 %1282, %v1217
        %v1284 = vpop.permute.xlu0 %1283
        %1287 = vset.pattern.permute.xlu0 0
        %1288 = vperm.xlu0 %1287, %v1218
        %v1289 = vpop.permute.xlu0 %1288
        %1292 = vset.pattern.permute.xlu0 0
        %1293 = vperm.xlu0 %1292, %v1219
        %v1294 = vpop.permute.xlu0 %1293
        %1297 = vset.pattern.permute.xlu0 0
        %1298 = vperm.xlu0 %1297, %v1220
        %v1299 = vpop.permute.xlu0 %1298
        %v1301 = vmul.f32 %v1143, %v1224
        %v1302 = vmul.f32 %v1146, %v1229
        %v1303 = vmul.f32 %v1151, %v1234
        %v1304 = vmul.f32 %v1154, %v1239
        %v1305 = vmul.f32 %v1159, %v1244
        %v1306 = vmul.f32 %v1162, %v1249
        %v1307 = vmul.f32 %v1167, %v1254
        %v1308 = vmul.f32 %v1170, %v1259
        %v1309 = vmul.f32 %v1175, %v1264
        %v1310 = vmul.f32 %v1178, %v1269
        %v1311 = vmul.f32 %v1183, %v1274
        %v1312 = vmul.f32 %v1186, %v1279
        %v1313 = vmul.f32 %v1191, %v1284
        %v1314 = vmul.f32 %v1194, %v1289
        %v1315 = vmul.f32 %v1199, %v1294
        %v1316 = vmul.f32 %v1202, %v1299
        %v1317 = vadd.f32 %v1301, %v1302
        %v1318 = vadd.f32 %v1317, %v1303
        %v1319 = vadd.f32 %v1318, %v1304
        %v1320 = vadd.f32 %v1319, %v1305
        %v1321 = vadd.f32 %v1320, %v1306
        %v1322 = vadd.f32 %v1321, %v1307
        %v1323 = vadd.f32 %v1322, %v1308
        %v1324 = vadd.f32 %v1323, %v1309
        %v1325 = vadd.f32 %v1324, %v1310
        %v1326 = vadd.f32 %v1325, %v1311
        %v1327 = vadd.f32 %v1326, %v1312
        %v1328 = vadd.f32 %v1327, %v1313
        %v1329 = vadd.f32 %v1328, %v1314
        %v1330 = vadd.f32 %v1329, %v1315
        %v1331 = vadd.f32 %v1330, %v1316
        %v1332 = vrot.slane %v1331, 4
        %v1333 = vadd.f32 %v1331, %v1332
        %v1334 = vrot.slane %v1333, 2
        %v1335 = vadd.f32 %v1333, %v1334
        %v1336 = vrot.slane %v1335, 1
        %v1337 = vadd.f32 %v1335, %v1336
        %1338 = vst [vmem:[%s394] sm:$0x1] %v1337
        %vm1339 = vcmp.ge.f32.partialorder %v1301, 0.0
        %vm1340 = vcmp.ge.f32.partialorder %v1302, 0.0
        %vm1341 = vcmp.ge.f32.partialorder %v1303, 0.0
        %vm1342 = vcmp.ge.f32.partialorder %v1304, 0.0
        %vm1343 = vcmp.ge.f32.partialorder %v1305, 0.0
        %vm1344 = vcmp.ge.f32.partialorder %v1306, 0.0
        %vm1345 = vcmp.ge.f32.partialorder %v1307, 0.0
        %vm1346 = vcmp.ge.f32.partialorder %v1308, 0.0
        %vm1347 = vcmp.ge.f32.partialorder %v1309, 0.0
        %vm1348 = vcmp.ge.f32.partialorder %v1310, 0.0
        %vm1349 = vcmp.ge.f32.partialorder %v1311, 0.0
        %vm1350 = vcmp.ge.f32.partialorder %v1312, 0.0
        %vm1351 = vcmp.ge.f32.partialorder %v1313, 0.0
        %vm1352 = vcmp.ge.f32.partialorder %v1314, 0.0
        %vm1353 = vcmp.ge.f32.partialorder %v1315, 0.0
        %vm1354 = vcmp.ge.f32.partialorder %v1316, 0.0
        %v1355 = vmul.f32 %v1301, 0.01
        %v1356 = vmul.f32 %v1302, 0.01
        %v1357 = vmul.f32 %v1303, 0.01
        %v1358 = vmul.f32 %v1304, 0.01
        %v1359 = vmul.f32 %v1305, 0.01
        %v1360 = vmul.f32 %v1306, 0.01
        %v1361 = vmul.f32 %v1307, 0.01
        %v1362 = vmul.f32 %v1308, 0.01
        %v1363 = vmul.f32 %v1309, 0.01
        %v1364 = vmul.f32 %v1310, 0.01
        %v1365 = vmul.f32 %v1311, 0.01
        %v1366 = vmul.f32 %v1312, 0.01
        %v1367 = vmul.f32 %v1313, 0.01
        %v1368 = vmul.f32 %v1314, 0.01
        %v1369 = vmul.f32 %v1315, 0.01
        %v1370 = vmul.f32 %v1316, 0.01
        %v1371 = vsel %vm1339, %v1301, %v1355
        %v1372 = vsel %vm1340, %v1302, %v1356
        %v1373 = vsel %vm1341, %v1303, %v1357
        %v1374 = vsel %vm1342, %v1304, %v1358
        %v1375 = vsel %vm1343, %v1305, %v1359
        %v1376 = vsel %vm1344, %v1306, %v1360
        %v1377 = vsel %vm1345, %v1307, %v1361
        %v1378 = vsel %vm1346, %v1308, %v1362
        %v1379 = vsel %vm1347, %v1309, %v1363
        %v1380 = vsel %vm1348, %v1310, %v1364
        %v1381 = vsel %vm1349, %v1311, %v1365
        %v1382 = vsel %vm1350, %v1312, %v1366
        %v1383 = vsel %vm1351, %v1313, %v1367
        %v1384 = vsel %vm1352, %v1314, %v1368
        %v1385 = vsel %vm1353, %v1315, %v1369
        %v1386 = vsel %vm1354, %v1316, %v1370
        %v1387 = vpack.c.bf16 %v1372, %v1371
        %v1388 = vpack.c.bf16 %v1374, %v1373
        %v1389 = vpack.c.bf16 %v1376, %v1375
        %v1390 = vpack.c.bf16 %v1378, %v1377
        %v1391 = vpack.c.bf16 %v1380, %v1379
        %v1392 = vpack.c.bf16 %v1382, %v1381
        %v1393 = vpack.c.bf16 %v1384, %v1383
        %v1394 = vpack.c.bf16 %v1386, %v1385
        %v1403 = vunpack.c.l.b16 %v1387
        %v1404 = vunpack.c.h.b16 %v1387
        %v1405 = vunpack.c.l.b16 %v1388
        %v1406 = vunpack.c.h.b16 %v1388
        %v1407 = vunpack.c.l.b16 %v1389
        %v1408 = vunpack.c.h.b16 %v1389
        %v1409 = vunpack.c.l.b16 %v1390
        %v1410 = vunpack.c.h.b16 %v1390
        %v1411 = vunpack.c.l.b16 %v1391
        %v1412 = vunpack.c.h.b16 %v1391
        %v1413 = vunpack.c.l.b16 %v1392
        %v1414 = vunpack.c.h.b16 %v1392
        %v1415 = vunpack.c.l.b16 %v1393
        %v1416 = vunpack.c.h.b16 %v1393
        %v1417 = vunpack.c.l.b16 %v1394
        %v1418 = vunpack.c.h.b16 %v1394
        %v1419 = vpack.c.b16 %v1403, %v1403
        %v1420 = vpack.c.b16 %v1404, %v1404
        %v1421 = vpack.c.b16 %v1405, %v1405
        %v1422 = vpack.c.b16 %v1406, %v1406
        %v1423 = vpack.c.b16 %v1407, %v1407
        %v1424 = vpack.c.b16 %v1408, %v1408
        %v1425 = vpack.c.b16 %v1409, %v1409
        %v1426 = vpack.c.b16 %v1410, %v1410
        %v1427 = vpack.c.b16 %v1411, %v1411
        %v1428 = vpack.c.b16 %v1412, %v1412
        %v1429 = vpack.c.b16 %v1413, %v1413
        %v1430 = vpack.c.b16 %v1414, %v1414
        %v1431 = vpack.c.b16 %v1415, %v1415
        %v1432 = vpack.c.b16 %v1416, %v1416
        %v1433 = vpack.c.b16 %v1417, %v1417
        %v1434 = vpack.c.b16 %v1418, %v1418
        %1451 = vst [vmem:[%s389] sm:$0xf] %v1419
        %1452 = vst [vmem:[%s389 + $0x4] sm:$0xf] %v1420
        %1453 = vst [vmem:[%s389 + $0x8] sm:$0xf] %v1421
        %1454 = vst [vmem:[%s389 + $0xc] sm:$0xf] %v1422
        %1455 = vst [vmem:[%s389 + $0x10] sm:$0xf] %v1423
        %1456 = vst [vmem:[%s389 + $0x14] sm:$0xf] %v1424
        %1457 = vst [vmem:[%s389 + $0x18] sm:$0xf] %v1425
        %1458 = vst [vmem:[%s389 + $0x1c] sm:$0xf] %v1426
        %1459 = vst [vmem:[%s389 + $0x20] sm:$0xf] %v1427
        %1460 = vst [vmem:[%s389 + $0x24] sm:$0xf] %v1428
        %1461 = vst [vmem:[%s389 + $0x28] sm:$0xf] %v1429
        %1462 = vst [vmem:[%s389 + $0x2c] sm:$0xf] %v1430
        %1463 = vst [vmem:[%s389 + $0x30] sm:$0xf] %v1431
        %1464 = vst [vmem:[%s389 + $0x34] sm:$0xf] %v1432
        %1465 = vst [vmem:[%s389 + $0x38] sm:$0xf] %v1433
        %1466 = vst [vmem:[%s389 + $0x3c] sm:$0xf] %v1434
      $region56: #{forward.3} parent=47 // pred_fallthru
        _
      %s1467 = smul.u32 16, %s24
      %p1468 = scmp.lt.s32.totalorder %s1467, 31
      %s1469 = scalar_select %p1468, %s1467, 31
      %s1470 = smul.addr %s1469, 4
      %s1471 = scalar_lea.vmem %s7, %s1470
      %p1472 = scmp.lt.s32.totalorder %s24, 1
      %s1473 = scalar_select %p1472, %s24, 1
      %s1474 = smul.addr %s1473, 8
      %s1475 = scalar_lea.vmem %s8, %s1474
      // Predicated region
      $region57: #{forward.3} parent=47 // pred_check
        %p1476 = pneg %p214
      $region58: #{forward.3} parent=47 // pred_check_branch
        %1478 = sbr.rel (%p1476) target = $region60
      $region59: #{forward.3} parent=47 // pred_region
        %s1479 = smul.u32 16, %s24
      $region60: #{forward.3} parent=47 // pred_fallthru
        _
      // Predicated region
      $region61: #{forward.3} parent=47 // pred_check
        %p1480 = pneg %p240
      $region62: #{forward.3} parent=47 // pred_check_branch
        %1482 = sbr.rel (%p1480) target = $region64
      $region63: #{forward.3} parent=47 // pred_region
        _
      $region64: #{forward.3} parent=47 // pred_fallthru
        _
    $region48: #{forward.3} parent=5 // pred_fallthru
      _
    %p1483 = scmp.le.s32.totalorder 2, %s15
    // Predicated region
    $region65: #{forward.3} parent=5 // pred_check
      %p1484 = pneg %p1483
    $region66: #{forward.3} parent=5 // pred_check_branch
      %1486 = sbr.rel (%p1484) target = $region68
    $region67: #{forward.3} parent=5 // pred_region
      %s1487 = ssub.s32 %s15, 2
      // Predicated region
      $region69: #{forward.3} parent=67 // pred_check
        %p1488 = pneg %p220
      $region70: #{forward.3} parent=67 // pred_check_branch
        %1490 = sbr.rel (%p1488) target = $region72
      $region71: #{forward.3} parent=67 // pred_region
        %s1491 = smul.u32 16, %s26
        %p1492 = scmp.lt.s32.totalorder %s1491, 31
        %s1493 = scalar_select %p1492, %s1491, 31
        %s1494 = smul.addr %s1493, 4
        %s1495 = scalar_lea.vmem %s7, %s1494
      $region72: #{forward.3} parent=67 // pred_fallthru
        _
      // Predicated region
      $region73: #{forward.3} parent=67 // pred_check
        %p1496 = pneg %p246
      $region74: #{forward.3} parent=67 // pred_check_branch
        %1498 = sbr.rel (%p1496) target = $region76
      $region75: #{forward.3} parent=67 // pred_region
        %p1499 = scmp.lt.s32.totalorder %s26, 1
        %s1500 = scalar_select %p1499, %s26, 1
        %s1501 = smul.addr %s1500, 8
        %s1502 = scalar_lea.vmem %s8, %s1501
      $region76: #{forward.3} parent=67 // pred_fallthru
        _
    $region68: #{forward.3} parent=5 // pred_fallthru
      _
  $region6: #{forward.3} parent=0 // loop_footer
    %s19 = sadd.s32 1, %s15
  $region7: #{forward.3} parent=0 // loop_footer_branch
    %14 = sbr.rel target = $region3
  $region8: #{forward.3} parent=0 // loop_exit
    _

// kernel: forward.4
$region0: #{forward.4}
  #allocation0 [shape = 'u32[]', space=smem, size = 0x4, offset = 0x4, fixed_abs, tag = 'smem constant byte address 0x4 - core index']
  #allocation1 [shape = 'u32[144,128]{1,0:T(1,128)}', space=vmem, size = 0x12000, scoped, tag = 'internal scratch']
  #allocation2 [shape = 'f32[128,128]{1,0:T(8,128)}', space=vmem, size = 0x10000, scoped, tag = 'scratch operand']
  %s0 = inlined_call_operand.vmem [shape: bf16[256,256], index: 0, kind: input, shape index: {}]
  %s1 = inlined_call_operand.vmem [shape: bf16[256,128], index: 1, kind: input, shape index: {}]
  %s2 = inlined_call_operand.vmem [shape: f32[256,1], index: 2, kind: input, shape index: {}]
  %s3 = inlined_call_operand.vmem [shape: bf16[128,128], index: 3, kind: input, shape index: {}]
  %s4 = inlined_call_operand.vmem [shape: f32[1,128], index: 4, kind: input, shape index: {}]
  %s5 = inlined_call_operand.vmem [shape: bf16[128,128], index: 5, kind: input, shape index: {}]
  %s6 = inlined_call_operand.vmem [shape: f32[1,128], index: 6, kind: input, shape index: {}]
  %s7 = inlined_call_operand.vmem [shape: f32[16,128], index: 7, kind: output, shape index: {}]
  %s8 = sld [smem:[#allocation0]]
  $region69: #{forward.4} parent=0
    _
  %s10 = ssub.s32 1, %s8
  %s11 = scalar_select 0, %s10, %s8
  loop: start=0, step=1, limit=4
  $region2: #{forward.4} parent=0 // loop_pre_header
    _
  $region3: #{forward.4} parent=0 // loop_header
    %s13 = sphi 0, %s17
    %p14 = scmp.ge.s32.totalorder %s13, 4
    %s20 = sphi 0, %s32
    %s21 = sphi 0, %s28
    %s22 = sphi 0, %s20
    %s23 = sphi 0, %s21
    %s24 = sphi 0, %s22
    %s25 = sphi 0, %s23
    %s37 = sphi 0, %s39
    %s40 = sphi 0, %s37
    %s41 = sphi 0, %s40
    %s57 = sphi 0, %s41
    %s63 = sphi 0, %s65
    %s66 = sphi 0, %s63
    %s67 = sphi 0, %s66
    %s83 = sphi 0, %s67
    %s89 = sphi 0, %s91
    %s92 = sphi 0, %s89
    %s93 = sphi 0, %s92
    %s109 = sphi 0, %s93
    %s113 = sphi 0, %s113
    %s115 = sphi 0, %s113
    %s116 = sphi 0, %s115
    %s130 = sphi 0, %s116
    %s134 = sphi 0, %s134
    %s136 = sphi 0, %s134
    %s137 = sphi 0, %s136
    %s151 = sphi 0, %s137
    %s155 = sphi 0, %s155
    %s157 = sphi 0, %s155
    %s158 = sphi 0, %s157
    %s172 = sphi 0, %s158
    %s176 = sphi 0, %s176
    %s178 = sphi 0, %s176
    %s179 = sphi 0, %s178
    %s193 = sphi 0, %s179
    %s199 = sphi 0, %s201
    %s202 = sphi 0, %s199
    %s203 = sphi 0, %s202
    %s219 = sphi 0, %s203
  $region4: #{forward.4} parent=0 // loop_header_branch
    %16 = sbr.rel (%p14) target = $region8
  $region5: #{forward.4} parent=0 // loop_body
    %s18 = ssub.s32 %s13, 1
    %s19 = ssub.s32 %s13, 2
    %s26 = sadd.s32 1, %s21
    %p27 = scmp.ge.s32.totalorder %s26, 1
    %s28 = scalar_select %p27, 0, %s26
    %s29 = sadd.s32 1, %s20
    %s30 = scalar_select %p27, %s29, %s20
    %p31 = scmp.ge.s32.totalorder %s30, 2
    %s32 = scalar_select %p31, 0, %s30
    %s33 = ssub.s32 %s20, %s32
    %s34 = ssub.s32 %s21, %s28
    %s35 = sor.u32 %s33, %s34
    %p36 = scmp.eq.s32.totalorder %s35, 0
    %s38 = sadd.s32 %s37, 1
    %s39 = scalar_select %p36, %s37, %s38
    %p42 = pneg %p36
    %p43 = scmp.eq.s32.totalorder %s13, 1
    %p44 = por %p42, %p43
    %p45 = scmp.ne.s32.totalorder %s37, %s40
    %p46 = scmp.eq.s32.totalorder %s13, 0
    %p47 = por %p45, %p46
    %p48 = scmp.ne.s32.totalorder %s37, %s40
    %p49 = scmp.eq.s32.totalorder %s18, 1
    %p50 = por %p48, %p49
    %p51 = scmp.ne.s32.totalorder %s40, %s41
    %p52 = scmp.eq.s32.totalorder %s18, 0
    %p53 = por %p51, %p52
    %p54 = scmp.ne.s32.totalorder %s40, %s41
    %p55 = scmp.eq.s32.totalorder %s19, 1
    %p56 = por %p54, %p55
    %p58 = scmp.ne.s32.totalorder %s41, %s57
    %p59 = scmp.eq.s32.totalorder %s19, 0
    %p60 = por %p58, %p59
    %s61 = ssub.s32 %s21, %s28
    %p62 = scmp.eq.s32.totalorder %s61, 0
    %s64 = sadd.s32 %s63, 1
    %s65 = scalar_select %p62, %s63, %s64
    %p68 = pneg %p62
    %p69 = scmp.eq.s32.totalorder %s13, 1
    %p70 = por %p68, %p69
    %p71 = scmp.ne.s32.totalorder %s63, %s66
    %p72 = scmp.eq.s32.totalorder %s13, 0
    %p73 = por %p71, %p72
    %p74 = scmp.ne.s32.totalorder %s63, %s66
    %p75 = scmp.eq.s32.totalorder %s18, 1
    %p76 = por %p74, %p75
    %p77 = scmp.ne.s32.totalorder %s66, %s67
    %p78 = scmp.eq.s32.totalorder %s18, 0
    %p79 = por %p77, %p78
    %p80 = scmp.ne.s32.totalorder %s66, %s67
    %p81 = scmp.eq.s32.totalorder %s19, 1
    %p82 = por %p80, %p81
    %p84 = scmp.ne.s32.totalorder %s67, %s83
    %p85 = scmp.eq.s32.totalorder %s19, 0
    %p86 = por %p84, %p85
    %s87 = ssub.s32 %s20, %s32
    %p88 = scmp.eq.s32.totalorder %s87, 0
    %s90 = sadd.s32 %s89, 1
    %s91 = scalar_select %p88, %s89, %s90
    %p94 = pneg %p88
    %p95 = scmp.eq.s32.totalorder %s13, 1
    %p96 = por %p94, %p95
    %p97 = scmp.ne.s32.totalorder %s89, %s92
    %p98 = scmp.eq.s32.totalorder %s13, 0
    %p99 = por %p97, %p98
    %p100 = scmp.ne.s32.totalorder %s89, %s92
    %p101 = scmp.eq.s32.totalorder %s18, 1
    %p102 = por %p100, %p101
    %p103 = scmp.ne.s32.totalorder %s92, %s93
    %p104 = scmp.eq.s32.totalorder %s18, 0
    %p105 = por %p103, %p104
    %p106 = scmp.ne.s32.totalorder %s92, %s93
    %p107 = scmp.eq.s32.totalorder %s19, 1
    %p108 = por %p106, %p107
    %p110 = scmp.ne.s32.totalorder %s93, %s109
    %p111 = scmp.eq.s32.totalorder %s19, 0
    %p112 = por %p110, %p111
    %s114 = sadd.s32 %s113, 1
    %p117 = scmp.eq.s32.totalorder %s13, 1
    %p118 = scmp.ne.s32.totalorder %s113, %s115
    %p119 = scmp.eq.s32.totalorder %s13, 0
    %p120 = por %p118, %p119
    %p121 = scmp.ne.s32.totalorder %s113, %s115
    %p122 = scmp.eq.s32.totalorder %s18, 1
    %p123 = por %p121, %p122
    %p124 = scmp.ne.s32.totalorder %s115, %s116
    %p125 = scmp.eq.s32.totalorder %s18, 0
    %p126 = por %p124, %p125
    %p127 = scmp.ne.s32.totalorder %s115, %s116
    %p128 = scmp.eq.s32.totalorder %s19, 1
    %p129 = por %p127, %p128
    %p131 = scmp.ne.s32.totalorder %s116, %s130
    %p132 = scmp.eq.s32.totalorder %s19, 0
    %p133 = por %p131, %p132
    %s135 = sadd.s32 %s134, 1
    %p138 = scmp.eq.s32.totalorder %s13, 1
    %p139 = scmp.ne.s32.totalorder %s134, %s136
    %p140 = scmp.eq.s32.totalorder %s13, 0
    %p141 = por %p139, %p140
    %p142 = scmp.ne.s32.totalorder %s134, %s136
    %p143 = scmp.eq.s32.totalorder %s18, 1
    %p144 = por %p142, %p143
    %p145 = scmp.ne.s32.totalorder %s136, %s137
    %p146 = scmp.eq.s32.totalorder %s18, 0
    %p147 = por %p145, %p146
    %p148 = scmp.ne.s32.totalorder %s136, %s137
    %p149 = scmp.eq.s32.totalorder %s19, 1
    %p150 = por %p148, %p149
    %p152 = scmp.ne.s32.totalorder %s137, %s151
    %p153 = scmp.eq.s32.totalorder %s19, 0
    %p154 = por %p152, %p153
    %s156 = sadd.s32 %s155, 1
    %p159 = scmp.eq.s32.totalorder %s13, 1
    %p160 = scmp.ne.s32.totalorder %s155, %s157
    %p161 = scmp.eq.s32.totalorder %s13, 0
    %p162 = por %p160, %p161
    %p163 = scmp.ne.s32.totalorder %s155, %s157
    %p164 = scmp.eq.s32.totalorder %s18, 1
    %p165 = por %p163, %p164
    %p166 = scmp.ne.s32.totalorder %s157, %s158
    %p167 = scmp.eq.s32.totalorder %s18, 0
    %p168 = por %p166, %p167
    %p169 = scmp.ne.s32.totalorder %s157, %s158
    %p170 = scmp.eq.s32.totalorder %s19, 1
    %p171 = por %p169, %p170
    %p173 = scmp.ne.s32.totalorder %s158, %s172
    %p174 = scmp.eq.s32.totalorder %s19, 0
    %p175 = por %p173, %p174
    %s177 = sadd.s32 %s176, 1
    %p180 = scmp.eq.s32.totalorder %s13, 1
    %p181 = scmp.ne.s32.totalorder %s176, %s178
    %p182 = scmp.eq.s32.totalorder %s13, 0
    %p183 = por %p181, %p182
    %p184 = scmp.ne.s32.totalorder %s176, %s178
    %p185 = scmp.eq.s32.totalorder %s18, 1
    %p186 = por %p184, %p185
    %p187 = scmp.ne.s32.totalorder %s178, %s179
    %p188 = scmp.eq.s32.totalorder %s18, 0
    %p189 = por %p187, %p188
    %p190 = scmp.ne.s32.totalorder %s178, %s179
    %p191 = scmp.eq.s32.totalorder %s19, 1
    %p192 = por %p190, %p191
    %p194 = scmp.ne.s32.totalorder %s179, %s193
    %p195 = scmp.eq.s32.totalorder %s19, 0
    %p196 = por %p194, %p195
    %s197 = ssub.s32 %s20, %s32
    %p198 = scmp.eq.s32.totalorder %s197, 0
    %s200 = sadd.s32 %s199, 1
    %s201 = scalar_select %p198, %s199, %s200
    %p204 = pneg %p198
    %p205 = scmp.eq.s32.totalorder %s13, 1
    %p206 = por %p204, %p205
    %p207 = scmp.ne.s32.totalorder %s199, %s202
    %p208 = scmp.eq.s32.totalorder %s13, 0
    %p209 = por %p207, %p208
    %p210 = scmp.ne.s32.totalorder %s199, %s202
    %p211 = scmp.eq.s32.totalorder %s18, 1
    %p212 = por %p210, %p211
    %p213 = scmp.ne.s32.totalorder %s202, %s203
    %p214 = scmp.eq.s32.totalorder %s18, 0
    %p215 = por %p213, %p214
    %p216 = scmp.ne.s32.totalorder %s202, %s203
    %p217 = scmp.eq.s32.totalorder %s19, 1
    %p218 = por %p216, %p217
    %p220 = scmp.ne.s32.totalorder %s203, %s219
    %p221 = scmp.eq.s32.totalorder %s19, 0
    %p222 = por %p220, %p221
    %p223 = scmp.le.s32.totalorder 1, %s13
    %p224 = scmp.lt.s32.totalorder %s13, 3
    %p225 = pnand %p223, %p224
    %p226 = pneg %p225
    // Predicated region
    $region9: #{forward.4} parent=5 // pred_check
      _
    $region10: #{forward.4} parent=5 // pred_check_branch
      %228 = sbr.rel (%p225) target = $region12
    $region11: #{forward.4} parent=5 // pred_region
      %s229 = ssub.s32 %s13, 1
      // Predicated region
      $region13: #{forward.4} parent=11 // pred_check
        %p230 = pneg %p79
      $region14: #{forward.4} parent=11 // pred_check_branch
        %232 = sbr.rel (%p230) target = $region16
      $region15: #{forward.4} parent=11 // pred_region
        %s233 = smul.u32 32, %s23
        %p234 = scmp.lt.s32.totalorder %s233, 31
        %s235 = scalar_select %p234, %s233, 31
        %s236 = smul.addr %s235, 4
        %s237 = scalar_lea.vmem %s1, %s236
        %s238 = smul.u32 32, %s23
      $region16: #{forward.4} parent=11 // pred_fallthru
        _
      // Predicated region
      $region17: #{forward.4} parent=11 // pred_check
        %p239 = pneg %p126
      $region18: #{forward.4} parent=11 // pred_check_branch
        %241 = sbr.rel (%p239) target = $region20
      $region19: #{forward.4} parent=11 // pred_region
        _
      $region20: #{forward.4} parent=11 // pred_fallthru
        _
      // Predicated region
      $region21: #{forward.4} parent=11 // pred_check
        %p242 = pneg %p147
      $region22: #{forward.4} parent=11 // pred_check_branch
        %244 = sbr.rel (%p242) target = $region24
      $region23: #{forward.4} parent=11 // pred_region
        _
      $region24: #{forward.4} parent=11 // pred_fallthru
        _
      // Predicated region
      $region25: #{forward.4} parent=11 // pred_check
        %p245 = pneg %p168
      $region26: #{forward.4} parent=11 // pred_check_branch
        %247 = sbr.rel (%p245) target = $region28
      $region27: #{forward.4} parent=11 // pred_region
        _
      $region28: #{forward.4} parent=11 // pred_fallthru
        _
      // Predicated region
      $region29: #{forward.4} parent=11 // pred_check
        %p248 = pneg %p189
      $region30: #{forward.4} parent=11 // pred_check_branch
        %250 = sbr.rel (%p248) target = $region32
      $region31: #{forward.4} parent=11 // pred_region
        _
      $region32: #{forward.4} parent=11 // pred_fallthru
        _
    $region12: #{forward.4} parent=5 // pred_fallthru
      _
    %p251 = scmp.lt.s32.totalorder %s13, 2
    // Predicated region
    $region33: #{forward.4} parent=5 // pred_check
      %p252 = pneg %p251
    $region34: #{forward.4} parent=5 // pred_check_branch
      %254 = sbr.rel (%p252) target = $region36
    $region35: #{forward.4} parent=5 // pred_region
      // Predicated region
      $region37: #{forward.4} parent=35 // pred_check
        %p255 = pneg %p47
      $region38: #{forward.4} parent=35 // pred_check_branch
        %257 = sbr.rel (%p255) target = $region40
      $region39: #{forward.4} parent=35 // pred_region
        %s258 = smul.u32 16, %s20
        %s259 = smul.u32 2, %s21
        %p260 = scmp.lt.s32.totalorder %s258, 31
        %s261 = scalar_select %p260, %s258, 31
        %p262 = scmp.lt.s32.totalorder %s259, 1
        %s263 = scalar_select %p262, %s259, 1
        %s264 = smul.addr %s261, 2
        %s265 = sadd.s32 %s263, %s264
        %s266 = smul.addr %s265, 4
        %s267 = scalar_lea.vmem %s0, %s266
        %s268 = smul.u32 16, %s20
        %s269 = smul.u32 2, %s21
      $region40: #{forward.4} parent=35 // pred_fallthru
        _
      // Predicated region
      $region41: #{forward.4} parent=35 // pred_check
        %p270 = pneg %p99
      $region42: #{forward.4} parent=35 // pred_check_branch
        %272 = sbr.rel (%p270) target = $region44
      $region43: #{forward.4} parent=35 // pred_region
        %s273 = smul.u32 16, %s20
        %p274 = scmp.lt.s32.totalorder %s273, 31
        %s275 = scalar_select %p274, %s273, 31
        %s276 = smul.addr %s275, 8
        %s277 = scalar_lea.vmem %s2, %s276
        %s278 = smul.u32 16, %s20
      $region44: #{forward.4} parent=35 // pred_fallthru
        _
    $region36: #{forward.4} parent=5 // pred_fallthru
      _
    %p279 = scmp.le.s32.totalorder 1, %s13
    %p280 = scmp.lt.s32.totalorder %s13, 3
    %p281 = pnand %p279, %p280
    %p282 = pneg %p281
    // Predicated region
    $region45: #{forward.4} parent=5 // pred_check
      _
    $region46: #{forward.4} parent=5 // pred_check_branch
      %284 = sbr.rel (%p281) target = $region48
    $region47: #{forward.4} parent=5 // pred_region
      %s285 = ssub.s32 %s13, 1
      %s286 = smul.u32 16, %s22
      %s287 = smul.u32 2, %s23
      %p288 = scmp.lt.s32.totalorder %s286, 31
      %s289 = scalar_select %p288, %s286, 31
      %p290 = scmp.lt.s32.totalorder %s287, 1
      %s291 = scalar_select %p290, %s287, 1
      %s292 = smul.addr %s289, 2
      %s293 = sadd.s32 %s291, %s292
      %s294 = smul.addr %s293, 4
      %s295 = scalar_lea.vmem %s0, %s294
      %p296 = pneg %p53
      %p297 = pneg %p50
      %s298 = smul.u32 32, %s23
      %p299 = scmp.lt.s32.totalorder %s298, 31
      %s300 = scalar_select %p299, %s298, 31
      %s301 = smul.addr %s300, 4
      %s302 = scalar_lea.vmem %s1, %s301
      %p303 = pneg %p79
      %p304 = pneg %p76
      %s305 = smul.u32 16, %s22
      %p306 = scmp.lt.s32.totalorder %s305, 31
      %s307 = scalar_select %p306, %s305, 31
      %s308 = smul.addr %s307, 8
      %s309 = scalar_lea.vmem %s2, %s308
      %p310 = pneg %p105
      %p311 = pneg %p102
      %p312 = pneg %p126
      %p313 = pneg %p123
      %p314 = pneg %p147
      %p315 = pneg %p144
      %p316 = pneg %p168
      %p317 = pneg %p165
      %p318 = pneg %p189
      %p319 = pneg %p186
      %p320 = pneg %p215
      %p321 = pneg %p212
      %p322 = scmp.lt.s32.totalorder %s22, 1
      %s323 = scalar_select %p322, %s22, 1
      %s324 = smul.addr %s323, 8
      %s325 = scalar_lea.vmem %s7, %s324
      %s326 = smul.u32 16, %s22
      %s327 = smul.u32 2, %s23
      %p328 = scmp.lt.s32.totalorder %s326, 31
      %s329 = scalar_select %p328, %s326, 31
      %p330 = scmp.lt.s32.totalorder %s327, 1
      %s331 = scalar_select %p330, %s327, 1
      %s332 = smul.addr %s329, 2
      %s333 = sadd.s32 %s331, %s332
      %s334 = smul.addr %s333, 4
      %s335 = scalar_lea.vmem %s0, %s334
      %s336 = smul.u32 16, %s22
      %s337 = smul.u32 2, %s23
      %s338 = smul.u32 32, %s23
      %p339 = scmp.lt.s32.totalorder %s338, 31
      %s340 = scalar_select %p339, %s338, 31
      %s341 = smul.addr %s340, 4
      %s342 = scalar_lea.vmem %s1, %s341
      %s343 = smul.u32 32, %s23
      %s344 = smul.u32 16, %s22
      %p345 = scmp.lt.s32.totalorder %s344, 31
      %s346 = scalar_select %p345, %s344, 31
      %s347 = smul.addr %s346, 8
      %s348 = scalar_lea.vmem %s2, %s347
      %s349 = smul.u32 16, %s22
      %p350 = scmp.lt.s32.totalorder %s22, 1
      %s351 = scalar_select %p350, %s22, 1
      %s352 = smul.addr %s351, 8
      %s353 = scalar_lea.vmem %s7, %s352
      %p355 = scmp.eq.s32.totalorder %s23, 0
      // Predicated region
      $region49: #{forward.4} parent=47 // pred_check
        %p356 = pneg %p355
      $region50: #{forward.4} parent=47 // pred_check_branch
        %358 = sbr.rel (%p356) target = $region52
      $region51: #{forward.4} parent=47 // pred_region
        %359 = vst [vmem:[#allocation2] sm:$0xff] 0.0
        %360 = vst [vmem:[#allocation2 + $0x8] sm:$0xff] 0.0
        %361 = vst [vmem:[#allocation2 + $0x10] sm:$0xff] 0.0
        %362 = vst [vmem:[#allocation2 + $0x18] sm:$0xff] 0.0
        %363 = vst [vmem:[#allocation2 + $0x20] sm:$0xff] 0.0
        %364 = vst [vmem:[#allocation2 + $0x28] sm:$0xff] 0.0
        %365 = vst [vmem:[#allocation2 + $0x30] sm:$0xff] 0.0
        %366 = vst [vmem:[#allocation2 + $0x38] sm:$0xff] 0.0
        %367 = vst [vmem:[#allocation2 + $0x40] sm:$0xff] 0.0
        %368 = vst [vmem:[#allocation2 + $0x48] sm:$0xff] 0.0
        %369 = vst [vmem:[#allocation2 + $0x50] sm:$0xff] 0.0
        %370 = vst [vmem:[#allocation2 + $0x58] sm:$0xff] 0.0
        %371 = vst [vmem:[#allocation2 + $0x60] sm:$0xff] 0.0
        %372 = vst [vmem:[#allocation2 + $0x68] sm:$0xff] 0.0
        %373 = vst [vmem:[#allocation2 + $0x70] sm:$0xff] 0.0
        %374 = vst [vmem:[#allocation2 + $0x78] sm:$0xff] 0.0
        %375 = vst [vmem:[%s353] sm:$0xff] 0.0
      $region52: #{forward.4} parent=47 // pred_fallthru
        _
      %v376 = vld [vmem:[#allocation2] sm:$0xff]
      %v377 = vld [vmem:[#allocation2 + $0x8] sm:$0xff]
      %v378 = vld [vmem:[#allocation2 + $0x10] sm:$0xff]
      %v379 = vld [vmem:[#allocation2 + $0x18] sm:$0xff]
      %v380 = vld [vmem:[#allocation2 + $0x20] sm:$0xff]
      %v381 = vld [vmem:[#allocation2 + $0x28] sm:$0xff]
      %v382 = vld [vmem:[#allocation2 + $0x30] sm:$0xff]
      %v383 = vld [vmem:[#allocation2 + $0x38] sm:$0xff]
      %v384 = vld [vmem:[#allocation2 + $0x40] sm:$0xff]
      %v385 = vld [vmem:[#allocation2 + $0x48] sm:$0xff]
      %v386 = vld [vmem:[#allocation2 + $0x50] sm:$0xff]
      %v387 = vld [vmem:[#allocation2 + $0x58] sm:$0xff]
      %v388 = vld [vmem:[#allocation2 + $0x60] sm:$0xff]
      %v389 = vld [vmem:[#allocation2 + $0x68] sm:$0xff]
      %v390 = vld [vmem:[#allocation2 + $0x70] sm:$0xff]
      %v391 = vld [vmem:[#allocation2 + $0x78] sm:$0xff]
      %v392 = vld [vmem:[%s335] sm:$0xff]
      %v393 = vld [vmem:[%s335 + $0x8] sm:$0xff]
      %v394 = vld [vmem:[%s335 + $0x10] sm:$0xff]
      %v395 = vld [vmem:[%s335 + $0x18] sm:$0xff]
      %v396 = vld [vmem:[%s335 + $0x20] sm:$0xff]
      %v397 = vld [vmem:[%s335 + $0x28] sm:$0xff]
      %v398 = vld [vmem:[%s335 + $0x30] sm:$0xff]
      %v399 = vld [vmem:[%s335 + $0x38] sm:$0xff]
      %v400 = vld [vmem:[%s335 + $0x40] sm:$0xff]
      %v401 = vld [vmem:[%s335 + $0x48] sm:$0xff]
      %v402 = vld [vmem:[%s335 + $0x50] sm:$0xff]
      %v403 = vld [vmem:[%s335 + $0x58] sm:$0xff]
      %v404 = vld [vmem:[%s335 + $0x60] sm:$0xff]
      %v405 = vld [vmem:[%s335 + $0x68] sm:$0xff]
      %v406 = vld [vmem:[%s335 + $0x70] sm:$0xff]
      %v407 = vld [vmem:[%s335 + $0x78] sm:$0xff]
      %v408 = vld [vmem:[%s342] sm:$0xf]
      %v409 = vld [vmem:[%s342 + $0x4] sm:$0xf]
      %v410 = vld [vmem:[%s342 + $0x8] sm:$0xf]
      %v411 = vld [vmem:[%s342 + $0xc] sm:$0xf]
      %v412 = vld [vmem:[%s342 + $0x10] sm:$0xf]
      %v413 = vld [vmem:[%s342 + $0x14] sm:$0xf]
      %v414 = vld [vmem:[%s342 + $0x18] sm:$0xf]
      %v415 = vld [vmem:[%s342 + $0x1c] sm:$0xf]
      %v416 = vld [vmem:[%s342 + $0x20] sm:$0xf]
      %v417 = vld [vmem:[%s342 + $0x24] sm:$0xf]
      %v418 = vld [vmem:[%s342 + $0x28] sm:$0xf]
      %v419 = vld [vmem:[%s342 + $0x2c] sm:$0xf]
      %v420 = vld [vmem:[%s342 + $0x30] sm:$0xf]
      %v421 = vld [vmem:[%s342 + $0x34] sm:$0xf]
      %v422 = vld [vmem:[%s342 + $0x38] sm:$0xf]
      %v423 = vld [vmem:[%s342 + $0x3c] sm:$0xf]
      %v424 = vld [vmem:[%s342 + $0x40] sm:$0xf]
      %v425 = vld [vmem:[%s342 + $0x44] sm:$0xf]
      %v426 = vld [vmem:[%s342 + $0x48] sm:$0xf]
      %v427 = vld [vmem:[%s342 + $0x4c] sm:$0xf]
      %v428 = vld [vmem:[%s342 + $0x50] sm:$0xf]
      %v429 = vld [vmem:[%s342 + $0x54] sm:$0xf]
      %v430 = vld [vmem:[%s342 + $0x58] sm:$0xf]
      %v431 = vld [vmem:[%s342 + $0x5c] sm:$0xf]
      %v432 = vld [vmem:[%s342 + $0x60] sm:$0xf]
      %v433 = vld [vmem:[%s342 + $0x64] sm:$0xf]
      %v434 = vld [vmem:[%s342 + $0x68] sm:$0xf]
      %v435 = vld [vmem:[%s342 + $0x6c] sm:$0xf]
      %v436 = vld [vmem:[%s342 + $0x70] sm:$0xf]
      %v437 = vld [vmem:[%s342 + $0x74] sm:$0xf]
      %v438 = vld [vmem:[%s342 + $0x78] sm:$0xf]
      %v439 = vld [vmem:[%s342 + $0x7c] sm:$0xf]
      %v456 = vunpack.c.l.b16 %v392
      %v457 = vunpack.c.h.b16 %v392
      %v458 = vunpack.c.l.b16 %v393
      %v459 = vunpack.c.h.b16 %v393
      %v460 = vunpack.c.l.b16 %v394
      %v461 = vunpack.c.h.b16 %v394
      %v462 = vunpack.c.l.b16 %v395
      %v463 = vunpack.c.h.b16 %v395
      %v464 = vunpack.c.l.b16 %v396
      %v465 = vunpack.c.h.b16 %v396
      %v466 = vunpack.c.l.b16 %v397
      %v467 = vunpack.c.h.b16 %v397
      %v468 = vunpack.c.l.b16 %v398
      %v469 = vunpack.c.h.b16 %v398
      %v470 = vunpack.c.l.b16 %v399
      %v471 = vunpack.c.h.b16 %v399
      %v472 = vunpack.c.l.b16 %v400
      %v473 = vunpack.c.h.b16 %v400
      %v474 = vunpack.c.l.b16 %v401
      %v475 = vunpack.c.h.b16 %v401
      %v476 = vunpack.c.l.b16 %v402
      %v477 = vunpack.c.h.b16 %v402
      %v478 = vunpack.c.l.b16 %v403
      %v479 = vunpack.c.h.b16 %v403
      %v480 = vunpack.c.l.b16 %v404
      %v481 = vunpack.c.h.b16 %v404
      %v482 = vunpack.c.l.b16 %v405
      %v483 = vunpack.c.h.b16 %v405
      %v484 = vunpack.c.l.b16 %v406
      %v485 = vunpack.c.h.b16 %v406
      %v486 = vunpack.c.l.b16 %v407
      %v487 = vunpack.c.h.b16 %v407
      %v488 = vpack.c.b16 %v458, %v456
      %v489 = vpack.c.b16 %v459, %v457
      %v490 = vpack.c.b16 %v462, %v460
      %v491 = vpack.c.b16 %v463, %v461
      %v492 = vpack.c.b16 %v466, %v464
      %v493 = vpack.c.b16 %v467, %v465
      %v494 = vpack.c.b16 %v470, %v468
      %v495 = vpack.c.b16 %v471, %v469
      %v496 = vpack.c.b16 %v474, %v472
      %v497 = vpack.c.b16 %v475, %v473
      %v498 = vpack.c.b16 %v478, %v476
      %v499 = vpack.c.b16 %v479, %v477
      %v500 = vpack.c.b16 %v482, %v480
      %v501 = vpack.c.b16 %v483, %v481
      %v502 = vpack.c.b16 %v486, %v484
      %v503 = vpack.c.b16 %v487, %v485
      %v552 = vunpack.c.l.b16 %v408
      %v553 = vunpack.c.l.b16 %v409
      %v554 = vunpack.c.l.b16 %v410
      %v555 = vunpack.c.l.b16 %v411
      %v556 = vunpack.c.l.b16 %v412
      %v557 = vunpack.c.l.b16 %v413
      %v558 = vunpack.c.l.b16 %v414
      %v559 = vunpack.c.l.b16 %v415
      %v560 = vunpack.c.l.b16 %v416
      %v561 = vunpack.c.l.b16 %v417
      %v562 = vunpack.c.l.b16 %v418
      %v563 = vunpack.c.l.b16 %v419
      %v564 = vunpack.c.l.b16 %v420
      %v565 = vunpack.c.l.b16 %v421
      %v566 = vunpack.c.l.b16 %v422
      %v567 = vunpack.c.l.b16 %v423
      %v568 = vunpack.c.l.b16 %v424
      %v569 = vunpack.c.l.b16 %v425
      %v570 = vunpack.c.l.b16 %v426
      %v571 = vunpack.c.l.b16 %v427
      %v572 = vunpack.c.l.b16 %v428
      %v573 = vunpack.c.l.b16 %v429
      %v574 = vunpack.c.l.b16 %v430
      %v575 = vunpack.c.l.b16 %v431
      %v576 = vunpack.c.l.b16 %v432
      %v577 = vunpack.c.l.b16 %v433
      %v578 = vunpack.c.l.b16 %v434
      %v579 = vunpack.c.l.b16 %v435
      %v580 = vunpack.c.l.b16 %v436
      %v581 = vunpack.c.l.b16 %v437
      %v582 = vunpack.c.l.b16 %v438
      %v583 = vunpack.c.l.b16 %v439
      %v584 = vpack.c.b16 %v553, %v552
      %v585 = vpack.c.b16 %v555, %v554
      %v586 = vpack.c.b16 %v557, %v556
      %v587 = vpack.c.b16 %v559, %v558
      %v588 = vpack.c.b16 %v561, %v560
      %v589 = vpack.c.b16 %v563, %v562
      %v590 = vpack.c.b16 %v565, %v564
      %v591 = vpack.c.b16 %v567, %v566
      %v592 = vpack.c.b16 %v569, %v568
      %v593 = vpack.c.b16 %v571, %v570
      %v594 = vpack.c.b16 %v573, %v572
      %v595 = vpack.c.b16 %v575, %v574
      %v596 = vpack.c.b16 %v577, %v576
      %v597 = vpack.c.b16 %v579, %v578
      %v598 = vpack.c.b16 %v581, %v580
      %v599 = vpack.c.b16 %v583, %v582
      %616 = vmatprep.subr.bf16.mxu0 0
      %617 = vmatpush1.bf16.msra.mxu0 %v591
      %618 = vmatprep.subr.bf16.mxu0 0
      %619 = vmatpush1.bf16.msra.mxu0 %v590
      %620 = vmatprep.subr.bf16.mxu0 0
      %621 = vmatpush1.bf16.msra.mxu0 %v589
      %622 = vmatprep.subr.bf16.mxu0 0
      %623 = vmatpush1.bf16.msra.mxu0 %v588
      %624 = vmatprep.subr.bf16.mxu0 0
      %625 = vmatpush1.bf16.msra.mxu0 %v587
      %626 = vmatprep.subr.bf16.mxu0 0
      %627 = vmatpush1.bf16.msra.mxu0 %v586
      %628 = vmatprep.subr.bf16.mxu0 0
      %629 = vmatpush1.bf16.msra.mxu0 %v585
      %630 = vmatprep.subr.bf16.mxu0 0
      %631 = vmatpush1.bf16.msra.mxu0 %v584
      %632 = vmatprep.subr.bf16.mxu0 0
      %633 = vmatpush2.bf16.msra.mxu0 %v599
      %634 = vmatprep.subr.bf16.mxu0 0
      %635 = vmatpush2.bf16.msra.mxu0 %v598
      %636 = vmatprep.subr.bf16.mxu0 0
      %637 = vmatpush2.bf16.msra.mxu0 %v597
      %638 = vmatprep.subr.bf16.mxu0 0
      %639 = vmatpush2.bf16.msra.mxu0 %v596
      %640 = vmatprep.subr.bf16.mxu0 0
      %641 = vmatpush2.bf16.msra.mxu0 %v595
      %642 = vmatprep.subr.bf16.mxu0 0
      %643 = vmatpush2.bf16.msra.mxu0 %v594
      %644 = vmatprep.subr.bf16.mxu0 0
      %645 = vmatpush2.bf16.msra.mxu0 %v593
      %646 = vmatprep.subr.bf16.mxu0 0
      %647 = vmatpush2.bf16.msra.mxu0 %v592
      %648 = vmatprep.mubr.bf16.mxu0 %v489
      %649 = vmatmul.mubr.bf16.gmra.mxu0 %v488
      %v650 = vpop.f32.mrf.mxu0
      %v651 = vadd.f32 0.0, %v650
      %v652 = vpop.f32.mrf.mxu0
      %v653 = vpop.f32.mrf.mxu0
      %v654 = vadd.f32 0.0, %v653
      %v655 = vpop.f32.mrf.mxu0
      %656 = vmatprep.mubr.bf16.mxu0 %v491
      %657 = vmatmul.mubr.bf16.gmra.mxu0 %v490
      %v658 = vpop.f32.mrf.mxu0
      %v659 = vadd.f32 0.0, %v658
      %v660 = vpop.f32.mrf.mxu0
      %v661 = vpop.f32.mrf.mxu0
      %v662 = vadd.f32 0.0, %v661
      %v663 = vpop.f32.mrf.mxu0
      %664 = vmatprep.mubr.bf16.mxu0 %v493
      %665 = vmatmul.mubr.bf16.gmra.mxu0 %v492
      %v666 = vpop.f32.mrf.mxu0
      %v667 = vadd.f32 0.0, %v666
      %v668 = vpop.f32.mrf.mxu0
      %v669 = vpop.f32.mrf.mxu0
      %v670 = vadd.f32 0.0, %v669
      %v671 = vpop.f32.mrf.mxu0
      %672 = vmatprep.mubr.bf16.mxu0 %v495
      %673 = vmatmul.mubr.bf16.gmra.mxu0 %v494
      %v674 = vpop.f32.mrf.mxu0
      %v675 = vadd.f32 0.0, %v674
      %v676 = vpop.f32.mrf.mxu0
      %v677 = vpop.f32.mrf.mxu0
      %v678 = vadd.f32 0.0, %v677
      %v679 = vpop.f32.mrf.mxu0
      %680 = vmatprep.mubr.bf16.mxu0 %v497
      %681 = vmatmul.mubr.bf16.gmra.mxu0 %v496
      %v682 = vpop.f32.mrf.mxu0
      %v683 = vadd.f32 0.0, %v682
      %v684 = vpop.f32.mrf.mxu0
      %v685 = vpop.f32.mrf.mxu0
      %v686 = vadd.f32 0.0, %v685
      %v687 = vpop.f32.mrf.mxu0
      %688 = vmatprep.mubr.bf16.mxu0 %v499
      %689 = vmatmul.mubr.bf16.gmra.mxu0 %v498
      %v690 = vpop.f32.mrf.mxu0
      %v691 = vadd.f32 0.0, %v690
      %v692 = vpop.f32.mrf.mxu0
      %v693 = vpop.f32.mrf.mxu0
      %v694 = vadd.f32 0.0, %v693
      %v695 = vpop.f32.mrf.mxu0
      %696 = vmatprep.mubr.bf16.mxu0 %v501
      %697 = vmatmul.mubr.bf16.gmra.mxu0 %v500
      %v698 = vpop.f32.mrf.mxu0
      %v699 = vadd.f32 0.0, %v698
      %v700 = vpop.f32.mrf.mxu0
      %v701 = vpop.f32.mrf.mxu0
      %v702 = vadd.f32 0.0, %v701
      %v703 = vpop.f32.mrf.mxu0
      %704 = vmatprep.mubr.bf16.mxu0 %v503
      %705 = vmatmul.mubr.bf16.gmra.mxu0 %v502
      %v706 = vpop.f32.mrf.mxu0
      %v707 = vadd.f32 0.0, %v706
      %v708 = vpop.f32.mrf.mxu0
      %v709 = vpop.f32.mrf.mxu0
      %v710 = vadd.f32 0.0, %v709
      %v711 = vpop.f32.mrf.mxu0
      %712 = vdwg.mxu0
      %v713 = vadd.f32 %v376, %v651
      %v714 = vadd.f32 %v377, %v654
      %v715 = vadd.f32 %v378, %v659
      %v716 = vadd.f32 %v379, %v662
      %v717 = vadd.f32 %v380, %v667
      %v718 = vadd.f32 %v381, %v670
      %v719 = vadd.f32 %v382, %v675
      %v720 = vadd.f32 %v383, %v678
      %v721 = vadd.f32 %v384, %v683
      %v722 = vadd.f32 %v385, %v686
      %v723 = vadd.f32 %v386, %v691
      %v724 = vadd.f32 %v387, %v694
      %v725 = vadd.f32 %v388, %v699
      %v726 = vadd.f32 %v389, %v702
      %v727 = vadd.f32 %v390, %v707
      %v728 = vadd.f32 %v391, %v710
      %729 = vst [vmem:[#allocation2] sm:$0xff] %v713
      %730 = vst [vmem:[#allocation2 + $0x8] sm:$0xff] %v714
      %731 = vst [vmem:[#allocation2 + $0x10] sm:$0xff] %v715
      %732 = vst [vmem:[#allocation2 + $0x18] sm:$0xff] %v716
      %733 = vst [vmem:[#allocation2 + $0x20] sm:$0xff] %v717
      %734 = vst [vmem:[#allocation2 + $0x28] sm:$0xff] %v718
      %735 = vst [vmem:[#allocation2 + $0x30] sm:$0xff] %v719
      %736 = vst [vmem:[#allocation2 + $0x38] sm:$0xff] %v720
      %737 = vst [vmem:[#allocation2 + $0x40] sm:$0xff] %v721
      %738 = vst [vmem:[#allocation2 + $0x48] sm:$0xff] %v722
      %739 = vst [vmem:[#allocation2 + $0x50] sm:$0xff] %v723
      %740 = vst [vmem:[#allocation2 + $0x58] sm:$0xff] %v724
      %741 = vst [vmem:[#allocation2 + $0x60] sm:$0xff] %v725
      %742 = vst [vmem:[#allocation2 + $0x68] sm:$0xff] %v726
      %743 = vst [vmem:[#allocation2 + $0x70] sm:$0xff] %v727
      %744 = vst [vmem:[#allocation2 + $0x78] sm:$0xff] %v728
      // Predicated region
      $region53: #{forward.4} parent=47 // pred_check
        %p745 = pneg %p355
      $region54: #{forward.4} parent=47 // pred_check_branch
        %747 = sbr.rel (%p745) target = $region56
      $region55: #{forward.4} parent=47 // pred_region
        %v748 = vld [vmem:[#allocation2] sm:$0xff]
        %v749 = vld [vmem:[#allocation2 + $0x8] sm:$0xff]
        %v750 = vld [vmem:[#allocation2 + $0x10] sm:$0xff]
        %v751 = vld [vmem:[#allocation2 + $0x18] sm:$0xff]
        %v752 = vld [vmem:[#allocation2 + $0x20] sm:$0xff]
        %v753 = vld [vmem:[#allocation2 + $0x28] sm:$0xff]
        %v754 = vld [vmem:[#allocation2 + $0x30] sm:$0xff]
        %v755 = vld [vmem:[#allocation2 + $0x38] sm:$0xff]
        %v756 = vld [vmem:[#allocation2 + $0x40] sm:$0xff]
        %v757 = vld [vmem:[#allocation2 + $0x48] sm:$0xff]
        %v758 = vld [vmem:[#allocation2 + $0x50] sm:$0xff]
        %v759 = vld [vmem:[#allocation2 + $0x58] sm:$0xff]
        %v760 = vld [vmem:[#allocation2 + $0x60] sm:$0xff]
        %v761 = vld [vmem:[#allocation2 + $0x68] sm:$0xff]
        %v762 = vld [vmem:[#allocation2 + $0x70] sm:$0xff]
        %v763 = vld [vmem:[#allocation2 + $0x78] sm:$0xff]
        %v764 = vpack.c.bf16 %v749, %v748
        %v765 = vpack.c.bf16 %v751, %v750
        %v766 = vpack.c.bf16 %v753, %v752
        %v767 = vpack.c.bf16 %v755, %v754
        %v768 = vpack.c.bf16 %v757, %v756
        %v769 = vpack.c.bf16 %v759, %v758
        %v770 = vpack.c.bf16 %v761, %v760
        %v771 = vpack.c.bf16 %v763, %v762
        %v772 = vld [vmem:[%s3] sm:$0xf]
        %v773 = vld [vmem:[%s3 + $0x4] sm:$0xf]
        %v774 = vld [vmem:[%s3 + $0x8] sm:$0xf]
        %v775 = vld [vmem:[%s3 + $0xc] sm:$0xf]
        %v776 = vld [vmem:[%s3 + $0x10] sm:$0xf]
        %v777 = vld [vmem:[%s3 + $0x14] sm:$0xf]
        %v778 = vld [vmem:[%s3 + $0x18] sm:$0xf]
        %v779 = vld [vmem:[%s3 + $0x1c] sm:$0xf]
        %v780 = vld [vmem:[%s3 + $0x20] sm:$0xf]
        %v781 = vld [vmem:[%s3 + $0x24] sm:$0xf]
        %v782 = vld [vmem:[%s3 + $0x28] sm:$0xf]
        %v783 = vld [vmem:[%s3 + $0x2c] sm:$0xf]
        %v784 = vld [vmem:[%s3 + $0x30] sm:$0xf]
        %v785 = vld [vmem:[%s3 + $0x34] sm:$0xf]
        %v786 = vld [vmem:[%s3 + $0x38] sm:$0xf]
        %v787 = vld [vmem:[%s3 + $0x3c] sm:$0xf]
        %v788 = vld [vmem:[%s4] sm:$0x1]
        %v790 = vlaneseq
        %v791 = vshrl.u32 %v790, 7
        %v792 = vsub.s32 0, %v791
        %v793 = vrot.slane %v788, %v792
        %v811 = vunpack.c.l.b16 %v772
        %v812 = vunpack.c.l.b16 %v773
        %v813 = vunpack.c.l.b16 %v774
        %v814 = vunpack.c.l.b16 %v775
        %v815 = vunpack.c.l.b16 %v776
        %v816 = vunpack.c.l.b16 %v777
        %v817 = vunpack.c.l.b16 %v778
        %v818 = vunpack.c.l.b16 %v779
        %v819 = vunpack.c.l.b16 %v780
        %v820 = vunpack.c.l.b16 %v781
        %v821 = vunpack.c.l.b16 %v782
        %v822 = vunpack.c.l.b16 %v783
        %v823 = vunpack.c.l.b16 %v784
        %v824 = vunpack.c.l.b16 %v785
        %v825 = vunpack.c.l.b16 %v786
        %v826 = vunpack.c.l.b16 %v787
        %v827 = vpack.c.b16 %v812, %v811
        %v828 = vpack.c.b16 %v814, %v813
        %v829 = vpack.c.b16 %v816, %v815
        %v830 = vpack.c.b16 %v818, %v817
        %v831 = vpack.c.b16 %v820, %v819
        %v832 = vpack.c.b16 %v822, %v821
        %v833 = vpack.c.b16 %v824, %v823
        %v834 = vpack.c.b16 %v826, %v825
        %843 = vmatprep.subr.bf16.mxu0 0
        %844 = vmatpush1.bf16.msra.mxu0 %v834
        %845 = vmatprep.subr.bf16.mxu0 0
        %846 = vmatpush1.bf16.msra.mxu0 %v833
        %847 = vmatprep.subr.bf16.mxu0 0
        %848 = vmatpush1.bf16.msra.mxu0 %v832
        %849 = vmatprep.subr.bf16.mxu0 0
        %850 = vmatpush1.bf16.msra.mxu0 %v831
        %851 = vmatprep.subr.bf16.mxu0 0
        %852 = vmatpush1.bf16.msra.mxu0 %v830
        %853 = vmatprep.subr.bf16.mxu0 0
        %854 = vmatpush1.bf16.msra.mxu0 %v829
        %855 = vmatprep.subr.bf16.mxu0 0
        %856 = vmatpush1.bf16.msra.mxu0 %v828
        %857 = vmatprep.subr.bf16.mxu0 0
        %858 = vmatpush1.bf16.msra.mxu0 %v827
        %859 = vmatprep.subr.bf16.mxu0 0
        %860 = vmatpush2.bf16.msra.mxu0 0
        %861 = vmatprep.subr.bf16.mxu0 0
        %862 = vmatpush2.bf16.msra.mxu0 0
        %863 = vmatprep.subr.bf16.mxu0 0
        %864 = vmatpush2.bf16.msra.mxu0 0
        %865 = vmatprep.subr.bf16.mxu0 0
        %866 = vmatpush2.bf16.msra.mxu0 0
        %867 = vmatprep.subr.bf16.mxu0 0
        %868 = vmatpush2.bf16.msra.mxu0 0
        %869 = vmatprep.subr.bf16.mxu0 0
        %870 = vmatpush2.bf16.msra.mxu0 0
        %871 = vmatprep.subr.bf16.mxu0 0
        %872 = vmatpush2.bf16.msra.mxu0 0
        %873 = vmatprep.subr.bf16.mxu0 0
        %874 = vmatpush2.bf16.msra.mxu0 0
        %875 = vmatprep.mubr.bf16.mxu0 0
        %876 = vmatmul.mubr.bf16.gmra.mxu0 %v764
        %v877 = vpop.f32.mrf.mxu0
        %v878 = vadd.f32 %v793, %v877
        %v879 = vpop.f32.mrf.mxu0
        %v880 = vpop.f32.mrf.mxu0
        %v881 = vadd.f32 %v793, %v880
        %v882 = vpop.f32.mrf.mxu0
        %883 = vmatprep.mubr.bf16.mxu0 0
        %884 = vmatmul.mubr.bf16.gmra.mxu0 %v765
        %v885 = vpop.f32.mrf.mxu0
        %v886 = vadd.f32 %v793, %v885
        %v887 = vpop.f32.mrf.mxu0
        %v888 = vpop.f32.mrf.mxu0
        %v889 = vadd.f32 %v793, %v888
        %v890 = vpop.f32.mrf.mxu0
        %891 = vmatprep.mubr.bf16.mxu0 0
        %892 = vmatmul.mubr.bf16.gmra.mxu0 %v766
        %v893 = vpop.f32.mrf.mxu0
        %v894 = vadd.f32 %v793, %v893
        %v895 = vpop.f32.mrf.mxu0
        %v896 = vpop.f32.mrf.mxu0
        %v897 = vadd.f32 %v793, %v896
        %v898 = vpop.f32.mrf.mxu0
        %899 = vmatprep.mubr.bf16.mxu0 0
        %900 = vmatmul.mubr.bf16.gmra.mxu0 %v767
        %v901 = vpop.f32.mrf.mxu0
        %v902 = vadd.f32 %v793, %v901
        %v903 = vpop.f32.mrf.mxu0
        %v904 = vpop.f32.mrf.mxu0
        %v905 = vadd.f32 %v793, %v904
        %v906 = vpop.f32.mrf.mxu0
        %907 = vmatprep.mubr.bf16.mxu0 0
        %908 = vmatmul.mubr.bf16.gmra.mxu0 %v768
        %v909 = vpop.f32.mrf.mxu0
        %v910 = vadd.f32 %v793, %v909
        %v911 = vpop.f32.mrf.mxu0
        %v912 = vpop.f32.mrf.mxu0
        %v913 = vadd.f32 %v793, %v912
        %v914 = vpop.f32.mrf.mxu0
        %915 = vmatprep.mubr.bf16.mxu0 0
        %916 = vmatmul.mubr.bf16.gmra.mxu0 %v769
        %v917 = vpop.f32.mrf.mxu0
        %v918 = vadd.f32 %v793, %v917
        %v919 = vpop.f32.mrf.mxu0
        %v920 = vpop.f32.mrf.mxu0
        %v921 = vadd.f32 %v793, %v920
        %v922 = vpop.f32.mrf.mxu0
        %923 = vmatprep.mubr.bf16.mxu0 0
        %924 = vmatmul.mubr.bf16.gmra.mxu0 %v770
        %v925 = vpop.f32.mrf.mxu0
        %v926 = vadd.f32 %v793, %v925
        %v927 = vpop.f32.mrf.mxu0
        %v928 = vpop.f32.mrf.mxu0
        %v929 = vadd.f32 %v793, %v928
        %v930 = vpop.f32.mrf.mxu0
        %931 = vmatprep.mubr.bf16.mxu0 0
        %932 = vmatmul.mubr.bf16.gmra.mxu0 %v771
        %v933 = vpop.f32.mrf.mxu0
        %v934 = vadd.f32 %v793, %v933
        %v935 = vpop.f32.mrf.mxu0
        %v936 = vpop.f32.mrf.mxu0
        %v937 = vadd.f32 %v793, %v936
        %v938 = vpop.f32.mrf.mxu0
        %939 = vdwg.mxu0
        %vm940 = vcmp.ge.f32.partialorder %v878, 0.0
        %vm941 = vcmp.ge.f32.partialorder %v881, 0.0
        %vm942 = vcmp.ge.f32.partialorder %v886, 0.0
        %vm943 = vcmp.ge.f32.partialorder %v889, 0.0
        %vm944 = vcmp.ge.f32.partialorder %v894, 0.0
        %vm945 = vcmp.ge.f32.partialorder %v897, 0.0
        %vm946 = vcmp.ge.f32.partialorder %v902, 0.0
        %vm947 = vcmp.ge.f32.partialorder %v905, 0.0
        %vm948 = vcmp.ge.f32.partialorder %v910, 0.0
        %vm949 = vcmp.ge.f32.partialorder %v913, 0.0
        %vm950 = vcmp.ge.f32.partialorder %v918, 0.0
        %vm951 = vcmp.ge.f32.partialorder %v921, 0.0
        %vm952 = vcmp.ge.f32.partialorder %v926, 0.0
        %vm953 = vcmp.ge.f32.partialorder %v929, 0.0
        %vm954 = vcmp.ge.f32.partialorder %v934, 0.0
        %vm955 = vcmp.ge.f32.partialorder %v937, 0.0
        %v956 = vmul.f32 %v878, 0.01
        %v957 = vmul.f32 %v881, 0.01
        %v958 = vmul.f32 %v886, 0.01
        %v959 = vmul.f32 %v889, 0.01
        %v960 = vmul.f32 %v894, 0.01
        %v961 = vmul.f32 %v897, 0.01
        %v962 = vmul.f32 %v902, 0.01
        %v963 = vmul.f32 %v905, 0.01
        %v964 = vmul.f32 %v910, 0.01
        %v965 = vmul.f32 %v913, 0.01
        %v966 = vmul.f32 %v918, 0.01
        %v967 = vmul.f32 %v921, 0.01
        %v968 = vmul.f32 %v926, 0.01
        %v969 = vmul.f32 %v929, 0.01
        %v970 = vmul.f32 %v934, 0.01
        %v971 = vmul.f32 %v937, 0.01
        %v972 = vsel %vm940, %v878, %v956
        %v973 = vsel %vm941, %v881, %v957
        %v974 = vsel %vm942, %v886, %v958
        %v975 = vsel %vm943, %v889, %v959
        %v976 = vsel %vm944, %v894, %v960
        %v977 = vsel %vm945, %v897, %v961
        %v978 = vsel %vm946, %v902, %v962
        %v979 = vsel %vm947, %v905, %v963
        %v980 = vsel %vm948, %v910, %v964
        %v981 = vsel %vm949, %v913, %v965
        %v982 = vsel %vm950, %v918, %v966
        %v983 = vsel %vm951, %v921, %v967
        %v984 = vsel %vm952, %v926, %v968
        %v985 = vsel %vm953, %v929, %v969
        %v986 = vsel %vm954, %v934, %v970
        %v987 = vsel %vm955, %v937, %v971
        %v988 = vpack.c.bf16 %v973, %v972
        %v989 = vpack.c.bf16 %v975, %v974
        %v990 = vpack.c.bf16 %v977, %v976
        %v991 = vpack.c.bf16 %v979, %v978
        %v992 = vpack.c.bf16 %v981, %v980
        %v993 = vpack.c.bf16 %v983, %v982
        %v994 = vpack.c.bf16 %v985, %v984
        %v995 = vpack.c.bf16 %v987, %v986
        %v996 = vld [vmem:[%s5] sm:$0xf]
        %v997 = vld [vmem:[%s5 + $0x4] sm:$0xf]
        %v998 = vld [vmem:[%s5 + $0x8] sm:$0xf]
        %v999 = vld [vmem:[%s5 + $0xc] sm:$0xf]
        %v1000 = vld [vmem:[%s5 + $0x10] sm:$0xf]
        %v1001 = vld [vmem:[%s5 + $0x14] sm:$0xf]
        %v1002 = vld [vmem:[%s5 + $0x18] sm:$0xf]
        %v1003 = vld [vmem:[%s5 + $0x1c] sm:$0xf]
        %v1004 = vld [vmem:[%s5 + $0x20] sm:$0xf]
        %v1005 = vld [vmem:[%s5 + $0x24] sm:$0xf]
        %v1006 = vld [vmem:[%s5 + $0x28] sm:$0xf]
        %v1007 = vld [vmem:[%s5 + $0x2c] sm:$0xf]
        %v1008 = vld [vmem:[%s5 + $0x30] sm:$0xf]
        %v1009 = vld [vmem:[%s5 + $0x34] sm:$0xf]
        %v1010 = vld [vmem:[%s5 + $0x38] sm:$0xf]
        %v1011 = vld [vmem:[%s5 + $0x3c] sm:$0xf]
        %v1012 = vld [vmem:[%s6] sm:$0x1]
        %v1014 = vlaneseq
        %v1015 = vshrl.u32 %v1014, 7
        %v1016 = vsub.s32 0, %v1015
        %v1017 = vrot.slane %v1012, %v1016
        %v1035 = vunpack.c.l.b16 %v996
        %v1036 = vunpack.c.l.b16 %v997
        %v1037 = vunpack.c.l.b16 %v998
        %v1038 = vunpack.c.l.b16 %v999
        %v1039 = vunpack.c.l.b16 %v1000
        %v1040 = vunpack.c.l.b16 %v1001
        %v1041 = vunpack.c.l.b16 %v1002
        %v1042 = vunpack.c.l.b16 %v1003
        %v1043 = vunpack.c.l.b16 %v1004
        %v1044 = vunpack.c.l.b16 %v1005
        %v1045 = vunpack.c.l.b16 %v1006
        %v1046 = vunpack.c.l.b16 %v1007
        %v1047 = vunpack.c.l.b16 %v1008
        %v1048 = vunpack.c.l.b16 %v1009
        %v1049 = vunpack.c.l.b16 %v1010
        %v1050 = vunpack.c.l.b16 %v1011
        %v1051 = vpack.c.b16 %v1036, %v1035
        %v1052 = vpack.c.b16 %v1038, %v1037
        %v1053 = vpack.c.b16 %v1040, %v1039
        %v1054 = vpack.c.b16 %v1042, %v1041
        %v1055 = vpack.c.b16 %v1044, %v1043
        %v1056 = vpack.c.b16 %v1046, %v1045
        %v1057 = vpack.c.b16 %v1048, %v1047
        %v1058 = vpack.c.b16 %v1050, %v1049
        %1067 = vmatprep.subr.bf16.mxu0 0
        %1068 = vmatpush1.bf16.msra.mxu0 %v1058
        %1069 = vmatprep.subr.bf16.mxu0 0
        %1070 = vmatpush1.bf16.msra.mxu0 %v1057
        %1071 = vmatprep.subr.bf16.mxu0 0
        %1072 = vmatpush1.bf16.msra.mxu0 %v1056
        %1073 = vmatprep.subr.bf16.mxu0 0
        %1074 = vmatpush1.bf16.msra.mxu0 %v1055
        %1075 = vmatprep.subr.bf16.mxu0 0
        %1076 = vmatpush1.bf16.msra.mxu0 %v1054
        %1077 = vmatprep.subr.bf16.mxu0 0
        %1078 = vmatpush1.bf16.msra.mxu0 %v1053
        %1079 = vmatprep.subr.bf16.mxu0 0
        %1080 = vmatpush1.bf16.msra.mxu0 %v1052
        %1081 = vmatprep.subr.bf16.mxu0 0
        %1082 = vmatpush1.bf16.msra.mxu0 %v1051
        %1083 = vmatprep.subr.bf16.mxu0 0
        %1084 = vmatpush2.bf16.msra.mxu0 0
        %1085 = vmatprep.subr.bf16.mxu0 0
        %1086 = vmatpush2.bf16.msra.mxu0 0
        %1087 = vmatprep.subr.bf16.mxu0 0
        %1088 = vmatpush2.bf16.msra.mxu0 0
        %1089 = vmatprep.subr.bf16.mxu0 0
        %1090 = vmatpush2.bf16.msra.mxu0 0
        %1091 = vmatprep.subr.bf16.mxu0 0
        %1092 = vmatpush2.bf16.msra.mxu0 0
        %1093 = vmatprep.subr.bf16.mxu0 0
        %1094 = vmatpush2.bf16.msra.mxu0 0
        %1095 = vmatprep.subr.bf16.mxu0 0
        %1096 = vmatpush2.bf16.msra.mxu0 0
        %1097 = vmatprep.subr.bf16.mxu0 0
        %1098 = vmatpush2.bf16.msra.mxu0 0
        %1099 = vmatprep.mubr.bf16.mxu0 0
        %1100 = vmatmul.mubr.bf16.gmra.mxu0 %v988
        %v1101 = vpop.f32.mrf.mxu0
        %v1102 = vadd.f32 %v1017, %v1101
        %v1103 = vpop.f32.mrf.mxu0
        %v1104 = vpop.f32.mrf.mxu0
        %v1105 = vadd.f32 %v1017, %v1104
        %v1106 = vpop.f32.mrf.mxu0
        %1107 = vmatprep.mubr.bf16.mxu0 0
        %1108 = vmatmul.mubr.bf16.gmra.mxu0 %v989
        %v1109 = vpop.f32.mrf.mxu0
        %v1110 = vadd.f32 %v1017, %v1109
        %v1111 = vpop.f32.mrf.mxu0
        %v1112 = vpop.f32.mrf.mxu0
        %v1113 = vadd.f32 %v1017, %v1112
        %v1114 = vpop.f32.mrf.mxu0
        %1115 = vmatprep.mubr.bf16.mxu0 0
        %1116 = vmatmul.mubr.bf16.gmra.mxu0 %v990
        %v1117 = vpop.f32.mrf.mxu0
        %v1118 = vadd.f32 %v1017, %v1117
        %v1119 = vpop.f32.mrf.mxu0
        %v1120 = vpop.f32.mrf.mxu0
        %v1121 = vadd.f32 %v1017, %v1120
        %v1122 = vpop.f32.mrf.mxu0
        %1123 = vmatprep.mubr.bf16.mxu0 0
        %1124 = vmatmul.mubr.bf16.gmra.mxu0 %v991
        %v1125 = vpop.f32.mrf.mxu0
        %v1126 = vadd.f32 %v1017, %v1125
        %v1127 = vpop.f32.mrf.mxu0
        %v1128 = vpop.f32.mrf.mxu0
        %v1129 = vadd.f32 %v1017, %v1128
        %v1130 = vpop.f32.mrf.mxu0
        %1131 = vmatprep.mubr.bf16.mxu0 0
        %1132 = vmatmul.mubr.bf16.gmra.mxu0 %v992
        %v1133 = vpop.f32.mrf.mxu0
        %v1134 = vadd.f32 %v1017, %v1133
        %v1135 = vpop.f32.mrf.mxu0
        %v1136 = vpop.f32.mrf.mxu0
        %v1137 = vadd.f32 %v1017, %v1136
        %v1138 = vpop.f32.mrf.mxu0
        %1139 = vmatprep.mubr.bf16.mxu0 0
        %1140 = vmatmul.mubr.bf16.gmra.mxu0 %v993
        %v1141 = vpop.f32.mrf.mxu0
        %v1142 = vadd.f32 %v1017, %v1141
        %v1143 = vpop.f32.mrf.mxu0
        %v1144 = vpop.f32.mrf.mxu0
        %v1145 = vadd.f32 %v1017, %v1144
        %v1146 = vpop.f32.mrf.mxu0
        %1147 = vmatprep.mubr.bf16.mxu0 0
        %1148 = vmatmul.mubr.bf16.gmra.mxu0 %v994
        %v1149 = vpop.f32.mrf.mxu0
        %v1150 = vadd.f32 %v1017, %v1149
        %v1151 = vpop.f32.mrf.mxu0
        %v1152 = vpop.f32.mrf.mxu0
        %v1153 = vadd.f32 %v1017, %v1152
        %v1154 = vpop.f32.mrf.mxu0
        %1155 = vmatprep.mubr.bf16.mxu0 0
        %1156 = vmatmul.mubr.bf16.gmra.mxu0 %v995
        %v1157 = vpop.f32.mrf.mxu0
        %v1158 = vadd.f32 %v1017, %v1157
        %v1159 = vpop.f32.mrf.mxu0
        %v1160 = vpop.f32.mrf.mxu0
        %v1161 = vadd.f32 %v1017, %v1160
        %v1162 = vpop.f32.mrf.mxu0
        %1163 = vdwg.mxu0
        %v1164 = vld [vmem:[%s348] sm:$0xff]
        %v1165 = vld [vmem:[%s348 + $0x8] sm:$0xff]
        %v1166 = vld [vmem:[%s348 + $0x10] sm:$0xff]
        %v1167 = vld [vmem:[%s348 + $0x18] sm:$0xff]
        %v1168 = vld [vmem:[%s348 + $0x20] sm:$0xff]
        %v1169 = vld [vmem:[%s348 + $0x28] sm:$0xff]
        %v1170 = vld [vmem:[%s348 + $0x30] sm:$0xff]
        %v1171 = vld [vmem:[%s348 + $0x38] sm:$0xff]
        %v1172 = vld [vmem:[%s348 + $0x40] sm:$0xff]
        %v1173 = vld [vmem:[%s348 + $0x48] sm:$0xff]
        %v1174 = vld [vmem:[%s348 + $0x50] sm:$0xff]
        %v1175 = vld [vmem:[%s348 + $0x58] sm:$0xff]
        %v1176 = vld [vmem:[%s348 + $0x60] sm:$0xff]
        %v1177 = vld [vmem:[%s348 + $0x68] sm:$0xff]
        %v1178 = vld [vmem:[%s348 + $0x70] sm:$0xff]
        %v1179 = vld [vmem:[%s348 + $0x78] sm:$0xff]
        %1181 = vset.pattern.permute.xlu0 0
        %1182 = vperm.xlu0 %1181, %v1164
        %v1183 = vpop.permute.xlu0 %1182
        %1186 = vset.pattern.permute.xlu0 0
        %1187 = vperm.xlu0 %1186, %v1165
        %v1188 = vpop.permute.xlu0 %1187
        %1191 = vset.pattern.permute.xlu0 0
        %1192 = vperm.xlu0 %1191, %v1166
        %v1193 = vpop.permute.xlu0 %1192
        %1196 = vset.pattern.permute.xlu0 0
        %1197 = vperm.xlu0 %1196, %v1167
        %v1198 = vpop.permute.xlu0 %1197
        %1201 = vset.pattern.permute.xlu0 0
        %1202 = vperm.xlu0 %1201, %v1168
        %v1203 = vpop.permute.xlu0 %1202
        %1206 = vset.pattern.permute.xlu0 0
        %1207 = vperm.xlu0 %1206, %v1169
        %v1208 = vpop.permute.xlu0 %1207
        %1211 = vset.pattern.permute.xlu0 0
        %1212 = vperm.xlu0 %1211, %v1170
        %v1213 = vpop.permute.xlu0 %1212
        %1216 = vset.pattern.permute.xlu0 0
        %1217 = vperm.xlu0 %1216, %v1171
        %v1218 = vpop.permute.xlu0 %1217
        %1221 = vset.pattern.permute.xlu0 0
        %1222 = vperm.xlu0 %1221, %v1172
        %v1223 = vpop.permute.xlu0 %1222
        %1226 = vset.pattern.permute.xlu0 0
        %1227 = vperm.xlu0 %1226, %v1173
        %v1228 = vpop.permute.xlu0 %1227
        %1231 = vset.pattern.permute.xlu0 0
        %1232 = vperm.xlu0 %1231, %v1174
        %v1233 = vpop.permute.xlu0 %1232
        %1236 = vset.pattern.permute.xlu0 0
        %1237 = vperm.xlu0 %1236, %v1175
        %v1238 = vpop.permute.xlu0 %1237
        %1241 = vset.pattern.permute.xlu0 0
        %1242 = vperm.xlu0 %1241, %v1176
        %v1243 = vpop.permute.xlu0 %1242
        %1246 = vset.pattern.permute.xlu0 0
        %1247 = vperm.xlu0 %1246, %v1177
        %v1248 = vpop.permute.xlu0 %1247
        %1251 = vset.pattern.permute.xlu0 0
        %1252 = vperm.xlu0 %1251, %v1178
        %v1253 = vpop.permute.xlu0 %1252
        %1256 = vset.pattern.permute.xlu0 0
        %1257 = vperm.xlu0 %1256, %v1179
        %v1258 = vpop.permute.xlu0 %1257
        %v1260 = vmul.f32 %v1102, %v1183
        %v1261 = vmul.f32 %v1105, %v1188
        %v1262 = vmul.f32 %v1110, %v1193
        %v1263 = vmul.f32 %v1113, %v1198
        %v1264 = vmul.f32 %v1118, %v1203
        %v1265 = vmul.f32 %v1121, %v1208
        %v1266 = vmul.f32 %v1126, %v1213
        %v1267 = vmul.f32 %v1129, %v1218
        %v1268 = vmul.f32 %v1134, %v1223
        %v1269 = vmul.f32 %v1137, %v1228
        %v1270 = vmul.f32 %v1142, %v1233
        %v1271 = vmul.f32 %v1145, %v1238
        %v1272 = vmul.f32 %v1150, %v1243
        %v1273 = vmul.f32 %v1153, %v1248
        %v1274 = vmul.f32 %v1158, %v1253
        %v1275 = vmul.f32 %v1161, %v1258
        %v1276 = vadd.f32 %v1260, %v1261
        %v1277 = vadd.f32 %v1276, %v1262
        %v1278 = vadd.f32 %v1277, %v1263
        %v1279 = vadd.f32 %v1278, %v1264
        %v1280 = vadd.f32 %v1279, %v1265
        %v1281 = vadd.f32 %v1280, %v1266
        %v1282 = vadd.f32 %v1281, %v1267
        %v1283 = vadd.f32 %v1282, %v1268
        %v1284 = vadd.f32 %v1283, %v1269
        %v1285 = vadd.f32 %v1284, %v1270
        %v1286 = vadd.f32 %v1285, %v1271
        %v1287 = vadd.f32 %v1286, %v1272
        %v1288 = vadd.f32 %v1287, %v1273
        %v1289 = vadd.f32 %v1288, %v1274
        %v1290 = vadd.f32 %v1289, %v1275
        %v1291 = vrot.slane %v1290, 4
        %v1292 = vadd.f32 %v1290, %v1291
        %v1293 = vrot.slane %v1292, 2
        %v1294 = vadd.f32 %v1292, %v1293
        %v1295 = vrot.slane %v1294, 1
        %v1296 = vadd.f32 %v1294, %v1295
        %1297 = vst [vmem:[%s353] sm:$0x1] %v1296
      $region56: #{forward.4} parent=47 // pred_fallthru
        _
      %p1298 = scmp.lt.s32.totalorder %s22, 1
      %s1299 = scalar_select %p1298, %s22, 1
      %s1300 = smul.addr %s1299, 8
      %s1301 = scalar_lea.vmem %s7, %s1300
      // Predicated region
      $region57: #{forward.4} parent=47 // pred_check
        %p1302 = pneg %p212
      $region58: #{forward.4} parent=47 // pred_check_branch
        %1304 = sbr.rel (%p1302) target = $region60
      $region59: #{forward.4} parent=47 // pred_region
        _
      $region60: #{forward.4} parent=47 // pred_fallthru
        _
    $region48: #{forward.4} parent=5 // pred_fallthru
      _
    %p1305 = scmp.le.s32.totalorder 2, %s13
    // Predicated region
    $region61: #{forward.4} parent=5 // pred_check
      %p1306 = pneg %p1305
    $region62: #{forward.4} parent=5 // pred_check_branch
      %1308 = sbr.rel (%p1306) target = $region64
    $region63: #{forward.4} parent=5 // pred_region
      %s1309 = ssub.s32 %s13, 2
      // Predicated region
      $region65: #{forward.4} parent=63 // pred_check
        %p1310 = pneg %p218
      $region66: #{forward.4} parent=63 // pred_check_branch
        %1312 = sbr.rel (%p1310) target = $region68
      $region67: #{forward.4} parent=63 // pred_region
        %p1313 = scmp.lt.s32.totalorder %s24, 1
        %s1314 = scalar_select %p1313, %s24, 1
        %s1315 = smul.addr %s1314, 8
        %s1316 = scalar_lea.vmem %s7, %s1315
      $region68: #{forward.4} parent=63 // pred_fallthru
        _
    $region64: #{forward.4} parent=5 // pred_fallthru
      _
  $region6: #{forward.4} parent=0 // loop_footer
    %s17 = sadd.s32 1, %s13
  $region7: #{forward.4} parent=0 // loop_footer_branch
    %12 = sbr.rel target = $region3
  $region8: #{forward.4} parent=0 // loop_exit
    _

</llo_original>
